<compile_context>
chip_gen: v5e
topology: v5e:2x2
jax: 0.10.0
libtpu: 0.0.40
codegen_flags: <defaults>
</compile_context>

<pallas_src>
import functools

import jax
import jax.numpy as jnp
from jax import lax
from jax.experimental import pallas as pl
from jax.experimental.pallas import tpu as pltpu

BN_EPS = 1e-5
LANE = 128


# ---------------------------------------------------------------------------
# Kernels
# ---------------------------------------------------------------------------
def _conv_stats_kernel(x_ref, scale_ref, shift_ref, w_ref, y_ref, stats_ref,
                       xpad_ref, *, apply_affine_relu):
    """One row band of: [fused BN scale/shift + ReLU of the input (conv2)]
    -> zero-halo pad -> im2col with taps packed into the 128-lane K dim
    -> single bf16 MXU matmul (f32 accumulation) -> per-image BN partials.

      x_ref     : (1, H, W, Ci)        one image, REAL channels (no padding)
      scale_ref : (1, Ci)        f32   fused BN scale of the input (conv2)
      shift_ref : (1, Ci)        f32   fused BN shift of the input (conv2)
      w_ref     : (128, 128)     bf16  taps packed along K, zero-padded
      y_ref     : (1, BH, W, Co)       pre-BN conv output for this band
      stats_ref : (1, 2, Co)     f32   per-image [sum, sum_sq], over bands
      xpad_ref  : (H+2, W+2, Ci) f32   VMEM scratch, persistent per image
    """
    _, H, W, Ci = x_ref.shape
    _, BH, _, Co = y_ref.shape
    K = w_ref.shape[0]
    b = pl.program_id(1)

    # Once per image (first band): optional fused BN+ReLU of the input, then
    # write it into the zero-halo padded scratch.  The scratch persists
    # across grid steps; the halo is re-zeroed per image (cheap, and safe
    # under megacore sharding where a core may never run program_id(0) == 0).
    @pl.when(b == 0)
    def _():
        t = x_ref[0].astype(jnp.float32)                       # (H, W, Ci)
        if apply_affine_relu:
            sc = scale_ref[...].reshape(1, 1, Ci)
            sh = shift_ref[...].reshape(1, 1, Ci)
            t = jnp.maximum(t * sc + sh, 0.0)
        xpad_ref[0:1, :, :] = jnp.zeros((1, W + 2, Ci), jnp.float32)
        xpad_ref[H + 1:H + 2, :, :] = jnp.zeros((1, W + 2, Ci), jnp.float32)
        xpad_ref[1:H + 1, 0:1, :] = jnp.zeros((H, 1, Ci), jnp.float32)
        xpad_ref[1:H + 1, W + 1:W + 2, :] = jnp.zeros((H, 1, Ci), jnp.float32)
        xpad_ref[1:H + 1, 1:W + 1, :] = t

    # im2col for this band: output rows [b*BH, (b+1)*BH) need padded rows
    # [b*BH, b*BH + BH + 2).  Tap k = 3*dh + dw occupies lanes
    # [k*Ci, (k+1)*Ci); the tail lanes are zero and hit zero weight rows.
    row0 = b * BH
    pieces = []
    for dh in range(3):
        for dw in range(3):
            slab = xpad_ref[pl.ds(row0 + dh, BH), pl.ds(dw, W), :]
            pieces.append(slab.reshape(BH * W, Ci))   # W % 8 == 0: free merge
    if K > 9 * Ci:
        pieces.append(jnp.zeros((BH * W, K - 9 * Ci), jnp.float32))
    lhs = jnp.concatenate(pieces, axis=-1).astype(jnp.bfloat16)  # (BH*W, K)

    # Single MXU matmul; keep only the real output channels.
    acc = jnp.dot(lhs, w_ref[...], preferred_element_type=jnp.float32)
    yb = acc[:, :Co]                                             # (BH*W, Co)

    # Per-image per-channel [sum, sum_sq] partials, accumulated over the band
    # axis (the stats output block revisits: its index_map is constant in b).
    st = jnp.concatenate([jnp.sum(yb, axis=0, keepdims=True),
                          jnp.sum(yb * yb, axis=0, keepdims=True)], axis=0)

    @pl.when(b == 0)
    def _():
        stats_ref[...] = jnp.zeros_like(stats_ref)

    stats_ref[0] = stats_ref[0] + st
    y_ref[0] = yb.reshape(BH, W, Co).astype(y_ref.dtype)


def _bn_relu_kernel(y_ref, scale_ref, shift_ref, out_ref):
    """Final fused BatchNorm scale/shift + ReLU on the real channels only."""
    C = y_ref.shape[-1]
    sc = scale_ref[...].reshape(1, 1, 1, C)
    sh = shift_ref[...].reshape(1, 1, 1, C)
    y = y_ref[...].astype(jnp.float32)
    out_ref[...] = jnp.maximum(y * sc + sh, 0.0).astype(out_ref.dtype)


# ---------------------------------------------------------------------------
# pallas_call builders
# ---------------------------------------------------------------------------
def _conv_stats(x, scale, shift, w_packed, cout, *, band_h, out_dtype,
                apply_affine_relu):
    N, H, W, Ci = x.shape
    n_bands = H // band_h
    kernel = functools.partial(_conv_stats_kernel,
                               apply_affine_relu=apply_affine_relu)
    return pl.pallas_call(
        kernel,
        out_shape=(jax.ShapeDtypeStruct((N, H, W, cout), out_dtype),
                   jax.ShapeDtypeStruct((N, 2, cout), jnp.float32)),
        grid_spec=pltpu.PrefetchScalarGridSpec(
            num_scalar_prefetch=0,
            grid=(N, n_bands),
            in_specs=[
                pl.BlockSpec((1, H, W, Ci), lambda n, b: (n, 0, 0, 0)),
                pl.BlockSpec((1, Ci), lambda n, b: (0, 0)),
                pl.BlockSpec((1, Ci), lambda n, b: (0, 0)),
                pl.BlockSpec((LANE, LANE), lambda n, b: (0, 0)),
            ],
            out_specs=(
                pl.BlockSpec((1, band_h, W, cout), lambda n, b: (n, b, 0, 0)),
                pl.BlockSpec((1, 2, cout), lambda n, b: (n, 0, 0)),
            ),
            scratch_shapes=[pltpu.VMEM((H + 2, W + 2, Ci), jnp.float32)],
        ),
        compiler_params=pltpu.CompilerParams(
            dimension_semantics=("parallel", "arbitrary"),
            vmem_limit_bytes=32 * 1024 * 1024),
    )(x, scale, shift, w_packed)


def _bn_relu(y, scale, shift, *, band_h):
    N, H, W, C = y.shape
    n_bands = H // band_h
    return pl.pallas_call(
        _bn_relu_kernel,
        out_shape=jax.ShapeDtypeStruct((N, H, W, C), jnp.float32),
        grid_spec=pltpu.PrefetchScalarGridSpec(
            num_scalar_prefetch=0,
            grid=(N, n_bands),
            in_specs=[
                pl.BlockSpec((1, band_h, W, C), lambda n, b: (n, b, 0, 0)),
                pl.BlockSpec((1, C), lambda n, b: (0, 0)),
                pl.BlockSpec((1, C), lambda n, b: (0, 0)),
            ],
            out_specs=pl.BlockSpec((1, band_h, W, C), lambda n, b: (n, b, 0, 0)),
        ),
        compiler_params=pltpu.CompilerParams(
            dimension_semantics=("parallel", "parallel"),
            vmem_limit_bytes=32 * 1024 * 1024),
    )(y, scale, shift)


# ---------------------------------------------------------------------------
# Host-side helpers (tiny)
# ---------------------------------------------------------------------------
def _fold_bn(stats, gamma, beta, hw):
    """Merge per-image [sum, sum_sq] partials into fused BN scale/shift.

    Per-image mean-shifted second moments + Chan's parallel merge: better
    conditioned than a single E[x^2] - E[x]^2 over all N*H*W elements.
    """
    n = stats.shape[0]
    mean_i = stats[:, 0, :] / hw                                  # (N, C)
    m2_i = jnp.maximum(stats[:, 1, :] - hw * mean_i * mean_i, 0.0)
    mean = jnp.mean(mean_i, axis=0)                               # (C,)
    m2 = jnp.sum(m2_i, axis=0) + hw * jnp.sum((mean_i - mean) ** 2, axis=0)
    var = m2 / (n * hw)                      # biased, as in PyTorch BN forward
    scale = gamma.astype(jnp.float32) * lax.rsqrt(var + BN_EPS)
    shift = beta.astype(jnp.float32) - mean * scale
    return scale[None, :], shift[None, :]


def _pack_taps(w):
    """(3,3,Ci,Co) HWIO -> (128,128) bf16, taps packed along K (row index =
    3*Ci*dh + Ci*dw + ci, matching the in-kernel im2col order)."""
    kh, kw, ci, co = w.shape
    wk = w.reshape(kh * kw * ci, co).astype(jnp.float32)
    wk = jnp.pad(wk, ((0, LANE - kh * kw * ci), (0, LANE - co)))
    return wk.astype(jnp.bfloat16)


def _pick_band_h(H, W, target_rows=2048):
    """Largest divisor of H keeping the im2col LHS small (~<=1 MiB f32) while
    leaving >=2 bands per image so the pipeline has steps to overlap."""
    band = 1
    for d in range(1, H + 1):
        if H % d == 0 and d * W <= target_rows and H // d >= 2:
            band = d
    return band


# ---------------------------------------------------------------------------
# Wrapper
# ---------------------------------------------------------------------------
@jax.jit
def double_conv(x_nchw, params):
    """x_nchw: (N, Cin, H, W) f32 — same convention as the PyTorch module.

    Conv biases are accepted for API parity but unused: training-mode BN
    subtracts the per-channel batch mean, which cancels them exactly.
    """
    w1, _b1, g1, be1, w2, _b2, g2, be2 = params
    N, Cin, H, W = x_nchw.shape
    Cout = w1.shape[-1]

    # Static assumptions behind the layout-free in-kernel merges and the
    # single-K-tile tap packing.
    assert W % 8 == 0, "W must be a multiple of 8 (sublane-aligned merges)"
    assert 9 * Cin <= LANE and 9 * Cout <= LANE and Cout <= LANE, (
        "channel count too large for single-tile tap packing")
    # TODO(synk): tile the packed-K / Co dims (and DMA a row-band halo) for
    # deeper UNet stages where 9*C > 128 or a full image no longer fits VMEM.

    band_h = _pick_band_h(H, W)

    # Layout plumbing (tiny): NCHW -> NHWC.  Channels are NOT padded in HBM.
    x = jnp.transpose(x_nchw, (0, 2, 3, 1)).astype(jnp.float32)

    w1p, w2p = _pack_taps(w1), _pack_taps(w2)
    ones_in = jnp.ones((1, Cin), jnp.float32)
    zeros_in = jnp.zeros((1, Cin), jnp.float32)

    # conv1 (+ per-image BN partial stats); y1 stored bf16, real channels only.
    y1, st1 = _conv_stats(x, ones_in, zeros_in, w1p, Cout, band_h=band_h,
                          out_dtype=jnp.bfloat16, apply_affine_relu=False)
    scale1, shift1 = _fold_bn(st1, g1, be1, H * W)

    # bn1 + relu (fused into conv2's input load) + conv2 (+ partial stats);
    # y2 stays f32: it feeds the f32 epilogue directly.
    y2, st2 = _conv_stats(y1, scale1, shift1, w2p, Cout, band_h=band_h,
                          out_dtype=jnp.float32, apply_affine_relu=True)
    scale2, shift2 = _fold_bn(st2, g2, be2, H * W)

    # bn2 + relu epilogue on the real channels only.
    out_nhwc = _bn_relu(y2, scale2, shift2, band_h=band_h)

    # Layout plumbing back: NHWC -> NCHW (no padded-channel slice needed).
    return jnp.transpose(out_nhwc, (0, 3, 1, 2))


# ---------------------------------------------------------------------------
# Reference & test
# ---------------------------------------------------------------------------
def reference_double_conv(x_nchw, params, conv_dtype=jnp.float32,
                          y1_store_dtype=jnp.float32, use_bias=True):
    """Pure-JAX reference with PyTorch semantics (training-mode BN).

    conv_dtype=bf16 + y1_store_dtype=bf16 + use_bias=False mirrors the
    kernel's rounding points (bf16 MXU operands, bf16 y1 intermediate, biases
    cancelled by batch-mean subtraction) for a tight numerical comparison.
    """
    w1, b1, g1, be1, w2, b2, g2, be2 = params

    def conv(x, w, b):
        y = lax.conv_general_dilated(
            x.astype(conv_dtype), w.astype(conv_dtype),
            window_strides=(1, 1), padding="SAME",
            dimension_numbers=("NCHW", "HWIO", "NCHW"),
            preferred_element_type=jnp.float32)
        if use_bias:
            y = y + b[None, :, None, None]
        return y

    def bn_relu(y_stats, y_apply, g, be):
        mean = jnp.mean(y_stats, axis=(0, 2, 3), keepdims=True)
        var = jnp.mean((y_stats - mean) ** 2, axis=(0, 2, 3), keepdims=True)
        yn = (y_apply.astype(jnp.float32) - mean) * lax.rsqrt(var + BN_EPS)
        yn = yn * g[None, :, None, None] + be[None, :, None, None]
        return jnp.maximum(yn, 0.0)

    y1 = conv(x_nchw, w1, b1)
    a1 = bn_relu(y1, y1.astype(y1_store_dtype), g1, be1)
    y2 = conv(a1, w2, b2)
    return bn_relu(y2, y2, g2, be2)


def init_params(key, in_channels, out_channels):
    ks = jax.random.split(key, 8)
    w1 = 0.1 * jax.random.normal(ks[0], (3, 3, in_channels, out_channels), jnp.float32)
    b1 = 0.05 * jax.random.normal(ks[1], (out_channels,), jnp.float32)
    g1 = 1.0 + 0.1 * jax.random.normal(ks[2], (out_channels,), jnp.float32)
    be1 = 0.05 * jax.random.normal(ks[3], (out_channels,), jnp.float32)
    w2 = 0.1 * jax.random.normal(ks[4], (3, 3, out_channels, out_channels), jnp.float32)
    b2 = 0.05 * jax.random.normal(ks[5], (out_channels,), jnp.float32)
    g2 = 1.0 + 0.1 * jax.random.normal(ks[6], (out_channels,), jnp.float32)
    be2 = 0.05 * jax.random.normal(ks[7], (out_channels,), jnp.float32)
    return (w1, b1, g1, be1, w2, b2, g2, be2)


if __name__ == "__main__":
    key = jax.random.PRNGKey(0)
    k_x, k_p = jax.random.split(key)

    N, Cin, Cout, H, W = 2, 4, 8, 16, 16
    x = jax.random.normal(k_x, (N, Cin, H, W), jnp.float32)
    params = init_params(k_p, Cin, Cout)

    out = jax.block_until_ready(double_conv(x, params))
    assert out.shape == (N, Cout, H, W)

    # Tight check vs a reference that mirrors the kernel's rounding points
    # (bf16 conv operands, bf16 y1 intermediate, biases cancelled by BN).
    ref_mirror = reference_double_conv(
        x, params, conv_dtype=jnp.bfloat16, y1_store_dtype=jnp.bfloat16,
        use_bias=False)
    assert jnp.allclose(out, ref_mirror, rtol=5e-3, atol=5e-3), (
        float(jnp.max(jnp.abs(out - ref_mirror))))

    # Loose sanity check vs the pure-f32 PyTorch-semantics reference; the
    # atol headroom covers bf16 operand/intermediate rounding, amplified by
    # the BN normalization near the ReLU threshold (tight check is above).
    ref_f32 = reference_double_conv(x, params)
    assert jnp.allclose(out, ref_f32, rtol=5e-2, atol=1e-1), (
        float(jnp.max(jnp.abs(out - ref_f32))))

    # TODO(synk): benchmark at realistic UNet H,W with xprof (min of runs);
    # at 2x16x16 wall time is dominated by launches and XLA glue.
    print("KERNEL_OK")
</pallas_src>

<mosaic_0001>
module attributes {stable_mosaic.version = 11 : i64} {
  func.func @_bn_relu_kernel(%arg0: i32, %arg1: i32, %arg2: memref<1x8x16x8xf32, #tpu.memory_space<vmem>>, %arg3: memref<1x8xf32, #tpu.memory_space<vmem>>, %arg4: memref<1x8xf32, #tpu.memory_space<vmem>>, %arg5: memref<1x8x16x8xf32, #tpu.memory_space<vmem>>) attributes {dimension_semantics = [#tpu.dimension_semantics<parallel>, #tpu.dimension_semantics<parallel>], iteration_bounds = array<i64: 2, 2>, scalar_prefetch = 0 : i64, scratch_operands = 0 : i64, tpu.core_type = #tpu.core_type<tc>, window_params = [{transform_indices = @transform_0, window_bounds = array<i64: 1, 8, 16, 8>}, {pipeline_mode = #tpu.pipeline_mode<synchronous>, transform_indices = @transform_1, window_bounds = array<i64: 1, 8>}, {pipeline_mode = #tpu.pipeline_mode<synchronous>, transform_indices = @transform_2, window_bounds = array<i64: 1, 8>}, {transform_indices = @transform_3, window_bounds = array<i64: 1, 8, 16, 8>}]} {
    %c0 = arith.constant 0 : index
    %c0_0 = arith.constant 0 : index
    %0 = vector.load %arg3[%c0, %c0_0] : memref<1x8xf32, #tpu.memory_space<vmem>>, vector<1x8xf32>
    %1 = vector.shape_cast %0 : vector<1x8xf32> to vector<1x1x1x8xf32>
    %c0_1 = arith.constant 0 : index
    %c0_2 = arith.constant 0 : index
    %2 = vector.load %arg4[%c0_1, %c0_2] : memref<1x8xf32, #tpu.memory_space<vmem>>, vector<1x8xf32>
    %3 = vector.shape_cast %2 : vector<1x8xf32> to vector<1x1x1x8xf32>
    %c0_3 = arith.constant 0 : index
    %c0_4 = arith.constant 0 : index
    %c0_5 = arith.constant 0 : index
    %c0_6 = arith.constant 0 : index
    %4 = vector.load %arg2[%c0_3, %c0_4, %c0_5, %c0_6] : memref<1x8x16x8xf32, #tpu.memory_space<vmem>>, vector<1x8x16x8xf32>
    %5 = vector.broadcast %1 : vector<1x1x1x8xf32> to vector<1x8x16x8xf32>
    %6 = arith.mulf %4, %5 : vector<1x8x16x8xf32>
    %7 = vector.broadcast %3 : vector<1x1x1x8xf32> to vector<1x8x16x8xf32>
    %8 = arith.addf %6, %7 : vector<1x8x16x8xf32>
    %cst = arith.constant 0.000000e+00 : f32
    %9 = vector.broadcast %cst : f32 to vector<1x8x16x8xf32>
    %10 = arith.maximumf %8, %9 : vector<1x8x16x8xf32>
    %c0_7 = arith.constant 0 : index
    %c0_8 = arith.constant 0 : index
    %c0_9 = arith.constant 0 : index
    %c0_10 = arith.constant 0 : index
    %11 = vector.load %arg5[%c0_7, %c0_8, %c0_9, %c0_10] : memref<1x8x16x8xf32, #tpu.memory_space<vmem>>, vector<1x8x16x8xf32>
    tpu.vector_store %arg5[%c0_7, %c0_8, %c0_9, %c0_10], %10 {strides = array<i32>} : memref<1x8x16x8xf32, #tpu.memory_space<vmem>>, vector<1x8x16x8xf32>,
    return
  }
  func.func @transform_0(%arg0: i32, %arg1: i32) -> (i32, i32, i32, i32) {
    %c0_i32 = arith.constant 0 : i32
    %c0_i32_0 = arith.constant 0 : i32
    %c0_i32_1 = arith.constant 0 : i32
    return %arg0, %arg1, %c0_i32, %c0_i32_0 : i32, i32, i32, i32
  }
  func.func @transform_1(%arg0: i32, %arg1: i32) -> (i32, i32) {
    %c0_i32 = arith.constant 0 : i32
    %c0_i32_0 = arith.constant 0 : i32
    %c0_i32_1 = arith.constant 0 : i32
    return %c0_i32, %c0_i32_0 : i32, i32
  }
  func.func @transform_2(%arg0: i32, %arg1: i32) -> (i32, i32) {
    %c0_i32 = arith.constant 0 : i32
    %c0_i32_0 = arith.constant 0 : i32
    %c0_i32_1 = arith.constant 0 : i32
    return %c0_i32, %c0_i32_0 : i32, i32
  }
  func.func @transform_3(%arg0: i32, %arg1: i32) -> (i32, i32, i32, i32) {
    %c0_i32 = arith.constant 0 : i32
    %c0_i32_0 = arith.constant 0 : i32
    %c0_i32_1 = arith.constant 0 : i32
    return %arg0, %arg1, %c0_i32, %c0_i32_0 : i32, i32, i32, i32
  }
}

module attributes {stable_mosaic.version = 11 : i64} {
  func.func @_conv_stats_kernel(%arg0: i32, %arg1: i32, %arg2: memref<1x16x16x4xf32, #tpu.memory_space<vmem>>, %arg3: memref<1x4xf32, #tpu.memory_space<vmem>>, %arg4: memref<1x4xf32, #tpu.memory_space<vmem>>, %arg5: memref<128x128xbf16, #tpu.memory_space<vmem>>, %arg6: memref<1x8x16x8xbf16, #tpu.memory_space<vmem>>, %arg7: memref<1x2x8xf32, #tpu.memory_space<vmem>>, %arg8: memref<18x18x4xf32, #tpu.memory_space<vmem>>) attributes {dimension_semantics = [#tpu.dimension_semantics<parallel>, #tpu.dimension_semantics<arbitrary>], iteration_bounds = array<i64: 2, 2>, scalar_prefetch = 0 : i64, scratch_operands = 1 : i64, tpu.core_type = #tpu.core_type<tc>, window_params = [{transform_indices = @transform_0, window_bounds = array<i64: 1, 16, 16, 4>}, {pipeline_mode = #tpu.pipeline_mode<synchronous>, transform_indices = @transform_1, window_bounds = array<i64: 1, 4>}, {pipeline_mode = #tpu.pipeline_mode<synchronous>, transform_indices = @transform_2, window_bounds = array<i64: 1, 4>}, {pipeline_mode = #tpu.pipeline_mode<synchronous>, transform_indices = @transform_3, window_bounds = array<i64: 128, 128>}, {transform_indices = @transform_4, window_bounds = array<i64: 1, 8, 16, 8>}, {transform_indices = @transform_5, window_bounds = array<i64: 1, 2, 8>}]} {
    %c0_i32 = arith.constant 0 : i32
    %0 = arith.cmpi eq, %arg1, %c0_i32 : i32
    %1 = arith.extui %0 : i1 to i32
    %c0_i32_0 = arith.constant 0 : i32
    %2 = arith.cmpi ne, %1, %c0_i32_0 : i32
    scf.if %2 {
      %c0_40 = arith.constant 0 : index
      %c0_41 = arith.constant 0 : index
      %c0_42 = arith.constant 0 : index
      %c0_43 = arith.constant 0 : index
      %66 = vector.load %arg2[%c0_40, %c0_41, %c0_42, %c0_43] : memref<1x16x16x4xf32, #tpu.memory_space<vmem>>, vector<1x16x16x4xf32>
      %67 = vector.shape_cast %66 : vector<1x16x16x4xf32> to vector<16x16x4xf32>
      %cst_44 = arith.constant 0.000000e+00 : f32
      %68 = vector.broadcast %cst_44 : f32 to vector<1x18x4xf32>
      %c0_45 = arith.constant 0 : index
      %c0_46 = arith.constant 0 : index
      %c0_47 = arith.constant 0 : index
      %69 = vector.load %arg8[%c0_45, %c0_46, %c0_47] : memref<18x18x4xf32, #tpu.memory_space<vmem>>, vector<1x18x4xf32>
      tpu.vector_store %arg8[%c0_45, %c0_46, %c0_47], %68 {strides = array<i32>} : memref<18x18x4xf32, #tpu.memory_space<vmem>>, vector<1x18x4xf32>,
      %cst_48 = arith.constant 0.000000e+00 : f32
      %70 = vector.broadcast %cst_48 : f32 to vector<1x18x4xf32>
      %c17 = arith.constant 17 : index
      %c0_49 = arith.constant 0 : index
      %c0_50 = arith.constant 0 : index
      %71 = vector.load %arg8[%c17, %c0_49, %c0_50] : memref<18x18x4xf32, #tpu.memory_space<vmem>>, vector<1x18x4xf32>
      tpu.vector_store %arg8[%c17, %c0_49, %c0_50], %70 {strides = array<i32>} : memref<18x18x4xf32, #tpu.memory_space<vmem>>, vector<1x18x4xf32>,
      %cst_51 = arith.constant 0.000000e+00 : f32
      %72 = vector.broadcast %cst_51 : f32 to vector<16x1x4xf32>
      %c1_52 = arith.constant 1 : index
      %c0_53 = arith.constant 0 : index
      %c0_54 = arith.constant 0 : index
      %73 = vector.load %arg8[%c1_52, %c0_53, %c0_54] : memref<18x18x4xf32, #tpu.memory_space<vmem>>, vector<16x1x4xf32>
      tpu.vector_store %arg8[%c1_52, %c0_53, %c0_54], %72 {strides = array<i32>} : memref<18x18x4xf32, #tpu.memory_space<vmem>>, vector<16x1x4xf32>,
      %cst_55 = arith.constant 0.000000e+00 : f32
      %74 = vector.broadcast %cst_55 : f32 to vector<16x1x4xf32>
      %c1_56 = arith.constant 1 : index
      %c17_57 = arith.constant 17 : index
      %c0_58 = arith.constant 0 : index
      %75 = vector.load %arg8[%c1_56, %c17_57, %c0_58] : memref<18x18x4xf32, #tpu.memory_space<vmem>>, vector<16x1x4xf32>
      tpu.vector_store %arg8[%c1_56, %c17_57, %c0_58], %74 {strides = array<i32>} : memref<18x18x4xf32, #tpu.memory_space<vmem>>, vector<16x1x4xf32>,
      %c1_59 = arith.constant 1 : index
      %c1_60 = arith.constant 1 : index
      %c0_61 = arith.constant 0 : index
      %76 = vector.load %arg8[%c1_59, %c1_60, %c0_61] : memref<18x18x4xf32, #tpu.memory_space<vmem>>, vector<16x16x4xf32>
      tpu.vector_store %arg8[%c1_59, %c1_60, %c0_61], %67 {strides = array<i32>} : memref<18x18x4xf32, #tpu.memory_space<vmem>>, vector<16x16x4xf32>,
    } else {
    }
    %c8_i32 = arith.constant 8 : i32
    %3 = arith.muli %arg1, %c8_i32 : i32
    %c0_i32_1 = arith.constant 0 : i32
    %4 = arith.addi %3, %c0_i32_1 : i32
    %5 = arith.index_cast %4 : i32 to index
    %c0 = arith.constant 0 : index
    %c0_2 = arith.constant 0 : index
    %6 = vector.load %arg8[%5, %c0, %c0_2] : memref<18x18x4xf32, #tpu.memory_space<vmem>>, vector<8x16x4xf32>
    %7 = vector.shape_cast %6 : vector<8x16x4xf32> to vector<128x4xf32>
    %c0_i32_3 = arith.constant 0 : i32
    %8 = arith.addi %3, %c0_i32_3 : i32
    %9 = arith.index_cast %8 : i32 to index
    %c1 = arith.constant 1 : index
    %c0_4 = arith.constant 0 : index
    %10 = vector.load %arg8[%9, %c1, %c0_4] : memref<18x18x4xf32, #tpu.memory_space<vmem>>, vector<8x16x4xf32>
    %11 = vector.shape_cast %10 : vector<8x16x4xf32> to vector<128x4xf32>
    %c0_i32_5 = arith.constant 0 : i32
    %12 = arith.addi %3, %c0_i32_5 : i32
    %13 = arith.index_cast %12 : i32 to index
    %c2 = arith.constant 2 : index
    %c0_6 = arith.constant 0 : index
    %14 = vector.load %arg8[%13, %c2, %c0_6] : memref<18x18x4xf32, #tpu.memory_space<vmem>>, vector<8x16x4xf32>
    %15 = vector.shape_cast %14 : vector<8x16x4xf32> to vector<128x4xf32>
    %c1_i32 = arith.constant 1 : i32
    %16 = arith.addi %3, %c1_i32 : i32
    %17 = arith.index_cast %16 : i32 to index
    %c0_7 = arith.constant 0 : index
    %c0_8 = arith.constant 0 : index
    %18 = vector.load %arg8[%17, %c0_7, %c0_8] : memref<18x18x4xf32, #tpu.memory_space<vmem>>, vector<8x16x4xf32>
    %19 = vector.shape_cast %18 : vector<8x16x4xf32> to vector<128x4xf32>
    %c1_i32_9 = arith.constant 1 : i32
    %20 = arith.addi %3, %c1_i32_9 : i32
    %21 = arith.index_cast %20 : i32 to index
    %c1_10 = arith.constant 1 : index
    %c0_11 = arith.constant 0 : index
    %22 = vector.load %arg8[%21, %c1_10, %c0_11] : memref<18x18x4xf32, #tpu.memory_space<vmem>>, vector<8x16x4xf32>
    %23 = vector.shape_cast %22 : vector<8x16x4xf32> to vector<128x4xf32>
    %c1_i32_12 = arith.constant 1 : i32
    %24 = arith.addi %3, %c1_i32_12 : i32
    %25 = arith.index_cast %24 : i32 to index
    %c2_13 = arith.constant 2 : index
    %c0_14 = arith.constant 0 : index
    %26 = vector.load %arg8[%25, %c2_13, %c0_14] : memref<18x18x4xf32, #tpu.memory_space<vmem>>, vector<8x16x4xf32>
    %27 = vector.shape_cast %26 : vector<8x16x4xf32> to vector<128x4xf32>
    %c2_i32 = arith.constant 2 : i32
    %28 = arith.addi %3, %c2_i32 : i32
    %29 = arith.index_cast %28 : i32 to index
    %c0_15 = arith.constant 0 : index
    %c0_16 = arith.constant 0 : index
    %30 = vector.load %arg8[%29, %c0_15, %c0_16] : memref<18x18x4xf32, #tpu.memory_space<vmem>>, vector<8x16x4xf32>
    %31 = vector.shape_cast %30 : vector<8x16x4xf32> to vector<128x4xf32>
    %c2_i32_17 = arith.constant 2 : i32
    %32 = arith.addi %3, %c2_i32_17 : i32
    %33 = arith.index_cast %32 : i32 to index
    %c1_18 = arith.constant 1 : index
    %c0_19 = arith.constant 0 : index
    %34 = vector.load %arg8[%33, %c1_18, %c0_19] : memref<18x18x4xf32, #tpu.memory_space<vmem>>, vector<8x16x4xf32>
    %35 = vector.shape_cast %34 : vector<8x16x4xf32> to vector<128x4xf32>
    %c2_i32_20 = arith.constant 2 : i32
    %36 = arith.addi %3, %c2_i32_20 : i32
    %37 = arith.index_cast %36 : i32 to index
    %c2_21 = arith.constant 2 : index
    %c0_22 = arith.constant 0 : index
    %38 = vector.load %arg8[%37, %c2_21, %c0_22] : memref<18x18x4xf32, #tpu.memory_space<vmem>>, vector<8x16x4xf32>
    %39 = vector.shape_cast %38 : vector<8x16x4xf32> to vector<128x4xf32>
    %cst = arith.constant 0.000000e+00 : f32
    %40 = vector.broadcast %cst : f32 to vector<128x92xf32>
    %41 = tpu.concatenate %7, %11, %15, %19, %23, %27, %31, %35, %39, %40 in 1 : vector<128x4xf32>, vector<128x4xf32>, vector<128x4xf32>, vector<128x4xf32>, vector<128x4xf32>, vector<128x4xf32>, vector<128x4xf32>, vector<128x4xf32>, vector<128x4xf32>, vector<128x92xf32> -> vector<128x128xf32>
    %42 = arith.truncf %41 : vector<128x128xf32> to vector<128x128xbf16>
    %c0_23 = arith.constant 0 : index
    %c0_24 = arith.constant 0 : index
    %43 = vector.load %arg5[%c0_23, %c0_24] : memref<128x128xbf16, #tpu.memory_space<vmem>>, vector<128x128xbf16>
    %cst_25 = arith.constant dense<0.000000e+00> : vector<128x128xf32>
    %44 = tpu.matmul %42, %43, %cst_25 {dimension_numbers = #tpu.dot_dimension_numbers<[1], [0], [0], [1], [0, 0, 1, 1], [], []>} : vector<128x128xbf16>, vector<128x128xbf16>, vector<128x128xf32> -> vector<128x128xf32>
    %45 = vector.extract_strided_slice %44 {offsets = [0, 0], sizes = [128, 8], strides = [1, 1]} : vector<128x128xf32> to vector<128x8xf32>
    %cst_26 = arith.constant dense<0.000000e+00> : vector<8xf32>
    %46 = vector.multi_reduction <add>, %45, %cst_26 [0] : vector<128x8xf32> to vector<8xf32>
    %47 = vector.shape_cast %46 : vector<8xf32> to vector<1x8xf32>
    %48 = arith.mulf %45, %45 : vector<128x8xf32>
    %cst_27 = arith.constant dense<0.000000e+00> : vector<8xf32>
    %49 = vector.multi_reduction <add>, %48, %cst_27 [0] : vector<128x8xf32> to vector<8xf32>
    %50 = vector.shape_cast %49 : vector<8xf32> to vector<1x8xf32>
    %51 = tpu.concatenate %47, %50 in 0 : vector<1x8xf32>, vector<1x8xf32> -> vector<2x8xf32>
    %c0_i32_28 = arith.constant 0 : i32
    %52 = arith.cmpi eq, %arg1, %c0_i32_28 : i32
    %53 = arith.extui %52 : i1 to i32
    %c0_i32_29 = arith.constant 0 : i32
    %54 = arith.cmpi ne, %53, %c0_i32_29 : i32
    scf.if %54 {
      %cst_40 = arith.constant 0.000000e+00 : f32
      %66 = vector.broadcast %cst_40 : f32 to vector<1x2x8xf32>
      %c0_41 = arith.constant 0 : index
      %c0_42 = arith.constant 0 : index
      %c0_43 = arith.constant 0 : index
      %67 = vector.load %arg7[%c0_41, %c0_42, %c0_43] : memref<1x2x8xf32, #tpu.memory_space<vmem>>, vector<1x2x8xf32>
      tpu.vector_store %arg7[%c0_41, %c0_42, %c0_43], %66 {strides = array<i32>} : memref<1x2x8xf32, #tpu.memory_space<vmem>>, vector<1x2x8xf32>,
    } else {
    }
    %c0_30 = arith.constant 0 : index
    %c0_31 = arith.constant 0 : index
    %c0_32 = arith.constant 0 : index
    %55 = vector.load %arg7[%c0_30, %c0_31, %c0_32] : memref<1x2x8xf32, #tpu.memory_space<vmem>>, vector<1x2x8xf32>
    %56 = vector.shape_cast %55 : vector<1x2x8xf32> to vector<2x8xf32>
    %57 = arith.addf %56, %51 : vector<2x8xf32>
    %c0_33 = arith.constant 0 : index
    %c0_34 = arith.constant 0 : index
    %c0_35 = arith.constant 0 : index
    %58 = vector.load %arg7[%c0_33, %c0_34, %c0_35] : memref<1x2x8xf32, #tpu.memory_space<vmem>>, vector<1x2x8xf32>
    %59 = vector.shape_cast %58 : vector<1x2x8xf32> to vector<2x8xf32>
    %60 = vector.shape_cast %57 : vector<2x8xf32> to vector<1x2x8xf32>
    tpu.vector_store %arg7[%c0_33, %c0_34, %c0_35], %60 {strides = array<i32>} : memref<1x2x8xf32, #tpu.memory_space<vmem>>, vector<1x2x8xf32>,
    %61 = vector.shape_cast %45 : vector<128x8xf32> to vector<8x16x8xf32>
    %62 = arith.truncf %61 : vector<8x16x8xf32> to vector<8x16x8xbf16>
    %c0_36 = arith.constant 0 : index
    %c0_37 = arith.constant 0 : index
    %c0_38 = arith.constant 0 : index
    %c0_39 = arith.constant 0 : index
    %63 = vector.load %arg6[%c0_36, %c0_37, %c0_38, %c0_39] : memref<1x8x16x8xbf16, #tpu.memory_space<vmem>>, vector<1x8x16x8xbf16>
    %64 = vector.shape_cast %63 : vector<1x8x16x8xbf16> to vector<8x16x8xbf16>
    %65 = vector.shape_cast %62 : vector<8x16x8xbf16> to vector<1x8x16x8xbf16>
    tpu.vector_store %arg6[%c0_36, %c0_37, %c0_38, %c0_39], %65 {strides = array<i32>} : memref<1x8x16x8xbf16, #tpu.memory_space<vmem>>, vector<1x8x16x8xbf16>,
    return
  }
  func.func @transform_0(%arg0: i32, %arg1: i32) -> (i32, i32, i32, i32) {
    %c0_i32 = arith.constant 0 : i32
    %c0_i32_0 = arith.constant 0 : i32
    %c0_i32_1 = arith.constant 0 : i32
    %c0_i32_2 = arith.constant 0 : i32
    return %arg0, %c0_i32, %c0_i32_0, %c0_i32_1 : i32, i32, i32, i32
  }
  func.func @transform_1(%arg0: i32, %arg1: i32) -> (i32, i32) {
    %c0_i32 = arith.constant 0 : i32
    %c0_i32_0 = arith.constant 0 : i32
    %c0_i32_1 = arith.constant 0 : i32
    return %c0_i32, %c0_i32_0 : i32, i32
  }
  func.func @transform_2(%arg0: i32, %arg1: i32) -> (i32, i32) {
    %c0_i32 = arith.constant 0 : i32
    %c0_i32_0 = arith.constant 0 : i32
    %c0_i32_1 = arith.constant 0 : i32
    return %c0_i32, %c0_i32_0 : i32, i32
  }
  func.func @transform_3(%arg0: i32, %arg1: i32) -> (i32, i32) {
    %c0_i32 = arith.constant 0 : i32
    %c0_i32_0 = arith.constant 0 : i32
    %c0_i32_1 = arith.constant 0 : i32
    return %c0_i32, %c0_i32_0 : i32, i32
  }
  func.func @transform_4(%arg0: i32, %arg1: i32) -> (i32, i32, i32, i32) {
    %c0_i32 = arith.constant 0 : i32
    %c0_i32_0 = arith.constant 0 : i32
    %c0_i32_1 = arith.constant 0 : i32
    return %arg0, %arg1, %c0_i32, %c0_i32_0 : i32, i32, i32, i32
  }
  func.func @transform_5(%arg0: i32, %arg1: i32) -> (i32, i32, i32) {
    %c0_i32 = arith.constant 0 : i32
    %c0_i32_0 = arith.constant 0 : i32
    %c0_i32_1 = arith.constant 0 : i32
    return %arg0, %c0_i32, %c0_i32_0 : i32, i32, i32
  }
}

module attributes {stable_mosaic.version = 11 : i64} {
  func.func @_conv_stats_kernel(%arg0: i32, %arg1: i32, %arg2: memref<1x16x16x8xbf16, #tpu.memory_space<vmem>>, %arg3: memref<1x8xf32, #tpu.memory_space<vmem>>, %arg4: memref<1x8xf32, #tpu.memory_space<vmem>>, %arg5: memref<128x128xbf16, #tpu.memory_space<vmem>>, %arg6: memref<1x8x16x8xf32, #tpu.memory_space<vmem>>, %arg7: memref<1x2x8xf32, #tpu.memory_space<vmem>>, %arg8: memref<18x18x8xf32, #tpu.memory_space<vmem>>) attributes {dimension_semantics = [#tpu.dimension_semantics<parallel>, #tpu.dimension_semantics<arbitrary>], iteration_bounds = array<i64: 2, 2>, scalar_prefetch = 0 : i64, scratch_operands = 1 : i64, tpu.core_type = #tpu.core_type<tc>, window_params = [{transform_indices = @transform_0, window_bounds = array<i64: 1, 16, 16, 8>}, {pipeline_mode = #tpu.pipeline_mode<synchronous>, transform_indices = @transform_1, window_bounds = array<i64: 1, 8>}, {pipeline_mode = #tpu.pipeline_mode<synchronous>, transform_indices = @transform_2, window_bounds = array<i64: 1, 8>}, {pipeline_mode = #tpu.pipeline_mode<synchronous>, transform_indices = @transform_3, window_bounds = array<i64: 128, 128>}, {transform_indices = @transform_4, window_bounds = array<i64: 1, 8, 16, 8>}, {transform_indices = @transform_5, window_bounds = array<i64: 1, 2, 8>}]} {
    %c0_i32 = arith.constant 0 : i32
    %0 = arith.cmpi eq, %arg1, %c0_i32 : i32
    %1 = arith.extui %0 : i1 to i32
    %c0_i32_0 = arith.constant 0 : i32
    %2 = arith.cmpi ne, %1, %c0_i32_0 : i32
    scf.if %2 {
      %c0_40 = arith.constant 0 : index
      %c0_41 = arith.constant 0 : index
      %c0_42 = arith.constant 0 : index
      %c0_43 = arith.constant 0 : index
      %65 = vector.load %arg2[%c0_40, %c0_41, %c0_42, %c0_43] : memref<1x16x16x8xbf16, #tpu.memory_space<vmem>>, vector<1x16x16x8xbf16>
      %66 = vector.shape_cast %65 : vector<1x16x16x8xbf16> to vector<16x16x8xbf16>
      %67 = arith.extf %66 : vector<16x16x8xbf16> to vector<16x16x8xf32>
      %c0_44 = arith.constant 0 : index
      %c0_45 = arith.constant 0 : index
      %68 = vector.load %arg3[%c0_44, %c0_45] : memref<1x8xf32, #tpu.memory_space<vmem>>, vector<1x8xf32>
      %69 = vector.shape_cast %68 : vector<1x8xf32> to vector<1x1x8xf32>
      %c0_46 = arith.constant 0 : index
      %c0_47 = arith.constant 0 : index
      %70 = vector.load %arg4[%c0_46, %c0_47] : memref<1x8xf32, #tpu.memory_space<vmem>>, vector<1x8xf32>
      %71 = vector.shape_cast %70 : vector<1x8xf32> to vector<1x1x8xf32>
      %72 = vector.broadcast %69 : vector<1x1x8xf32> to vector<16x16x8xf32>
      %73 = arith.mulf %67, %72 : vector<16x16x8xf32>
      %74 = vector.broadcast %71 : vector<1x1x8xf32> to vector<16x16x8xf32>
      %75 = arith.addf %73, %74 : vector<16x16x8xf32>
      %cst_48 = arith.constant 0.000000e+00 : f32
      %76 = vector.broadcast %cst_48 : f32 to vector<16x16x8xf32>
      %77 = arith.maximumf %75, %76 : vector<16x16x8xf32>
      %cst_49 = arith.constant 0.000000e+00 : f32
      %78 = vector.broadcast %cst_49 : f32 to vector<1x18x8xf32>
      %c0_50 = arith.constant 0 : index
      %c0_51 = arith.constant 0 : index
      %c0_52 = arith.constant 0 : index
      %79 = vector.load %arg8[%c0_50, %c0_51, %c0_52] : memref<18x18x8xf32, #tpu.memory_space<vmem>>, vector<1x18x8xf32>
      tpu.vector_store %arg8[%c0_50, %c0_51, %c0_52], %78 {strides = array<i32>} : memref<18x18x8xf32, #tpu.memory_space<vmem>>, vector<1x18x8xf32>,
      %cst_53 = arith.constant 0.000000e+00 : f32
      %80 = vector.broadcast %cst_53 : f32 to vector<1x18x8xf32>
      %c17 = arith.constant 17 : index
      %c0_54 = arith.constant 0 : index
      %c0_55 = arith.constant 0 : index
      %81 = vector.load %arg8[%c17, %c0_54, %c0_55] : memref<18x18x8xf32, #tpu.memory_space<vmem>>, vector<1x18x8xf32>
      tpu.vector_store %arg8[%c17, %c0_54, %c0_55], %80 {strides = array<i32>} : memref<18x18x8xf32, #tpu.memory_space<vmem>>, vector<1x18x8xf32>,
      %cst_56 = arith.constant 0.000000e+00 : f32
      %82 = vector.broadcast %cst_56 : f32 to vector<16x1x8xf32>
      %c1_57 = arith.constant 1 : index
      %c0_58 = arith.constant 0 : index
      %c0_59 = arith.constant 0 : index
      %83 = vector.load %arg8[%c1_57, %c0_58, %c0_59] : memref<18x18x8xf32, #tpu.memory_space<vmem>>, vector<16x1x8xf32>
      tpu.vector_store %arg8[%c1_57, %c0_58, %c0_59], %82 {strides = array<i32>} : memref<18x18x8xf32, #tpu.memory_space<vmem>>, vector<16x1x8xf32>,
      %cst_60 = arith.constant 0.000000e+00 : f32
      %84 = vector.broadcast %cst_60 : f32 to vector<16x1x8xf32>
      %c1_61 = arith.constant 1 : index
      %c17_62 = arith.constant 17 : index
      %c0_63 = arith.constant 0 : index
      %85 = vector.load %arg8[%c1_61, %c17_62, %c0_63] : memref<18x18x8xf32, #tpu.memory_space<vmem>>, vector<16x1x8xf32>
      tpu.vector_store %arg8[%c1_61, %c17_62, %c0_63], %84 {strides = array<i32>} : memref<18x18x8xf32, #tpu.memory_space<vmem>>, vector<16x1x8xf32>,
      %c1_64 = arith.constant 1 : index
      %c1_65 = arith.constant 1 : index
      %c0_66 = arith.constant 0 : index
      %86 = vector.load %arg8[%c1_64, %c1_65, %c0_66] : memref<18x18x8xf32, #tpu.memory_space<vmem>>, vector<16x16x8xf32>
      tpu.vector_store %arg8[%c1_64, %c1_65, %c0_66], %77 {strides = array<i32>} : memref<18x18x8xf32, #tpu.memory_space<vmem>>, vector<16x16x8xf32>,
    } else {
    }
    %c8_i32 = arith.constant 8 : i32
    %3 = arith.muli %arg1, %c8_i32 : i32
    %c0_i32_1 = arith.constant 0 : i32
    %4 = arith.addi %3, %c0_i32_1 : i32
    %5 = arith.index_cast %4 : i32 to index
    %c0 = arith.constant 0 : index
    %c0_2 = arith.constant 0 : index
    %6 = vector.load %arg8[%5, %c0, %c0_2] : memref<18x18x8xf32, #tpu.memory_space<vmem>>, vector<8x16x8xf32>
    %7 = vector.shape_cast %6 : vector<8x16x8xf32> to vector<128x8xf32>
    %c0_i32_3 = arith.constant 0 : i32
    %8 = arith.addi %3, %c0_i32_3 : i32
    %9 = arith.index_cast %8 : i32 to index
    %c1 = arith.constant 1 : index
    %c0_4 = arith.constant 0 : index
    %10 = vector.load %arg8[%9, %c1, %c0_4] : memref<18x18x8xf32, #tpu.memory_space<vmem>>, vector<8x16x8xf32>
    %11 = vector.shape_cast %10 : vector<8x16x8xf32> to vector<128x8xf32>
    %c0_i32_5 = arith.constant 0 : i32
    %12 = arith.addi %3, %c0_i32_5 : i32
    %13 = arith.index_cast %12 : i32 to index
    %c2 = arith.constant 2 : index
    %c0_6 = arith.constant 0 : index
    %14 = vector.load %arg8[%13, %c2, %c0_6] : memref<18x18x8xf32, #tpu.memory_space<vmem>>, vector<8x16x8xf32>
    %15 = vector.shape_cast %14 : vector<8x16x8xf32> to vector<128x8xf32>
    %c1_i32 = arith.constant 1 : i32
    %16 = arith.addi %3, %c1_i32 : i32
    %17 = arith.index_cast %16 : i32 to index
    %c0_7 = arith.constant 0 : index
    %c0_8 = arith.constant 0 : index
    %18 = vector.load %arg8[%17, %c0_7, %c0_8] : memref<18x18x8xf32, #tpu.memory_space<vmem>>, vector<8x16x8xf32>
    %19 = vector.shape_cast %18 : vector<8x16x8xf32> to vector<128x8xf32>
    %c1_i32_9 = arith.constant 1 : i32
    %20 = arith.addi %3, %c1_i32_9 : i32
    %21 = arith.index_cast %20 : i32 to index
    %c1_10 = arith.constant 1 : index
    %c0_11 = arith.constant 0 : index
    %22 = vector.load %arg8[%21, %c1_10, %c0_11] : memref<18x18x8xf32, #tpu.memory_space<vmem>>, vector<8x16x8xf32>
    %23 = vector.shape_cast %22 : vector<8x16x8xf32> to vector<128x8xf32>
    %c1_i32_12 = arith.constant 1 : i32
    %24 = arith.addi %3, %c1_i32_12 : i32
    %25 = arith.index_cast %24 : i32 to index
    %c2_13 = arith.constant 2 : index
    %c0_14 = arith.constant 0 : index
    %26 = vector.load %arg8[%25, %c2_13, %c0_14] : memref<18x18x8xf32, #tpu.memory_space<vmem>>, vector<8x16x8xf32>
    %27 = vector.shape_cast %26 : vector<8x16x8xf32> to vector<128x8xf32>
    %c2_i32 = arith.constant 2 : i32
    %28 = arith.addi %3, %c2_i32 : i32
    %29 = arith.index_cast %28 : i32 to index
    %c0_15 = arith.constant 0 : index
    %c0_16 = arith.constant 0 : index
    %30 = vector.load %arg8[%29, %c0_15, %c0_16] : memref<18x18x8xf32, #tpu.memory_space<vmem>>, vector<8x16x8xf32>
    %31 = vector.shape_cast %30 : vector<8x16x8xf32> to vector<128x8xf32>
    %c2_i32_17 = arith.constant 2 : i32
    %32 = arith.addi %3, %c2_i32_17 : i32
    %33 = arith.index_cast %32 : i32 to index
    %c1_18 = arith.constant 1 : index
    %c0_19 = arith.constant 0 : index
    %34 = vector.load %arg8[%33, %c1_18, %c0_19] : memref<18x18x8xf32, #tpu.memory_space<vmem>>, vector<8x16x8xf32>
    %35 = vector.shape_cast %34 : vector<8x16x8xf32> to vector<128x8xf32>
    %c2_i32_20 = arith.constant 2 : i32
    %36 = arith.addi %3, %c2_i32_20 : i32
    %37 = arith.index_cast %36 : i32 to index
    %c2_21 = arith.constant 2 : index
    %c0_22 = arith.constant 0 : index
    %38 = vector.load %arg8[%37, %c2_21, %c0_22] : memref<18x18x8xf32, #tpu.memory_space<vmem>>, vector<8x16x8xf32>
    %39 = vector.shape_cast %38 : vector<8x16x8xf32> to vector<128x8xf32>
    %cst = arith.constant 0.000000e+00 : f32
    %40 = vector.broadcast %cst : f32 to vector<128x56xf32>
    %41 = tpu.concatenate %7, %11, %15, %19, %23, %27, %31, %35, %39, %40 in 1 : vector<128x8xf32>, vector<128x8xf32>, vector<128x8xf32>, vector<128x8xf32>, vector<128x8xf32>, vector<128x8xf32>, vector<128x8xf32>, vector<128x8xf32>, vector<128x8xf32>, vector<128x56xf32> -> vector<128x128xf32>
    %42 = arith.truncf %41 : vector<128x128xf32> to vector<128x128xbf16>
    %c0_23 = arith.constant 0 : index
    %c0_24 = arith.constant 0 : index
    %43 = vector.load %arg5[%c0_23, %c0_24] : memref<128x128xbf16, #tpu.memory_space<vmem>>, vector<128x128xbf16>
    %cst_25 = arith.constant dense<0.000000e+00> : vector<128x128xf32>
    %44 = tpu.matmul %42, %43, %cst_25 {dimension_numbers = #tpu.dot_dimension_numbers<[1], [0], [0], [1], [0, 0, 1, 1], [], []>} : vector<128x128xbf16>, vector<128x128xbf16>, vector<128x128xf32> -> vector<128x128xf32>
    %45 = vector.extract_strided_slice %44 {offsets = [0, 0], sizes = [128, 8], strides = [1, 1]} : vector<128x128xf32> to vector<128x8xf32>
    %cst_26 = arith.constant dense<0.000000e+00> : vector<8xf32>
    %46 = vector.multi_reduction <add>, %45, %cst_26 [0] : vector<128x8xf32> to vector<8xf32>
    %47 = vector.shape_cast %46 : vector<8xf32> to vector<1x8xf32>
    %48 = arith.mulf %45, %45 : vector<128x8xf32>
    %cst_27 = arith.constant dense<0.000000e+00> : vector<8xf32>
    %49 = vector.multi_reduction <add>, %48, %cst_27 [0] : vector<128x8xf32> to vector<8xf32>
    %50 = vector.shape_cast %49 : vector<8xf32> to vector<1x8xf32>
    %51 = tpu.concatenate %47, %50 in 0 : vector<1x8xf32>, vector<1x8xf32> -> vector<2x8xf32>
    %c0_i32_28 = arith.constant 0 : i32
    %52 = arith.cmpi eq, %arg1, %c0_i32_28 : i32
    %53 = arith.extui %52 : i1 to i32
    %c0_i32_29 = arith.constant 0 : i32
    %54 = arith.cmpi ne, %53, %c0_i32_29 : i32
    scf.if %54 {
      %cst_40 = arith.constant 0.000000e+00 : f32
      %65 = vector.broadcast %cst_40 : f32 to vector<1x2x8xf32>
      %c0_41 = arith.constant 0 : index
      %c0_42 = arith.constant 0 : index
      %c0_43 = arith.constant 0 : index
      %66 = vector.load %arg7[%c0_41, %c0_42, %c0_43] : memref<1x2x8xf32, #tpu.memory_space<vmem>>, vector<1x2x8xf32>
      tpu.vector_store %arg7[%c0_41, %c0_42, %c0_43], %65 {strides = array<i32>} : memref<1x2x8xf32, #tpu.memory_space<vmem>>, vector<1x2x8xf32>,
    } else {
    }
    %c0_30 = arith.constant 0 : index
    %c0_31 = arith.constant 0 : index
    %c0_32 = arith.constant 0 : index
    %55 = vector.load %arg7[%c0_30, %c0_31, %c0_32] : memref<1x2x8xf32, #tpu.memory_space<vmem>>, vector<1x2x8xf32>
    %56 = vector.shape_cast %55 : vector<1x2x8xf32> to vector<2x8xf32>
    %57 = arith.addf %56, %51 : vector<2x8xf32>
    %c0_33 = arith.constant 0 : index
    %c0_34 = arith.constant 0 : index
    %c0_35 = arith.constant 0 : index
    %58 = vector.load %arg7[%c0_33, %c0_34, %c0_35] : memref<1x2x8xf32, #tpu.memory_space<vmem>>, vector<1x2x8xf32>
    %59 = vector.shape_cast %58 : vector<1x2x8xf32> to vector<2x8xf32>
    %60 = vector.shape_cast %57 : vector<2x8xf32> to vector<1x2x8xf32>
    tpu.vector_store %arg7[%c0_33, %c0_34, %c0_35], %60 {strides = array<i32>} : memref<1x2x8xf32, #tpu.memory_space<vmem>>, vector<1x2x8xf32>,
    %61 = vector.shape_cast %45 : vector<128x8xf32> to vector<8x16x8xf32>
    %c0_36 = arith.constant 0 : index
    %c0_37 = arith.constant 0 : index
    %c0_38 = arith.constant 0 : index
    %c0_39 = arith.constant 0 : index
    %62 = vector.load %arg6[%c0_36, %c0_37, %c0_38, %c0_39] : memref<1x8x16x8xf32, #tpu.memory_space<vmem>>, vector<1x8x16x8xf32>
    %63 = vector.shape_cast %62 : vector<1x8x16x8xf32> to vector<8x16x8xf32>
    %64 = vector.shape_cast %61 : vector<8x16x8xf32> to vector<1x8x16x8xf32>
    tpu.vector_store %arg6[%c0_36, %c0_37, %c0_38, %c0_39], %64 {strides = array<i32>} : memref<1x8x16x8xf32, #tpu.memory_space<vmem>>, vector<1x8x16x8xf32>,
    return
  }
  func.func @transform_0(%arg0: i32, %arg1: i32) -> (i32, i32, i32, i32) {
    %c0_i32 = arith.constant 0 : i32
    %c0_i32_0 = arith.constant 0 : i32
    %c0_i32_1 = arith.constant 0 : i32
    %c0_i32_2 = arith.constant 0 : i32
    return %arg0, %c0_i32, %c0_i32_0, %c0_i32_1 : i32, i32, i32, i32
  }
  func.func @transform_1(%arg0: i32, %arg1: i32) -> (i32, i32) {
    %c0_i32 = arith.constant 0 : i32
    %c0_i32_0 = arith.constant 0 : i32
    %c0_i32_1 = arith.constant 0 : i32
    return %c0_i32, %c0_i32_0 : i32, i32
  }
  func.func @transform_2(%arg0: i32, %arg1: i32) -> (i32, i32) {
    %c0_i32 = arith.constant 0 : i32
    %c0_i32_0 = arith.constant 0 : i32
    %c0_i32_1 = arith.constant 0 : i32
    return %c0_i32, %c0_i32_0 : i32, i32
  }
  func.func @transform_3(%arg0: i32, %arg1: i32) -> (i32, i32) {
    %c0_i32 = arith.constant 0 : i32
    %c0_i32_0 = arith.constant 0 : i32
    %c0_i32_1 = arith.constant 0 : i32
    return %c0_i32, %c0_i32_0 : i32, i32
  }
  func.func @transform_4(%arg0: i32, %arg1: i32) -> (i32, i32, i32, i32) {
    %c0_i32 = arith.constant 0 : i32
    %c0_i32_0 = arith.constant 0 : i32
    %c0_i32_1 = arith.constant 0 : i32
    return %arg0, %arg1, %c0_i32, %c0_i32_0 : i32, i32, i32, i32
  }
  func.func @transform_5(%arg0: i32, %arg1: i32) -> (i32, i32, i32) {
    %c0_i32 = arith.constant 0 : i32
    %c0_i32_0 = arith.constant 0 : i32
    %c0_i32_1 = arith.constant 0 : i32
    return %arg0, %c0_i32, %c0_i32_0 : i32, i32, i32
  }
}

</mosaic_0001>

<llo_original>
// kernel: double_conv.5
$region0: #{double_conv.5}
  #allocation0 [shape = 'u32[]', space=smem, size = 0x4, offset = 0x4, fixed_abs, tag = 'smem constant byte address 0x4 - core index']
  #allocation1 [shape = 'u32[72,128]{1,0:T(1,128)}', space=vmem, size = 0x9000, scoped, tag = 'internal scratch']
  %s0 = inlined_call_operand.vmem [shape: f32[2,16,16,8], index: 0, kind: input, shape index: {}]
  %s1 = inlined_call_operand.vmem [shape: f32[1,8], index: 1, kind: input, shape index: {}]
  %s2 = inlined_call_operand.vmem [shape: f32[1,8], index: 2, kind: input, shape index: {}]
  %s3 = inlined_call_operand.vmem [shape: f32[2,16,16,8], index: 3, kind: output, shape index: {}]
  %s4 = sld [smem:[#allocation0]]
  $region45: #{double_conv.5} parent=0
    _
  %s6 = ssub.s32 1, %s4
  %s7 = scalar_select 0, %s6, %s4
  loop: start=0, step=1, limit=6
  $region2: #{double_conv.5} parent=0 // loop_pre_header
    _
  $region3: #{double_conv.5} parent=0 // loop_header
    %s9 = sphi 0, %s13
    %p10 = scmp.ge.s32.totalorder %s9, 6
    %s16 = sphi 0, %s28
    %s17 = sphi 0, %s24
    %s18 = sphi 0, %s16
    %s19 = sphi 0, %s17
    %s20 = sphi 0, %s18
    %s21 = sphi 0, %s19
    %s33 = sphi 0, %s35
    %s36 = sphi 0, %s33
    %s37 = sphi 0, %s36
    %s53 = sphi 0, %s37
    %s57 = sphi 0, %s57
    %s59 = sphi 0, %s57
    %s60 = sphi 0, %s59
    %s74 = sphi 0, %s60
    %s78 = sphi 0, %s78
    %s80 = sphi 0, %s78
    %s81 = sphi 0, %s80
    %s95 = sphi 0, %s81
    %s103 = sphi 0, %s105
    %s106 = sphi 0, %s103
    %s107 = sphi 0, %s106
    %s123 = sphi 0, %s107
  $region4: #{double_conv.5} parent=0 // loop_header_branch
    %12 = sbr.rel (%p10) target = $region8
  $region5: #{double_conv.5} parent=0 // loop_body
    %s14 = ssub.s32 %s9, 1
    %s15 = ssub.s32 %s9, 2
    %s22 = sadd.s32 1, %s17
    %p23 = scmp.ge.s32.totalorder %s22, 2
    %s24 = scalar_select %p23, 0, %s22
    %s25 = sadd.s32 1, %s16
    %s26 = scalar_select %p23, %s25, %s16
    %p27 = scmp.ge.s32.totalorder %s26, 2
    %s28 = scalar_select %p27, 0, %s26
    %s29 = ssub.s32 %s16, %s28
    %s30 = ssub.s32 %s17, %s24
    %s31 = sor.u32 %s29, %s30
    %p32 = scmp.eq.s32.totalorder %s31, 0
    %s34 = sadd.s32 %s33, 1
    %s35 = scalar_select %p32, %s33, %s34
    %p38 = pneg %p32
    %p39 = scmp.eq.s32.totalorder %s9, 3
    %p40 = por %p38, %p39
    %p41 = scmp.ne.s32.totalorder %s33, %s36
    %p42 = scmp.eq.s32.totalorder %s9, 0
    %p43 = por %p41, %p42
    %p44 = scmp.ne.s32.totalorder %s33, %s36
    %p45 = scmp.eq.s32.totalorder %s14, 3
    %p46 = por %p44, %p45
    %p47 = scmp.ne.s32.totalorder %s36, %s37
    %p48 = scmp.eq.s32.totalorder %s14, 0
    %p49 = por %p47, %p48
    %p50 = scmp.ne.s32.totalorder %s36, %s37
    %p51 = scmp.eq.s32.totalorder %s15, 3
    %p52 = por %p50, %p51
    %p54 = scmp.ne.s32.totalorder %s37, %s53
    %p55 = scmp.eq.s32.totalorder %s15, 0
    %p56 = por %p54, %p55
    %s58 = sadd.s32 %s57, 1
    %p61 = scmp.eq.s32.totalorder %s9, 3
    %p62 = scmp.ne.s32.totalorder %s57, %s59
    %p63 = scmp.eq.s32.totalorder %s9, 0
    %p64 = por %p62, %p63
    %p65 = scmp.ne.s32.totalorder %s57, %s59
    %p66 = scmp.eq.s32.totalorder %s14, 3
    %p67 = por %p65, %p66
    %p68 = scmp.ne.s32.totalorder %s59, %s60
    %p69 = scmp.eq.s32.totalorder %s14, 0
    %p70 = por %p68, %p69
    %p71 = scmp.ne.s32.totalorder %s59, %s60
    %p72 = scmp.eq.s32.totalorder %s15, 3
    %p73 = por %p71, %p72
    %p75 = scmp.ne.s32.totalorder %s60, %s74
    %p76 = scmp.eq.s32.totalorder %s15, 0
    %p77 = por %p75, %p76
    %s79 = sadd.s32 %s78, 1
    %p82 = scmp.eq.s32.totalorder %s9, 3
    %p83 = scmp.ne.s32.totalorder %s78, %s80
    %p84 = scmp.eq.s32.totalorder %s9, 0
    %p85 = por %p83, %p84
    %p86 = scmp.ne.s32.totalorder %s78, %s80
    %p87 = scmp.eq.s32.totalorder %s14, 3
    %p88 = por %p86, %p87
    %p89 = scmp.ne.s32.totalorder %s80, %s81
    %p90 = scmp.eq.s32.totalorder %s14, 0
    %p91 = por %p89, %p90
    %p92 = scmp.ne.s32.totalorder %s80, %s81
    %p93 = scmp.eq.s32.totalorder %s15, 3
    %p94 = por %p92, %p93
    %p96 = scmp.ne.s32.totalorder %s81, %s95
    %p97 = scmp.eq.s32.totalorder %s15, 0
    %p98 = por %p96, %p97
    %s99 = ssub.s32 %s16, %s28
    %s100 = ssub.s32 %s17, %s24
    %s101 = sor.u32 %s99, %s100
    %p102 = scmp.eq.s32.totalorder %s101, 0
    %s104 = sadd.s32 %s103, 1
    %s105 = scalar_select %p102, %s103, %s104
    %p108 = pneg %p102
    %p109 = scmp.eq.s32.totalorder %s9, 3
    %p110 = por %p108, %p109
    %p111 = scmp.ne.s32.totalorder %s103, %s106
    %p112 = scmp.eq.s32.totalorder %s9, 0
    %p113 = por %p111, %p112
    %p114 = scmp.ne.s32.totalorder %s103, %s106
    %p115 = scmp.eq.s32.totalorder %s14, 3
    %p116 = por %p114, %p115
    %p117 = scmp.ne.s32.totalorder %s106, %s107
    %p118 = scmp.eq.s32.totalorder %s14, 0
    %p119 = por %p117, %p118
    %p120 = scmp.ne.s32.totalorder %s106, %s107
    %p121 = scmp.eq.s32.totalorder %s15, 3
    %p122 = por %p120, %p121
    %p124 = scmp.ne.s32.totalorder %s107, %s123
    %p125 = scmp.eq.s32.totalorder %s15, 0
    %p126 = por %p124, %p125
    %p127 = scmp.le.s32.totalorder 1, %s9
    %p128 = scmp.lt.s32.totalorder %s9, 5
    %p129 = pnand %p127, %p128
    %p130 = pneg %p129
    // Predicated region
    $region9: #{double_conv.5} parent=5 // pred_check
      _
    $region10: #{double_conv.5} parent=5 // pred_check_branch
      %132 = sbr.rel (%p129) target = $region12
    $region11: #{double_conv.5} parent=5 // pred_region
      %s133 = ssub.s32 %s9, 1
      // Predicated region
      $region13: #{double_conv.5} parent=11 // pred_check
        %p134 = pneg %p70
      $region14: #{double_conv.5} parent=11 // pred_check_branch
        %136 = sbr.rel (%p134) target = $region16
      $region15: #{double_conv.5} parent=11 // pred_region
        _
      $region16: #{double_conv.5} parent=11 // pred_fallthru
        _
      // Predicated region
      $region17: #{double_conv.5} parent=11 // pred_check
        %p137 = pneg %p91
      $region18: #{double_conv.5} parent=11 // pred_check_branch
        %139 = sbr.rel (%p137) target = $region20
      $region19: #{double_conv.5} parent=11 // pred_region
        _
      $region20: #{double_conv.5} parent=11 // pred_fallthru
        _
    $region12: #{double_conv.5} parent=5 // pred_fallthru
      _
    %p140 = scmp.lt.s32.totalorder %s9, 4
    // Predicated region
    $region21: #{double_conv.5} parent=5 // pred_check
      %p141 = pneg %p140
    $region22: #{double_conv.5} parent=5 // pred_check_branch
      %143 = sbr.rel (%p141) target = $region24
    $region23: #{double_conv.5} parent=5 // pred_region
      // Predicated region
      $region25: #{double_conv.5} parent=23 // pred_check
        %p144 = pneg %p43
      $region26: #{double_conv.5} parent=23 // pred_check_branch
        %146 = sbr.rel (%p144) target = $region28
      $region27: #{double_conv.5} parent=23 // pred_region
        %s147 = smul.u32 8, %s17
        %p148 = scmp.lt.s32.totalorder %s16, 1
        %s149 = scalar_select %p148, %s16, 1
        %p150 = scmp.lt.s32.totalorder %s147, 15
        %s151 = scalar_select %p150, %s147, 15
        %s152 = smul.addr %s151, 2
        %s153 = smul.addr %s149, 32
        %s154 = sadd.s32 %s152, %s153
        %s155 = smul.addr %s154, 8
        %s156 = scalar_lea.vmem %s0, %s155
        %s157 = smul.u32 8, %s17
      $region28: #{double_conv.5} parent=23 // pred_fallthru
        _
    $region24: #{double_conv.5} parent=5 // pred_fallthru
      _
    %p158 = scmp.le.s32.totalorder 1, %s9
    %p159 = scmp.lt.s32.totalorder %s9, 5
    %p160 = pnand %p158, %p159
    %p161 = pneg %p160
    // Predicated region
    $region29: #{double_conv.5} parent=5 // pred_check
      _
    $region30: #{double_conv.5} parent=5 // pred_check_branch
      %163 = sbr.rel (%p160) target = $region32
    $region31: #{double_conv.5} parent=5 // pred_region
      %s164 = ssub.s32 %s9, 1
      %s165 = smul.u32 8, %s19
      %p166 = scmp.lt.s32.totalorder %s18, 1
      %s167 = scalar_select %p166, %s18, 1
      %p168 = scmp.lt.s32.totalorder %s165, 15
      %s169 = scalar_select %p168, %s165, 15
      %s170 = smul.addr %s169, 2
      %s171 = smul.addr %s167, 32
      %s172 = sadd.s32 %s170, %s171
      %s173 = smul.addr %s172, 8
      %s174 = scalar_lea.vmem %s0, %s173
      %p175 = pneg %p49
      %p176 = pneg %p46
      %p177 = pneg %p70
      %p178 = pneg %p67
      %p179 = pneg %p91
      %p180 = pneg %p88
      %p181 = pneg %p119
      %p182 = pneg %p116
      %s183 = smul.u32 8, %s19
      %p184 = scmp.lt.s32.totalorder %s18, 1
      %s185 = scalar_select %p184, %s18, 1
      %p186 = scmp.lt.s32.totalorder %s183, 15
      %s187 = scalar_select %p186, %s183, 15
      %s188 = smul.addr %s187, 2
      %s189 = smul.addr %s185, 32
      %s190 = sadd.s32 %s188, %s189
      %s191 = smul.addr %s190, 8
      %s192 = scalar_lea.vmem %s3, %s191
      %s193 = smul.u32 8, %s19
      %p194 = scmp.lt.s32.totalorder %s18, 1
      %s195 = scalar_select %p194, %s18, 1
      %p196 = scmp.lt.s32.totalorder %s193, 15
      %s197 = scalar_select %p196, %s193, 15
      %s198 = smul.addr %s197, 2
      %s199 = smul.addr %s195, 32
      %s200 = sadd.s32 %s198, %s199
      %s201 = smul.addr %s200, 8
      %s202 = scalar_lea.vmem %s0, %s201
      %s203 = smul.u32 8, %s19
      %s204 = smul.u32 8, %s19
      %p205 = scmp.lt.s32.totalorder %s18, 1
      %s206 = scalar_select %p205, %s18, 1
      %p207 = scmp.lt.s32.totalorder %s204, 15
      %s208 = scalar_select %p207, %s204, 15
      %s209 = smul.addr %s208, 2
      %s210 = smul.addr %s206, 32
      %s211 = sadd.s32 %s209, %s210
      %s212 = smul.addr %s211, 8
      %s213 = scalar_lea.vmem %s3, %s212
      %s214 = smul.u32 8, %s19
      %v215 = vld [vmem:[%s1] sm:$0x1]
      %v216 = vld [vmem:[%s2] sm:$0x1]
      %v217 = vld [vmem:[%s202] sm:$0xff]
      %v218 = vld [vmem:[%s202 + $0x8] sm:$0xff]
      %v219 = vld [vmem:[%s202 + $0x10] sm:$0xff]
      %v220 = vld [vmem:[%s202 + $0x18] sm:$0xff]
      %v221 = vld [vmem:[%s202 + $0x20] sm:$0xff]
      %v222 = vld [vmem:[%s202 + $0x28] sm:$0xff]
      %v223 = vld [vmem:[%s202 + $0x30] sm:$0xff]
      %v224 = vld [vmem:[%s202 + $0x38] sm:$0xff]
      %v225 = vld [vmem:[%s202 + $0x40] sm:$0xff]
      %v226 = vld [vmem:[%s202 + $0x48] sm:$0xff]
      %v227 = vld [vmem:[%s202 + $0x50] sm:$0xff]
      %v228 = vld [vmem:[%s202 + $0x58] sm:$0xff]
      %v229 = vld [vmem:[%s202 + $0x60] sm:$0xff]
      %v230 = vld [vmem:[%s202 + $0x68] sm:$0xff]
      %v231 = vld [vmem:[%s202 + $0x70] sm:$0xff]
      %v232 = vld [vmem:[%s202 + $0x78] sm:$0xff]
      %v234 = vperm.slane %v215, 0
      %v236 = vmul.f32 %v217, %v234
      %v237 = vmul.f32 %v218, %v234
      %v238 = vmul.f32 %v219, %v234
      %v239 = vmul.f32 %v220, %v234
      %v240 = vmul.f32 %v221, %v234
      %v241 = vmul.f32 %v222, %v234
      %v242 = vmul.f32 %v223, %v234
      %v243 = vmul.f32 %v224, %v234
      %v244 = vmul.f32 %v225, %v234
      %v245 = vmul.f32 %v226, %v234
      %v246 = vmul.f32 %v227, %v234
      %v247 = vmul.f32 %v228, %v234
      %v248 = vmul.f32 %v229, %v234
      %v249 = vmul.f32 %v230, %v234
      %v250 = vmul.f32 %v231, %v234
      %v251 = vmul.f32 %v232, %v234
      %v253 = vperm.slane %v216, 0
      %v255 = vadd.f32 %v236, %v253
      %v256 = vadd.f32 %v237, %v253
      %v257 = vadd.f32 %v238, %v253
      %v258 = vadd.f32 %v239, %v253
      %v259 = vadd.f32 %v240, %v253
      %v260 = vadd.f32 %v241, %v253
      %v261 = vadd.f32 %v242, %v253
      %v262 = vadd.f32 %v243, %v253
      %v263 = vadd.f32 %v244, %v253
      %v264 = vadd.f32 %v245, %v253
      %v265 = vadd.f32 %v246, %v253
      %v266 = vadd.f32 %v247, %v253
      %v267 = vadd.f32 %v248, %v253
      %v268 = vadd.f32 %v249, %v253
      %v269 = vadd.f32 %v250, %v253
      %v270 = vadd.f32 %v251, %v253
      %v271 = vmax.f32 %v255, 0.0
      %v272 = vmax.f32 %v256, 0.0
      %v273 = vmax.f32 %v257, 0.0
      %v274 = vmax.f32 %v258, 0.0
      %v275 = vmax.f32 %v259, 0.0
      %v276 = vmax.f32 %v260, 0.0
      %v277 = vmax.f32 %v261, 0.0
      %v278 = vmax.f32 %v262, 0.0
      %v279 = vmax.f32 %v263, 0.0
      %v280 = vmax.f32 %v264, 0.0
      %v281 = vmax.f32 %v265, 0.0
      %v282 = vmax.f32 %v266, 0.0
      %v283 = vmax.f32 %v267, 0.0
      %v284 = vmax.f32 %v268, 0.0
      %v285 = vmax.f32 %v269, 0.0
      %v286 = vmax.f32 %v270, 0.0
      %vm287 = vcmask 64512
      %288 = vst.msk [vmem:[%s213] sm:$0xff] %vm287, %v271
      %289 = vst.msk [vmem:[%s213 + $0x8] sm:$0xff] %vm287, %v272
      %290 = vst.msk [vmem:[%s213 + $0x10] sm:$0xff] %vm287, %v273
      %291 = vst.msk [vmem:[%s213 + $0x18] sm:$0xff] %vm287, %v274
      %292 = vst.msk [vmem:[%s213 + $0x20] sm:$0xff] %vm287, %v275
      %293 = vst.msk [vmem:[%s213 + $0x28] sm:$0xff] %vm287, %v276
      %294 = vst.msk [vmem:[%s213 + $0x30] sm:$0xff] %vm287, %v277
      %295 = vst.msk [vmem:[%s213 + $0x38] sm:$0xff] %vm287, %v278
      %296 = vst.msk [vmem:[%s213 + $0x40] sm:$0xff] %vm287, %v279
      %297 = vst.msk [vmem:[%s213 + $0x48] sm:$0xff] %vm287, %v280
      %298 = vst.msk [vmem:[%s213 + $0x50] sm:$0xff] %vm287, %v281
      %299 = vst.msk [vmem:[%s213 + $0x58] sm:$0xff] %vm287, %v282
      %300 = vst.msk [vmem:[%s213 + $0x60] sm:$0xff] %vm287, %v283
      %301 = vst.msk [vmem:[%s213 + $0x68] sm:$0xff] %vm287, %v284
      %302 = vst.msk [vmem:[%s213 + $0x70] sm:$0xff] %vm287, %v285
      %303 = vst.msk [vmem:[%s213 + $0x78] sm:$0xff] %vm287, %v286
      %s304 = smul.u32 8, %s19
      %p305 = scmp.lt.s32.totalorder %s18, 1
      %s306 = scalar_select %p305, %s18, 1
      %p307 = scmp.lt.s32.totalorder %s304, 15
      %s308 = scalar_select %p307, %s304, 15
      %s309 = smul.addr %s308, 2
      %s310 = smul.addr %s306, 32
      %s311 = sadd.s32 %s309, %s310
      %s312 = smul.addr %s311, 8
      %s313 = scalar_lea.vmem %s3, %s312
      // Predicated region
      $region33: #{double_conv.5} parent=31 // pred_check
        %p314 = pneg %p116
      $region34: #{double_conv.5} parent=31 // pred_check_branch
        %316 = sbr.rel (%p314) target = $region36
      $region35: #{double_conv.5} parent=31 // pred_region
        %s317 = smul.u32 8, %s19
      $region36: #{double_conv.5} parent=31 // pred_fallthru
        _
    $region32: #{double_conv.5} parent=5 // pred_fallthru
      _
    %p318 = scmp.le.s32.totalorder 2, %s9
    // Predicated region
    $region37: #{double_conv.5} parent=5 // pred_check
      %p319 = pneg %p318
    $region38: #{double_conv.5} parent=5 // pred_check_branch
      %321 = sbr.rel (%p319) target = $region40
    $region39: #{double_conv.5} parent=5 // pred_region
      %s322 = ssub.s32 %s9, 2
      // Predicated region
      $region41: #{double_conv.5} parent=39 // pred_check
        %p323 = pneg %p122
      $region42: #{double_conv.5} parent=39 // pred_check_branch
        %325 = sbr.rel (%p323) target = $region44
      $region43: #{double_conv.5} parent=39 // pred_region
        %s326 = smul.u32 8, %s21
        %p327 = scmp.lt.s32.totalorder %s20, 1
        %s328 = scalar_select %p327, %s20, 1
        %p329 = scmp.lt.s32.totalorder %s326, 15
        %s330 = scalar_select %p329, %s326, 15
        %s331 = smul.addr %s330, 2
        %s332 = smul.addr %s328, 32
        %s333 = sadd.s32 %s331, %s332
        %s334 = smul.addr %s333, 8
        %s335 = scalar_lea.vmem %s3, %s334
      $region44: #{double_conv.5} parent=39 // pred_fallthru
        _
    $region40: #{double_conv.5} parent=5 // pred_fallthru
      _
  $region6: #{double_conv.5} parent=0 // loop_footer
    %s13 = sadd.s32 1, %s9
  $region7: #{double_conv.5} parent=0 // loop_footer_branch
    %8 = sbr.rel target = $region3
  $region8: #{double_conv.5} parent=0 // loop_exit
    _

// kernel: double_conv.3
$region0: #{double_conv.3}
  #allocation0 [shape = 'u32[]', space=smem, size = 0x4, offset = 0x4, fixed_abs, tag = 'smem constant byte address 0x4 - core index']
  #allocation1 [shape = 'u32[72,128]{1,0:T(1,128)}', space=vmem, size = 0x9000, scoped, tag = 'internal scratch']
  #allocation2 [shape = 'f32[18,18,4]{2,1,0:T(8,128)}', space=vmem, size = 0x36000, scoped, tag = 'scratch operand']
  %s0 = inlined_call_operand.vmem [shape: f32[2,16,16,4], index: 0, kind: input, shape index: {}]
  %s1 = inlined_call_operand.vmem [shape: f32[1,4], index: 1, kind: input, shape index: {}]
  %s2 = inlined_call_operand.vmem [shape: f32[1,4], index: 2, kind: input, shape index: {}]
  %s3 = inlined_call_operand.vmem [shape: bf16[128,128], index: 3, kind: input, shape index: {}]
  %s4 = inlined_call_operand.vmem [shape: bf16[2,16,16,8], index: 4, kind: output, shape index: {0}]
  %s5 = inlined_call_operand.vmem [shape: f32[2,2,8], index: 5, kind: output, shape index: {1}]
  %6 = xla_tuple %s4, %s5
  %s7 = sld [smem:[#allocation0]]
  $region65: #{double_conv.3} parent=0
    _
  %s9 = ssub.s32 1, %s7
  %s10 = scalar_select 0, %s9, %s7
  loop: start=0, step=1, limit=6
  $region2: #{double_conv.3} parent=0 // loop_pre_header
    _
  $region3: #{double_conv.3} parent=0 // loop_header
    %s12 = sphi 0, %s16
    %p13 = scmp.ge.s32.totalorder %s12, 6
    %s19 = sphi 0, %s31
    %s20 = sphi 0, %s27
    %s21 = sphi 0, %s19
    %s22 = sphi 0, %s20
    %s23 = sphi 0, %s21
    %s24 = sphi 0, %s22
    %s34 = sphi 0, %s36
    %s37 = sphi 0, %s34
    %s38 = sphi 0, %s37
    %s54 = sphi 0, %s38
    %s58 = sphi 0, %s58
    %s60 = sphi 0, %s58
    %s61 = sphi 0, %s60
    %s75 = sphi 0, %s61
    %s79 = sphi 0, %s79
    %s81 = sphi 0, %s79
    %s82 = sphi 0, %s81
    %s96 = sphi 0, %s82
    %s100 = sphi 0, %s100
    %s102 = sphi 0, %s100
    %s103 = sphi 0, %s102
    %s117 = sphi 0, %s103
    %s125 = sphi 0, %s127
    %s128 = sphi 0, %s125
    %s129 = sphi 0, %s128
    %s145 = sphi 0, %s129
    %s151 = sphi 0, %s153
    %s154 = sphi 0, %s151
    %s155 = sphi 0, %s154
    %s171 = sphi 0, %s155
  $region4: #{double_conv.3} parent=0 // loop_header_branch
    %15 = sbr.rel (%p13) target = $region8
  $region5: #{double_conv.3} parent=0 // loop_body
    %s17 = ssub.s32 %s12, 1
    %s18 = ssub.s32 %s12, 2
    %s25 = sadd.s32 1, %s20
    %p26 = scmp.ge.s32.totalorder %s25, 2
    %s27 = scalar_select %p26, 0, %s25
    %s28 = sadd.s32 1, %s19
    %s29 = scalar_select %p26, %s28, %s19
    %p30 = scmp.ge.s32.totalorder %s29, 2
    %s31 = scalar_select %p30, 0, %s29
    %s32 = ssub.s32 %s19, %s31
    %p33 = scmp.eq.s32.totalorder %s32, 0
    %s35 = sadd.s32 %s34, 1
    %s36 = scalar_select %p33, %s34, %s35
    %p39 = pneg %p33
    %p40 = scmp.eq.s32.totalorder %s12, 3
    %p41 = por %p39, %p40
    %p42 = scmp.ne.s32.totalorder %s34, %s37
    %p43 = scmp.eq.s32.totalorder %s12, 0
    %p44 = por %p42, %p43
    %p45 = scmp.ne.s32.totalorder %s34, %s37
    %p46 = scmp.eq.s32.totalorder %s17, 3
    %p47 = por %p45, %p46
    %p48 = scmp.ne.s32.totalorder %s37, %s38
    %p49 = scmp.eq.s32.totalorder %s17, 0
    %p50 = por %p48, %p49
    %p51 = scmp.ne.s32.totalorder %s37, %s38
    %p52 = scmp.eq.s32.totalorder %s18, 3
    %p53 = por %p51, %p52
    %p55 = scmp.ne.s32.totalorder %s38, %s54
    %p56 = scmp.eq.s32.totalorder %s18, 0
    %p57 = por %p55, %p56
    %s59 = sadd.s32 %s58, 1
    %p62 = scmp.eq.s32.totalorder %s12, 3
    %p63 = scmp.ne.s32.totalorder %s58, %s60
    %p64 = scmp.eq.s32.totalorder %s12, 0
    %p65 = por %p63, %p64
    %p66 = scmp.ne.s32.totalorder %s58, %s60
    %p67 = scmp.eq.s32.totalorder %s17, 3
    %p68 = por %p66, %p67
    %p69 = scmp.ne.s32.totalorder %s60, %s61
    %p70 = scmp.eq.s32.totalorder %s17, 0
    %p71 = por %p69, %p70
    %p72 = scmp.ne.s32.totalorder %s60, %s61
    %p73 = scmp.eq.s32.totalorder %s18, 3
    %p74 = por %p72, %p73
    %p76 = scmp.ne.s32.totalorder %s61, %s75
    %p77 = scmp.eq.s32.totalorder %s18, 0
    %p78 = por %p76, %p77
    %s80 = sadd.s32 %s79, 1
    %p83 = scmp.eq.s32.totalorder %s12, 3
    %p84 = scmp.ne.s32.totalorder %s79, %s81
    %p85 = scmp.eq.s32.totalorder %s12, 0
    %p86 = por %p84, %p85
    %p87 = scmp.ne.s32.totalorder %s79, %s81
    %p88 = scmp.eq.s32.totalorder %s17, 3
    %p89 = por %p87, %p88
    %p90 = scmp.ne.s32.totalorder %s81, %s82
    %p91 = scmp.eq.s32.totalorder %s17, 0
    %p92 = por %p90, %p91
    %p93 = scmp.ne.s32.totalorder %s81, %s82
    %p94 = scmp.eq.s32.totalorder %s18, 3
    %p95 = por %p93, %p94
    %p97 = scmp.ne.s32.totalorder %s82, %s96
    %p98 = scmp.eq.s32.totalorder %s18, 0
    %p99 = por %p97, %p98
    %s101 = sadd.s32 %s100, 1
    %p104 = scmp.eq.s32.totalorder %s12, 3
    %p105 = scmp.ne.s32.totalorder %s100, %s102
    %p106 = scmp.eq.s32.totalorder %s12, 0
    %p107 = por %p105, %p106
    %p108 = scmp.ne.s32.totalorder %s100, %s102
    %p109 = scmp.eq.s32.totalorder %s17, 3
    %p110 = por %p108, %p109
    %p111 = scmp.ne.s32.totalorder %s102, %s103
    %p112 = scmp.eq.s32.totalorder %s17, 0
    %p113 = por %p111, %p112
    %p114 = scmp.ne.s32.totalorder %s102, %s103
    %p115 = scmp.eq.s32.totalorder %s18, 3
    %p116 = por %p114, %p115
    %p118 = scmp.ne.s32.totalorder %s103, %s117
    %p119 = scmp.eq.s32.totalorder %s18, 0
    %p120 = por %p118, %p119
    %s121 = ssub.s32 %s19, %s31
    %s122 = ssub.s32 %s20, %s27
    %s123 = sor.u32 %s121, %s122
    %p124 = scmp.eq.s32.totalorder %s123, 0
    %s126 = sadd.s32 %s125, 1
    %s127 = scalar_select %p124, %s125, %s126
    %p130 = pneg %p124
    %p131 = scmp.eq.s32.totalorder %s12, 3
    %p132 = por %p130, %p131
    %p133 = scmp.ne.s32.totalorder %s125, %s128
    %p134 = scmp.eq.s32.totalorder %s12, 0
    %p135 = por %p133, %p134
    %p136 = scmp.ne.s32.totalorder %s125, %s128
    %p137 = scmp.eq.s32.totalorder %s17, 3
    %p138 = por %p136, %p137
    %p139 = scmp.ne.s32.totalorder %s128, %s129
    %p140 = scmp.eq.s32.totalorder %s17, 0
    %p141 = por %p139, %p140
    %p142 = scmp.ne.s32.totalorder %s128, %s129
    %p143 = scmp.eq.s32.totalorder %s18, 3
    %p144 = por %p142, %p143
    %p146 = scmp.ne.s32.totalorder %s129, %s145
    %p147 = scmp.eq.s32.totalorder %s18, 0
    %p148 = por %p146, %p147
    %s149 = ssub.s32 %s19, %s31
    %p150 = scmp.eq.s32.totalorder %s149, 0
    %s152 = sadd.s32 %s151, 1
    %s153 = scalar_select %p150, %s151, %s152
    %p156 = pneg %p150
    %p157 = scmp.eq.s32.totalorder %s12, 3
    %p158 = por %p156, %p157
    %p159 = scmp.ne.s32.totalorder %s151, %s154
    %p160 = scmp.eq.s32.totalorder %s12, 0
    %p161 = por %p159, %p160
    %p162 = scmp.ne.s32.totalorder %s151, %s154
    %p163 = scmp.eq.s32.totalorder %s17, 3
    %p164 = por %p162, %p163
    %p165 = scmp.ne.s32.totalorder %s154, %s155
    %p166 = scmp.eq.s32.totalorder %s17, 0
    %p167 = por %p165, %p166
    %p168 = scmp.ne.s32.totalorder %s154, %s155
    %p169 = scmp.eq.s32.totalorder %s18, 3
    %p170 = por %p168, %p169
    %p172 = scmp.ne.s32.totalorder %s155, %s171
    %p173 = scmp.eq.s32.totalorder %s18, 0
    %p174 = por %p172, %p173
    %p175 = scmp.le.s32.totalorder 1, %s12
    %p176 = scmp.lt.s32.totalorder %s12, 5
    %p177 = pnand %p175, %p176
    %p178 = pneg %p177
    // Predicated region
    $region9: #{double_conv.3} parent=5 // pred_check
      _
    $region10: #{double_conv.3} parent=5 // pred_check_branch
      %180 = sbr.rel (%p177) target = $region12
    $region11: #{double_conv.3} parent=5 // pred_region
      %s181 = ssub.s32 %s12, 1
      // Predicated region
      $region13: #{double_conv.3} parent=11 // pred_check
        %p182 = pneg %p71
      $region14: #{double_conv.3} parent=11 // pred_check_branch
        %184 = sbr.rel (%p182) target = $region16
      $region15: #{double_conv.3} parent=11 // pred_region
        _
      $region16: #{double_conv.3} parent=11 // pred_fallthru
        _
      // Predicated region
      $region17: #{double_conv.3} parent=11 // pred_check
        %p185 = pneg %p92
      $region18: #{double_conv.3} parent=11 // pred_check_branch
        %187 = sbr.rel (%p185) target = $region20
      $region19: #{double_conv.3} parent=11 // pred_region
        _
      $region20: #{double_conv.3} parent=11 // pred_fallthru
        _
      // Predicated region
      $region21: #{double_conv.3} parent=11 // pred_check
        %p188 = pneg %p113
      $region22: #{double_conv.3} parent=11 // pred_check_branch
        %190 = sbr.rel (%p188) target = $region24
      $region23: #{double_conv.3} parent=11 // pred_region
        _
      $region24: #{double_conv.3} parent=11 // pred_fallthru
        _
    $region12: #{double_conv.3} parent=5 // pred_fallthru
      _
    %p191 = scmp.lt.s32.totalorder %s12, 4
    // Predicated region
    $region25: #{double_conv.3} parent=5 // pred_check
      %p192 = pneg %p191
    $region26: #{double_conv.3} parent=5 // pred_check_branch
      %194 = sbr.rel (%p192) target = $region28
    $region27: #{double_conv.3} parent=5 // pred_region
      // Predicated region
      $region29: #{double_conv.3} parent=27 // pred_check
        %p195 = pneg %p44
      $region30: #{double_conv.3} parent=27 // pred_check_branch
        %197 = sbr.rel (%p195) target = $region32
      $region31: #{double_conv.3} parent=27 // pred_region
        %p198 = scmp.lt.s32.totalorder %s19, 1
        %s199 = scalar_select %p198, %s19, 1
        %s200 = smul.addr %s199, 32
        %s201 = smul.addr %s200, 8
        %s202 = scalar_lea.vmem %s0, %s201
      $region32: #{double_conv.3} parent=27 // pred_fallthru
        _
    $region28: #{double_conv.3} parent=5 // pred_fallthru
      _
    %p203 = scmp.le.s32.totalorder 1, %s12
    %p204 = scmp.lt.s32.totalorder %s12, 5
    %p205 = pnand %p203, %p204
    %p206 = pneg %p205
    // Predicated region
    $region33: #{double_conv.3} parent=5 // pred_check
      _
    $region34: #{double_conv.3} parent=5 // pred_check_branch
      %208 = sbr.rel (%p205) target = $region36
    $region35: #{double_conv.3} parent=5 // pred_region
      %s209 = ssub.s32 %s12, 1
      %p210 = scmp.lt.s32.totalorder %s21, 1
      %s211 = scalar_select %p210, %s21, 1
      %s212 = smul.addr %s211, 32
      %s213 = smul.addr %s212, 8
      %s214 = scalar_lea.vmem %s0, %s213
      %p215 = pneg %p50
      %p216 = pneg %p47
      %p217 = pneg %p71
      %p218 = pneg %p68
      %p219 = pneg %p92
      %p220 = pneg %p89
      %p221 = pneg %p113
      %p222 = pneg %p110
      %p223 = pneg %p141
      %p224 = pneg %p138
      %s225 = smul.u32 8, %s22
      %p226 = scmp.lt.s32.totalorder %s21, 1
      %s227 = scalar_select %p226, %s21, 1
      %p228 = scmp.lt.s32.totalorder %s225, 15
      %s229 = scalar_select %p228, %s225, 15
      %s230 = smul.addr %s229, 2
      %s231 = smul.addr %s227, 32
      %s232 = sadd.s32 %s230, %s231
      %s233 = smul.addr %s232, 4
      %s234 = scalar_lea.vmem %s4, %s233
      %p235 = pneg %p167
      %p236 = pneg %p164
      %p237 = scmp.lt.s32.totalorder %s21, 1
      %s238 = scalar_select %p237, %s21, 1
      %s239 = smul.addr %s238, 2
      %s240 = scalar_lea.vmem %s5, %s239
      %p241 = scmp.lt.s32.totalorder %s21, 1
      %s242 = scalar_select %p241, %s21, 1
      %s243 = smul.addr %s242, 32
      %s244 = smul.addr %s243, 8
      %s245 = scalar_lea.vmem %s0, %s244
      %s246 = smul.u32 8, %s22
      %p247 = scmp.lt.s32.totalorder %s21, 1
      %s248 = scalar_select %p247, %s21, 1
      %p249 = scmp.lt.s32.totalorder %s246, 15
      %s250 = scalar_select %p249, %s246, 15
      %s251 = smul.addr %s250, 2
      %s252 = smul.addr %s248, 32
      %s253 = sadd.s32 %s251, %s252
      %s254 = smul.addr %s253, 4
      %s255 = scalar_lea.vmem %s4, %s254
      %s256 = smul.u32 8, %s22
      %p257 = scmp.lt.s32.totalorder %s21, 1
      %s258 = scalar_select %p257, %s21, 1
      %s259 = smul.addr %s258, 2
      %s260 = scalar_lea.vmem %s5, %s259
      %p261 = scmp.eq.s32.totalorder %s22, 0
      // Predicated region
      $region37: #{double_conv.3} parent=35 // pred_check
        %p262 = pneg %p261
      $region38: #{double_conv.3} parent=35 // pred_check_branch
        %264 = sbr.rel (%p262) target = $region40
      $region39: #{double_conv.3} parent=35 // pred_region
        %v265 = vld [vmem:[%s245] sm:$0xff]
        %v266 = vld [vmem:[%s245 + $0x8] sm:$0xff]
        %v267 = vld [vmem:[%s245 + $0x10] sm:$0xff]
        %v268 = vld [vmem:[%s245 + $0x18] sm:$0xff]
        %v269 = vld [vmem:[%s245 + $0x20] sm:$0xff]
        %v270 = vld [vmem:[%s245 + $0x28] sm:$0xff]
        %v271 = vld [vmem:[%s245 + $0x30] sm:$0xff]
        %v272 = vld [vmem:[%s245 + $0x38] sm:$0xff]
        %v273 = vld [vmem:[%s245 + $0x40] sm:$0xff]
        %v274 = vld [vmem:[%s245 + $0x48] sm:$0xff]
        %v275 = vld [vmem:[%s245 + $0x50] sm:$0xff]
        %v276 = vld [vmem:[%s245 + $0x58] sm:$0xff]
        %v277 = vld [vmem:[%s245 + $0x60] sm:$0xff]
        %v278 = vld [vmem:[%s245 + $0x68] sm:$0xff]
        %v279 = vld [vmem:[%s245 + $0x70] sm:$0xff]
        %v280 = vld [vmem:[%s245 + $0x78] sm:$0xff]
        %v281 = vld [vmem:[%s245 + $0x80] sm:$0xff]
        %v282 = vld [vmem:[%s245 + $0x88] sm:$0xff]
        %v283 = vld [vmem:[%s245 + $0x90] sm:$0xff]
        %v284 = vld [vmem:[%s245 + $0x98] sm:$0xff]
        %v285 = vld [vmem:[%s245 + $0xa0] sm:$0xff]
        %v286 = vld [vmem:[%s245 + $0xa8] sm:$0xff]
        %v287 = vld [vmem:[%s245 + $0xb0] sm:$0xff]
        %v288 = vld [vmem:[%s245 + $0xb8] sm:$0xff]
        %v289 = vld [vmem:[%s245 + $0xc0] sm:$0xff]
        %v290 = vld [vmem:[%s245 + $0xc8] sm:$0xff]
        %v291 = vld [vmem:[%s245 + $0xd0] sm:$0xff]
        %v292 = vld [vmem:[%s245 + $0xd8] sm:$0xff]
        %v293 = vld [vmem:[%s245 + $0xe0] sm:$0xff]
        %v294 = vld [vmem:[%s245 + $0xe8] sm:$0xff]
        %v295 = vld [vmem:[%s245 + $0xf0] sm:$0xff]
        %v296 = vld [vmem:[%s245 + $0xf8] sm:$0xff]
        %vm297 = vcmask 31744
        %298 = vst.msk [vmem:[#allocation2] sm:$0xff] %vm297, 0.0
        %299 = vst.msk [vmem:[#allocation2 + $0x8] sm:$0xff] %vm297, 0.0
        %vm300 = vcmask 25600
        %301 = vst.msk [vmem:[#allocation2 + $0x10] sm:$0x3] %vm300, 0.0
        %s302 = scalar_lea.vmem [#allocation2], 408
        %303 = vst.msk [vmem:[%s302] sm:$0xff] %vm297, 0.0
        %304 = vst.msk [vmem:[%s302 + $0x8] sm:$0xff] %vm297, 0.0
        %305 = vst.msk [vmem:[%s302 + $0x10] sm:$0x3] %vm300, 0.0
        %s306 = scalar_lea.vmem [#allocation2], 24
        %vm307 = vcmask 24576
        %308 = vst.msk [vmem:[%s306] sm:$0x1] %vm307, 0.0
        %309 = vst.msk [vmem:[%s306 + $0x18] sm:$0x1] %vm307, 0.0
        %310 = vst.msk [vmem:[%s306 + $0x30] sm:$0x1] %vm307, 0.0
        %311 = vst.msk [vmem:[%s306 + $0x48] sm:$0x1] %vm307, 0.0
        %312 = vst.msk [vmem:[%s306 + $0x60] sm:$0x1] %vm307, 0.0
        %313 = vst.msk [vmem:[%s306 + $0x78] sm:$0x1] %vm307, 0.0
        %314 = vst.msk [vmem:[%s306 + $0x90] sm:$0x1] %vm307, 0.0
        %315 = vst.msk [vmem:[%s306 + $0xa8] sm:$0x1] %vm307, 0.0
        %316 = vst.msk [vmem:[%s306 + $0xc0] sm:$0x1] %vm307, 0.0
        %317 = vst.msk [vmem:[%s306 + $0xd8] sm:$0x1] %vm307, 0.0
        %318 = vst.msk [vmem:[%s306 + $0xf0] sm:$0x1] %vm307, 0.0
        %319 = vst.msk [vmem:[%s306 + $0x108] sm:$0x1] %vm307, 0.0
        %320 = vst.msk [vmem:[%s306 + $0x120] sm:$0x1] %vm307, 0.0
        %321 = vst.msk [vmem:[%s306 + $0x138] sm:$0x1] %vm307, 0.0
        %322 = vst.msk [vmem:[%s306 + $0x150] sm:$0x1] %vm307, 0.0
        %323 = vst.msk [vmem:[%s306 + $0x168] sm:$0x1] %vm307, 0.0
        %324 = vst.msk [vmem:[%s306 + $0x11] sm:$0x1] %vm307, 0.0
        %325 = vst.msk [vmem:[%s306 + $0x29] sm:$0x1] %vm307, 0.0
        %326 = vst.msk [vmem:[%s306 + $0x41] sm:$0x1] %vm307, 0.0
        %327 = vst.msk [vmem:[%s306 + $0x59] sm:$0x1] %vm307, 0.0
        %328 = vst.msk [vmem:[%s306 + $0x71] sm:$0x1] %vm307, 0.0
        %329 = vst.msk [vmem:[%s306 + $0x89] sm:$0x1] %vm307, 0.0
        %330 = vst.msk [vmem:[%s306 + $0xa1] sm:$0x1] %vm307, 0.0
        %331 = vst.msk [vmem:[%s306 + $0xb9] sm:$0x1] %vm307, 0.0
        %332 = vst.msk [vmem:[%s306 + $0xd1] sm:$0x1] %vm307, 0.0
        %333 = vst.msk [vmem:[%s306 + $0xe9] sm:$0x1] %vm307, 0.0
        %334 = vst.msk [vmem:[%s306 + $0x101] sm:$0x1] %vm307, 0.0
        %335 = vst.msk [vmem:[%s306 + $0x119] sm:$0x1] %vm307, 0.0
        %336 = vst.msk [vmem:[%s306 + $0x131] sm:$0x1] %vm307, 0.0
        %337 = vst.msk [vmem:[%s306 + $0x149] sm:$0x1] %vm307, 0.0
        %338 = vst.msk [vmem:[%s306 + $0x161] sm:$0x1] %vm307, 0.0
        %339 = vst.msk [vmem:[%s306 + $0x179] sm:$0x1] %vm307, 0.0
        %340 = vst.msk [vmem:[%s306 + $0x1] sm:$0xff] %vm297, %v265
        %341 = vst.msk [vmem:[%s306 + $0x9] sm:$0xff] %vm297, %v266
        %342 = vst.msk [vmem:[%s306 + $0x19] sm:$0xff] %vm297, %v267
        %343 = vst.msk [vmem:[%s306 + $0x21] sm:$0xff] %vm297, %v268
        %344 = vst.msk [vmem:[%s306 + $0x31] sm:$0xff] %vm297, %v269
        %345 = vst.msk [vmem:[%s306 + $0x39] sm:$0xff] %vm297, %v270
        %346 = vst.msk [vmem:[%s306 + $0x49] sm:$0xff] %vm297, %v271
        %347 = vst.msk [vmem:[%s306 + $0x51] sm:$0xff] %vm297, %v272
        %348 = vst.msk [vmem:[%s306 + $0x61] sm:$0xff] %vm297, %v273
        %349 = vst.msk [vmem:[%s306 + $0x69] sm:$0xff] %vm297, %v274
        %350 = vst.msk [vmem:[%s306 + $0x79] sm:$0xff] %vm297, %v275
        %351 = vst.msk [vmem:[%s306 + $0x81] sm:$0xff] %vm297, %v276
        %352 = vst.msk [vmem:[%s306 + $0x91] sm:$0xff] %vm297, %v277
        %353 = vst.msk [vmem:[%s306 + $0x99] sm:$0xff] %vm297, %v278
        %354 = vst.msk [vmem:[%s306 + $0xa9] sm:$0xff] %vm297, %v279
        %355 = vst.msk [vmem:[%s306 + $0xb1] sm:$0xff] %vm297, %v280
        %356 = vst.msk [vmem:[%s306 + $0xc1] sm:$0xff] %vm297, %v281
        %357 = vst.msk [vmem:[%s306 + $0xc9] sm:$0xff] %vm297, %v282
        %358 = vst.msk [vmem:[%s306 + $0xd9] sm:$0xff] %vm297, %v283
        %359 = vst.msk [vmem:[%s306 + $0xe1] sm:$0xff] %vm297, %v284
        %360 = vst.msk [vmem:[%s306 + $0xf1] sm:$0xff] %vm297, %v285
        %361 = vst.msk [vmem:[%s306 + $0xf9] sm:$0xff] %vm297, %v286
        %362 = vst.msk [vmem:[%s306 + $0x109] sm:$0xff] %vm297, %v287
        %363 = vst.msk [vmem:[%s306 + $0x111] sm:$0xff] %vm297, %v288
        %364 = vst.msk [vmem:[%s306 + $0x121] sm:$0xff] %vm297, %v289
        %365 = vst.msk [vmem:[%s306 + $0x129] sm:$0xff] %vm297, %v290
        %366 = vst.msk [vmem:[%s306 + $0x139] sm:$0xff] %vm297, %v291
        %367 = vst.msk [vmem:[%s306 + $0x141] sm:$0xff] %vm297, %v292
        %368 = vst.msk [vmem:[%s306 + $0x151] sm:$0xff] %vm297, %v293
        %369 = vst.msk [vmem:[%s306 + $0x159] sm:$0xff] %vm297, %v294
        %370 = vst.msk [vmem:[%s306 + $0x169] sm:$0xff] %vm297, %v295
        %371 = vst.msk [vmem:[%s306 + $0x171] sm:$0xff] %vm297, %v296
      $region40: #{double_conv.3} parent=35 // pred_fallthru
        _
      %s372 = smul.u32 %s22, 8
      %s373 = smul.u32 %s372, 24
      %s374 = scalar_lea.vmem [#allocation2], %s373
      %v375 = vld [vmem:[%s374] sm:$0xff]
      %v376 = vld [vmem:[%s374 + $0x8] sm:$0xff]
      %v377 = vld [vmem:[%s374 + $0x18] sm:$0xff]
      %v378 = vld [vmem:[%s374 + $0x20] sm:$0xff]
      %v379 = vld [vmem:[%s374 + $0x30] sm:$0xff]
      %v380 = vld [vmem:[%s374 + $0x38] sm:$0xff]
      %v381 = vld [vmem:[%s374 + $0x48] sm:$0xff]
      %v382 = vld [vmem:[%s374 + $0x50] sm:$0xff]
      %v383 = vld [vmem:[%s374 + $0x60] sm:$0xff]
      %v384 = vld [vmem:[%s374 + $0x68] sm:$0xff]
      %v385 = vld [vmem:[%s374 + $0x78] sm:$0xff]
      %v386 = vld [vmem:[%s374 + $0x80] sm:$0xff]
      %v387 = vld [vmem:[%s374 + $0x90] sm:$0xff]
      %v388 = vld [vmem:[%s374 + $0x98] sm:$0xff]
      %v389 = vld [vmem:[%s374 + $0xa8] sm:$0xff]
      %v390 = vld [vmem:[%s374 + $0xb0] sm:$0xff]
      %v391 = vld [vmem:[%s374 + $0x1] sm:$0xff]
      %v392 = vld [vmem:[%s374 + $0x9] sm:$0xff]
      %v393 = vld [vmem:[%s374 + $0x19] sm:$0xff]
      %v394 = vld [vmem:[%s374 + $0x21] sm:$0xff]
      %v395 = vld [vmem:[%s374 + $0x31] sm:$0xff]
      %v396 = vld [vmem:[%s374 + $0x39] sm:$0xff]
      %v397 = vld [vmem:[%s374 + $0x49] sm:$0xff]
      %v398 = vld [vmem:[%s374 + $0x51] sm:$0xff]
      %v399 = vld [vmem:[%s374 + $0x61] sm:$0xff]
      %v400 = vld [vmem:[%s374 + $0x69] sm:$0xff]
      %v401 = vld [vmem:[%s374 + $0x79] sm:$0xff]
      %v402 = vld [vmem:[%s374 + $0x81] sm:$0xff]
      %v403 = vld [vmem:[%s374 + $0x91] sm:$0xff]
      %v404 = vld [vmem:[%s374 + $0x99] sm:$0xff]
      %v405 = vld [vmem:[%s374 + $0xa9] sm:$0xff]
      %v406 = vld [vmem:[%s374 + $0xb1] sm:$0xff]
      %v407 = vld [vmem:[%s374 + $0x2] sm:$0xff]
      %v408 = vld [vmem:[%s374 + $0xa] sm:$0xff]
      %v409 = vld [vmem:[%s374 + $0x1a] sm:$0xff]
      %v410 = vld [vmem:[%s374 + $0x22] sm:$0xff]
      %v411 = vld [vmem:[%s374 + $0x32] sm:$0xff]
      %v412 = vld [vmem:[%s374 + $0x3a] sm:$0xff]
      %v413 = vld [vmem:[%s374 + $0x4a] sm:$0xff]
      %v414 = vld [vmem:[%s374 + $0x52] sm:$0xff]
      %v415 = vld [vmem:[%s374 + $0x62] sm:$0xff]
      %v416 = vld [vmem:[%s374 + $0x6a] sm:$0xff]
      %v417 = vld [vmem:[%s374 + $0x7a] sm:$0xff]
      %v418 = vld [vmem:[%s374 + $0x82] sm:$0xff]
      %v419 = vld [vmem:[%s374 + $0x92] sm:$0xff]
      %v420 = vld [vmem:[%s374 + $0x9a] sm:$0xff]
      %v421 = vld [vmem:[%s374 + $0xaa] sm:$0xff]
      %v422 = vld [vmem:[%s374 + $0xb2] sm:$0xff]
      %s423 = sadd.s32 %s372, 1
      %s424 = smul.u32 %s423, 24
      %s425 = scalar_lea.vmem [#allocation2], %s424
      %v426 = vld [vmem:[%s425] sm:$0xff]
      %v427 = vld [vmem:[%s425 + $0x8] sm:$0xff]
      %v428 = vld [vmem:[%s425 + $0x18] sm:$0xff]
      %v429 = vld [vmem:[%s425 + $0x20] sm:$0xff]
      %v430 = vld [vmem:[%s425 + $0x30] sm:$0xff]
      %v431 = vld [vmem:[%s425 + $0x38] sm:$0xff]
      %v432 = vld [vmem:[%s425 + $0x48] sm:$0xff]
      %v433 = vld [vmem:[%s425 + $0x50] sm:$0xff]
      %v434 = vld [vmem:[%s425 + $0x60] sm:$0xff]
      %v435 = vld [vmem:[%s425 + $0x68] sm:$0xff]
      %v436 = vld [vmem:[%s425 + $0x78] sm:$0xff]
      %v437 = vld [vmem:[%s425 + $0x80] sm:$0xff]
      %v438 = vld [vmem:[%s425 + $0x90] sm:$0xff]
      %v439 = vld [vmem:[%s425 + $0x98] sm:$0xff]
      %v440 = vld [vmem:[%s425 + $0xa8] sm:$0xff]
      %v441 = vld [vmem:[%s425 + $0xb0] sm:$0xff]
      %v442 = vld [vmem:[%s425 + $0x1] sm:$0xff]
      %v443 = vld [vmem:[%s425 + $0x9] sm:$0xff]
      %v444 = vld [vmem:[%s425 + $0x19] sm:$0xff]
      %v445 = vld [vmem:[%s425 + $0x21] sm:$0xff]
      %v446 = vld [vmem:[%s425 + $0x31] sm:$0xff]
      %v447 = vld [vmem:[%s425 + $0x39] sm:$0xff]
      %v448 = vld [vmem:[%s425 + $0x49] sm:$0xff]
      %v449 = vld [vmem:[%s425 + $0x51] sm:$0xff]
      %v450 = vld [vmem:[%s425 + $0x61] sm:$0xff]
      %v451 = vld [vmem:[%s425 + $0x69] sm:$0xff]
      %v452 = vld [vmem:[%s425 + $0x79] sm:$0xff]
      %v453 = vld [vmem:[%s425 + $0x81] sm:$0xff]
      %v454 = vld [vmem:[%s425 + $0x91] sm:$0xff]
      %v455 = vld [vmem:[%s425 + $0x99] sm:$0xff]
      %v456 = vld [vmem:[%s425 + $0xa9] sm:$0xff]
      %v457 = vld [vmem:[%s425 + $0xb1] sm:$0xff]
      %v458 = vld [vmem:[%s425 + $0x2] sm:$0xff]
      %v459 = vld [vmem:[%s425 + $0xa] sm:$0xff]
      %v460 = vld [vmem:[%s425 + $0x1a] sm:$0xff]
      %v461 = vld [vmem:[%s425 + $0x22] sm:$0xff]
      %v462 = vld [vmem:[%s425 + $0x32] sm:$0xff]
      %v463 = vld [vmem:[%s425 + $0x3a] sm:$0xff]
      %v464 = vld [vmem:[%s425 + $0x4a] sm:$0xff]
      %v465 = vld [vmem:[%s425 + $0x52] sm:$0xff]
      %v466 = vld [vmem:[%s425 + $0x62] sm:$0xff]
      %v467 = vld [vmem:[%s425 + $0x6a] sm:$0xff]
      %v468 = vld [vmem:[%s425 + $0x7a] sm:$0xff]
      %v469 = vld [vmem:[%s425 + $0x82] sm:$0xff]
      %v470 = vld [vmem:[%s425 + $0x92] sm:$0xff]
      %v471 = vld [vmem:[%s425 + $0x9a] sm:$0xff]
      %v472 = vld [vmem:[%s425 + $0xaa] sm:$0xff]
      %v473 = vld [vmem:[%s425 + $0xb2] sm:$0xff]
      %s474 = sadd.s32 %s372, 2
      %s475 = smul.u32 %s474, 24
      %s476 = scalar_lea.vmem [#allocation2], %s475
      %v477 = vld [vmem:[%s476] sm:$0xff]
      %v478 = vld [vmem:[%s476 + $0x8] sm:$0xff]
      %v479 = vld [vmem:[%s476 + $0x18] sm:$0xff]
      %v480 = vld [vmem:[%s476 + $0x20] sm:$0xff]
      %v481 = vld [vmem:[%s476 + $0x30] sm:$0xff]
      %v482 = vld [vmem:[%s476 + $0x38] sm:$0xff]
      %v483 = vld [vmem:[%s476 + $0x48] sm:$0xff]
      %v484 = vld [vmem:[%s476 + $0x50] sm:$0xff]
      %v485 = vld [vmem:[%s476 + $0x60] sm:$0xff]
      %v486 = vld [vmem:[%s476 + $0x68] sm:$0xff]
      %v487 = vld [vmem:[%s476 + $0x78] sm:$0xff]
      %v488 = vld [vmem:[%s476 + $0x80] sm:$0xff]
      %v489 = vld [vmem:[%s476 + $0x90] sm:$0xff]
      %v490 = vld [vmem:[%s476 + $0x98] sm:$0xff]
      %v491 = vld [vmem:[%s476 + $0xa8] sm:$0xff]
      %v492 = vld [vmem:[%s476 + $0xb0] sm:$0xff]
      %v493 = vld [vmem:[%s476 + $0x1] sm:$0xff]
      %v494 = vld [vmem:[%s476 + $0x9] sm:$0xff]
      %v495 = vld [vmem:[%s476 + $0x19] sm:$0xff]
      %v496 = vld [vmem:[%s476 + $0x21] sm:$0xff]
      %v497 = vld [vmem:[%s476 + $0x31] sm:$0xff]
      %v498 = vld [vmem:[%s476 + $0x39] sm:$0xff]
      %v499 = vld [vmem:[%s476 + $0x49] sm:$0xff]
      %v500 = vld [vmem:[%s476 + $0x51] sm:$0xff]
      %v501 = vld [vmem:[%s476 + $0x61] sm:$0xff]
      %v502 = vld [vmem:[%s476 + $0x69] sm:$0xff]
      %v503 = vld [vmem:[%s476 + $0x79] sm:$0xff]
      %v504 = vld [vmem:[%s476 + $0x81] sm:$0xff]
      %v505 = vld [vmem:[%s476 + $0x91] sm:$0xff]
      %v506 = vld [vmem:[%s476 + $0x99] sm:$0xff]
      %v507 = vld [vmem:[%s476 + $0xa9] sm:$0xff]
      %v508 = vld [vmem:[%s476 + $0xb1] sm:$0xff]
      %v509 = vld [vmem:[%s476 + $0x2] sm:$0xff]
      %v510 = vld [vmem:[%s476 + $0xa] sm:$0xff]
      %v511 = vld [vmem:[%s476 + $0x1a] sm:$0xff]
      %v512 = vld [vmem:[%s476 + $0x22] sm:$0xff]
      %v513 = vld [vmem:[%s476 + $0x32] sm:$0xff]
      %v514 = vld [vmem:[%s476 + $0x3a] sm:$0xff]
      %v515 = vld [vmem:[%s476 + $0x4a] sm:$0xff]
      %v516 = vld [vmem:[%s476 + $0x52] sm:$0xff]
      %v517 = vld [vmem:[%s476 + $0x62] sm:$0xff]
      %v518 = vld [vmem:[%s476 + $0x6a] sm:$0xff]
      %v519 = vld [vmem:[%s476 + $0x7a] sm:$0xff]
      %v520 = vld [vmem:[%s476 + $0x82] sm:$0xff]
      %v521 = vld [vmem:[%s476 + $0x92] sm:$0xff]
      %v522 = vld [vmem:[%s476 + $0x9a] sm:$0xff]
      %v523 = vld [vmem:[%s476 + $0xaa] sm:$0xff]
      %v524 = vld [vmem:[%s476 + $0xb2] sm:$0xff]
      %541 = vrot.lane.b32.xlu0 %v391, 4
      %v542 = vpop.permute.xlu0 %541
      %543 = vrot.lane.b32.xlu0 %v392, 4
      %v544 = vpop.permute.xlu0 %543
      %545 = vrot.lane.b32.xlu0 %v393, 4
      %v546 = vpop.permute.xlu0 %545
      %547 = vrot.lane.b32.xlu0 %v394, 4
      %v548 = vpop.permute.xlu0 %547
      %549 = vrot.lane.b32.xlu0 %v395, 4
      %v550 = vpop.permute.xlu0 %549
      %551 = vrot.lane.b32.xlu0 %v396, 4
      %v552 = vpop.permute.xlu0 %551
      %553 = vrot.lane.b32.xlu0 %v397, 4
      %v554 = vpop.permute.xlu0 %553
      %555 = vrot.lane.b32.xlu0 %v398, 4
      %v556 = vpop.permute.xlu0 %555
      %557 = vrot.lane.b32.xlu0 %v399, 4
      %v558 = vpop.permute.xlu0 %557
      %559 = vrot.lane.b32.xlu0 %v400, 4
      %v560 = vpop.permute.xlu0 %559
      %561 = vrot.lane.b32.xlu0 %v401, 4
      %v562 = vpop.permute.xlu0 %561
      %563 = vrot.lane.b32.xlu0 %v402, 4
      %v564 = vpop.permute.xlu0 %563
      %565 = vrot.lane.b32.xlu0 %v403, 4
      %v566 = vpop.permute.xlu0 %565
      %567 = vrot.lane.b32.xlu0 %v404, 4
      %v568 = vpop.permute.xlu0 %567
      %569 = vrot.lane.b32.xlu0 %v405, 4
      %v570 = vpop.permute.xlu0 %569
      %571 = vrot.lane.b32.xlu0 %v406, 4
      %v572 = vpop.permute.xlu0 %571
      %605 = vrot.lane.b32.xlu0 %v407, 8
      %v606 = vpop.permute.xlu0 %605
      %607 = vrot.lane.b32.xlu0 %v408, 8
      %v608 = vpop.permute.xlu0 %607
      %609 = vrot.lane.b32.xlu0 %v409, 8
      %v610 = vpop.permute.xlu0 %609
      %611 = vrot.lane.b32.xlu0 %v410, 8
      %v612 = vpop.permute.xlu0 %611
      %613 = vrot.lane.b32.xlu0 %v411, 8
      %v614 = vpop.permute.xlu0 %613
      %615 = vrot.lane.b32.xlu0 %v412, 8
      %v616 = vpop.permute.xlu0 %615
      %617 = vrot.lane.b32.xlu0 %v413, 8
      %v618 = vpop.permute.xlu0 %617
      %619 = vrot.lane.b32.xlu0 %v414, 8
      %v620 = vpop.permute.xlu0 %619
      %621 = vrot.lane.b32.xlu0 %v415, 8
      %v622 = vpop.permute.xlu0 %621
      %623 = vrot.lane.b32.xlu0 %v416, 8
      %v624 = vpop.permute.xlu0 %623
      %625 = vrot.lane.b32.xlu0 %v417, 8
      %v626 = vpop.permute.xlu0 %625
      %627 = vrot.lane.b32.xlu0 %v418, 8
      %v628 = vpop.permute.xlu0 %627
      %629 = vrot.lane.b32.xlu0 %v419, 8
      %v630 = vpop.permute.xlu0 %629
      %631 = vrot.lane.b32.xlu0 %v420, 8
      %v632 = vpop.permute.xlu0 %631
      %633 = vrot.lane.b32.xlu0 %v421, 8
      %v634 = vpop.permute.xlu0 %633
      %635 = vrot.lane.b32.xlu0 %v422, 8
      %v636 = vpop.permute.xlu0 %635
      %669 = vrot.lane.b32.xlu0 %v426, 12
      %v670 = vpop.permute.xlu0 %669
      %671 = vrot.lane.b32.xlu0 %v427, 12
      %v672 = vpop.permute.xlu0 %671
      %673 = vrot.lane.b32.xlu0 %v428, 12
      %v674 = vpop.permute.xlu0 %673
      %675 = vrot.lane.b32.xlu0 %v429, 12
      %v676 = vpop.permute.xlu0 %675
      %677 = vrot.lane.b32.xlu0 %v430, 12
      %v678 = vpop.permute.xlu0 %677
      %679 = vrot.lane.b32.xlu0 %v431, 12
      %v680 = vpop.permute.xlu0 %679
      %681 = vrot.lane.b32.xlu0 %v432, 12
      %v682 = vpop.permute.xlu0 %681
      %683 = vrot.lane.b32.xlu0 %v433, 12
      %v684 = vpop.permute.xlu0 %683
      %685 = vrot.lane.b32.xlu0 %v434, 12
      %v686 = vpop.permute.xlu0 %685
      %687 = vrot.lane.b32.xlu0 %v435, 12
      %v688 = vpop.permute.xlu0 %687
      %689 = vrot.lane.b32.xlu0 %v436, 12
      %v690 = vpop.permute.xlu0 %689
      %691 = vrot.lane.b32.xlu0 %v437, 12
      %v692 = vpop.permute.xlu0 %691
      %693 = vrot.lane.b32.xlu0 %v438, 12
      %v694 = vpop.permute.xlu0 %693
      %695 = vrot.lane.b32.xlu0 %v439, 12
      %v696 = vpop.permute.xlu0 %695
      %697 = vrot.lane.b32.xlu0 %v440, 12
      %v698 = vpop.permute.xlu0 %697
      %699 = vrot.lane.b32.xlu0 %v441, 12
      %v700 = vpop.permute.xlu0 %699
      %733 = vrot.lane.b32.xlu0 %v442, 16
      %v734 = vpop.permute.xlu0 %733
      %735 = vrot.lane.b32.xlu0 %v443, 16
      %v736 = vpop.permute.xlu0 %735
      %737 = vrot.lane.b32.xlu0 %v444, 16
      %v738 = vpop.permute.xlu0 %737
      %739 = vrot.lane.b32.xlu0 %v445, 16
      %v740 = vpop.permute.xlu0 %739
      %741 = vrot.lane.b32.xlu0 %v446, 16
      %v742 = vpop.permute.xlu0 %741
      %743 = vrot.lane.b32.xlu0 %v447, 16
      %v744 = vpop.permute.xlu0 %743
      %745 = vrot.lane.b32.xlu0 %v448, 16
      %v746 = vpop.permute.xlu0 %745
      %747 = vrot.lane.b32.xlu0 %v449, 16
      %v748 = vpop.permute.xlu0 %747
      %749 = vrot.lane.b32.xlu0 %v450, 16
      %v750 = vpop.permute.xlu0 %749
      %751 = vrot.lane.b32.xlu0 %v451, 16
      %v752 = vpop.permute.xlu0 %751
      %753 = vrot.lane.b32.xlu0 %v452, 16
      %v754 = vpop.permute.xlu0 %753
      %755 = vrot.lane.b32.xlu0 %v453, 16
      %v756 = vpop.permute.xlu0 %755
      %757 = vrot.lane.b32.xlu0 %v454, 16
      %v758 = vpop.permute.xlu0 %757
      %759 = vrot.lane.b32.xlu0 %v455, 16
      %v760 = vpop.permute.xlu0 %759
      %761 = vrot.lane.b32.xlu0 %v456, 16
      %v762 = vpop.permute.xlu0 %761
      %763 = vrot.lane.b32.xlu0 %v457, 16
      %v764 = vpop.permute.xlu0 %763
      %797 = vrot.lane.b32.xlu0 %v458, 20
      %v798 = vpop.permute.xlu0 %797
      %799 = vrot.lane.b32.xlu0 %v459, 20
      %v800 = vpop.permute.xlu0 %799
      %801 = vrot.lane.b32.xlu0 %v460, 20
      %v802 = vpop.permute.xlu0 %801
      %803 = vrot.lane.b32.xlu0 %v461, 20
      %v804 = vpop.permute.xlu0 %803
      %805 = vrot.lane.b32.xlu0 %v462, 20
      %v806 = vpop.permute.xlu0 %805
      %807 = vrot.lane.b32.xlu0 %v463, 20
      %v808 = vpop.permute.xlu0 %807
      %809 = vrot.lane.b32.xlu0 %v464, 20
      %v810 = vpop.permute.xlu0 %809
      %811 = vrot.lane.b32.xlu0 %v465, 20
      %v812 = vpop.permute.xlu0 %811
      %813 = vrot.lane.b32.xlu0 %v466, 20
      %v814 = vpop.permute.xlu0 %813
      %815 = vrot.lane.b32.xlu0 %v467, 20
      %v816 = vpop.permute.xlu0 %815
      %817 = vrot.lane.b32.xlu0 %v468, 20
      %v818 = vpop.permute.xlu0 %817
      %819 = vrot.lane.b32.xlu0 %v469, 20
      %v820 = vpop.permute.xlu0 %819
      %821 = vrot.lane.b32.xlu0 %v470, 20
      %v822 = vpop.permute.xlu0 %821
      %823 = vrot.lane.b32.xlu0 %v471, 20
      %v824 = vpop.permute.xlu0 %823
      %825 = vrot.lane.b32.xlu0 %v472, 20
      %v826 = vpop.permute.xlu0 %825
      %827 = vrot.lane.b32.xlu0 %v473, 20
      %v828 = vpop.permute.xlu0 %827
      %861 = vrot.lane.b32.xlu0 %v477, 24
      %v862 = vpop.permute.xlu0 %861
      %863 = vrot.lane.b32.xlu0 %v478, 24
      %v864 = vpop.permute.xlu0 %863
      %865 = vrot.lane.b32.xlu0 %v479, 24
      %v866 = vpop.permute.xlu0 %865
      %867 = vrot.lane.b32.xlu0 %v480, 24
      %v868 = vpop.permute.xlu0 %867
      %869 = vrot.lane.b32.xlu0 %v481, 24
      %v870 = vpop.permute.xlu0 %869
      %871 = vrot.lane.b32.xlu0 %v482, 24
      %v872 = vpop.permute.xlu0 %871
      %873 = vrot.lane.b32.xlu0 %v483, 24
      %v874 = vpop.permute.xlu0 %873
      %875 = vrot.lane.b32.xlu0 %v484, 24
      %v876 = vpop.permute.xlu0 %875
      %877 = vrot.lane.b32.xlu0 %v485, 24
      %v878 = vpop.permute.xlu0 %877
      %879 = vrot.lane.b32.xlu0 %v486, 24
      %v880 = vpop.permute.xlu0 %879
      %881 = vrot.lane.b32.xlu0 %v487, 24
      %v882 = vpop.permute.xlu0 %881
      %883 = vrot.lane.b32.xlu0 %v488, 24
      %v884 = vpop.permute.xlu0 %883
      %885 = vrot.lane.b32.xlu0 %v489, 24
      %v886 = vpop.permute.xlu0 %885
      %887 = vrot.lane.b32.xlu0 %v490, 24
      %v888 = vpop.permute.xlu0 %887
      %889 = vrot.lane.b32.xlu0 %v491, 24
      %v890 = vpop.permute.xlu0 %889
      %891 = vrot.lane.b32.xlu0 %v492, 24
      %v892 = vpop.permute.xlu0 %891
      %925 = vrot.lane.b32.xlu0 %v493, 28
      %v926 = vpop.permute.xlu0 %925
      %927 = vrot.lane.b32.xlu0 %v494, 28
      %v928 = vpop.permute.xlu0 %927
      %929 = vrot.lane.b32.xlu0 %v495, 28
      %v930 = vpop.permute.xlu0 %929
      %931 = vrot.lane.b32.xlu0 %v496, 28
      %v932 = vpop.permute.xlu0 %931
      %933 = vrot.lane.b32.xlu0 %v497, 28
      %v934 = vpop.permute.xlu0 %933
      %935 = vrot.lane.b32.xlu0 %v498, 28
      %v936 = vpop.permute.xlu0 %935
      %937 = vrot.lane.b32.xlu0 %v499, 28
      %v938 = vpop.permute.xlu0 %937
      %939 = vrot.lane.b32.xlu0 %v500, 28
      %v940 = vpop.permute.xlu0 %939
      %941 = vrot.lane.b32.xlu0 %v501, 28
      %v942 = vpop.permute.xlu0 %941
      %943 = vrot.lane.b32.xlu0 %v502, 28
      %v944 = vpop.permute.xlu0 %943
      %945 = vrot.lane.b32.xlu0 %v503, 28
      %v946 = vpop.permute.xlu0 %945
      %947 = vrot.lane.b32.xlu0 %v504, 28
      %v948 = vpop.permute.xlu0 %947
      %949 = vrot.lane.b32.xlu0 %v505, 28
      %v950 = vpop.permute.xlu0 %949
      %951 = vrot.lane.b32.xlu0 %v506, 28
      %v952 = vpop.permute.xlu0 %951
      %953 = vrot.lane.b32.xlu0 %v507, 28
      %v954 = vpop.permute.xlu0 %953
      %955 = vrot.lane.b32.xlu0 %v508, 28
      %v956 = vpop.permute.xlu0 %955
      %989 = vrot.lane.b32.xlu0 %v509, 32
      %v990 = vpop.permute.xlu0 %989
      %991 = vrot.lane.b32.xlu0 %v510, 32
      %v992 = vpop.permute.xlu0 %991
      %993 = vrot.lane.b32.xlu0 %v511, 32
      %v994 = vpop.permute.xlu0 %993
      %995 = vrot.lane.b32.xlu0 %v512, 32
      %v996 = vpop.permute.xlu0 %995
      %997 = vrot.lane.b32.xlu0 %v513, 32
      %v998 = vpop.permute.xlu0 %997
      %999 = vrot.lane.b32.xlu0 %v514, 32
      %v1000 = vpop.permute.xlu0 %999
      %1001 = vrot.lane.b32.xlu0 %v515, 32
      %v1002 = vpop.permute.xlu0 %1001
      %1003 = vrot.lane.b32.xlu0 %v516, 32
      %v1004 = vpop.permute.xlu0 %1003
      %1005 = vrot.lane.b32.xlu0 %v517, 32
      %v1006 = vpop.permute.xlu0 %1005
      %1007 = vrot.lane.b32.xlu0 %v518, 32
      %v1008 = vpop.permute.xlu0 %1007
      %1009 = vrot.lane.b32.xlu0 %v519, 32
      %v1010 = vpop.permute.xlu0 %1009
      %1011 = vrot.lane.b32.xlu0 %v520, 32
      %v1012 = vpop.permute.xlu0 %1011
      %1013 = vrot.lane.b32.xlu0 %v521, 32
      %v1014 = vpop.permute.xlu0 %1013
      %1015 = vrot.lane.b32.xlu0 %v522, 32
      %v1016 = vpop.permute.xlu0 %1015
      %1017 = vrot.lane.b32.xlu0 %v523, 32
      %v1018 = vpop.permute.xlu0 %1017
      %1019 = vrot.lane.b32.xlu0 %v524, 32
      %v1020 = vpop.permute.xlu0 %1019
      %vm1037 = vcmask 31744
      %v1038 = vsel %vm1037, %v375, %v542
      %v1039 = vsel %vm1037, %v376, %v544
      %v1040 = vsel %vm1037, %v377, %v546
      %v1041 = vsel %vm1037, %v378, %v548
      %v1042 = vsel %vm1037, %v379, %v550
      %v1043 = vsel %vm1037, %v380, %v552
      %v1044 = vsel %vm1037, %v381, %v554
      %v1045 = vsel %vm1037, %v382, %v556
      %v1046 = vsel %vm1037, %v383, %v558
      %v1047 = vsel %vm1037, %v384, %v560
      %v1048 = vsel %vm1037, %v385, %v562
      %v1049 = vsel %vm1037, %v386, %v564
      %v1050 = vsel %vm1037, %v387, %v566
      %v1051 = vsel %vm1037, %v388, %v568
      %v1052 = vsel %vm1037, %v389, %v570
      %v1053 = vsel %vm1037, %v390, %v572
      %vm1054 = vcmask 64512
      %v1055 = vsel %vm1054, %v1038, %v606
      %v1056 = vsel %vm1054, %v1039, %v608
      %v1057 = vsel %vm1054, %v1040, %v610
      %v1058 = vsel %vm1054, %v1041, %v612
      %v1059 = vsel %vm1054, %v1042, %v614
      %v1060 = vsel %vm1054, %v1043, %v616
      %v1061 = vsel %vm1054, %v1044, %v618
      %v1062 = vsel %vm1054, %v1045, %v620
      %v1063 = vsel %vm1054, %v1046, %v622
      %v1064 = vsel %vm1054, %v1047, %v624
      %v1065 = vsel %vm1054, %v1048, %v626
      %v1066 = vsel %vm1054, %v1049, %v628
      %v1067 = vsel %vm1054, %v1050, %v630
      %v1068 = vsel %vm1054, %v1051, %v632
      %v1069 = vsel %vm1054, %v1052, %v634
      %v1070 = vsel %vm1054, %v1053, %v636
      %vm1071 = vcmask 97280
      %v1072 = vsel %vm1071, %v1055, %v670
      %v1073 = vsel %vm1071, %v1056, %v672
      %v1074 = vsel %vm1071, %v1057, %v674
      %v1075 = vsel %vm1071, %v1058, %v676
      %v1076 = vsel %vm1071, %v1059, %v678
      %v1077 = vsel %vm1071, %v1060, %v680
      %v1078 = vsel %vm1071, %v1061, %v682
      %v1079 = vsel %vm1071, %v1062, %v684
      %v1080 = vsel %vm1071, %v1063, %v686
      %v1081 = vsel %vm1071, %v1064, %v688
      %v1082 = vsel %vm1071, %v1065, %v690
      %v1083 = vsel %vm1071, %v1066, %v692
      %v1084 = vsel %vm1071, %v1067, %v694
      %v1085 = vsel %vm1071, %v1068, %v696
      %v1086 = vsel %vm1071, %v1069, %v698
      %v1087 = vsel %vm1071, %v1070, %v700
      %vm1088 = vcmask 130048
      %v1089 = vsel %vm1088, %v1072, %v734
      %v1090 = vsel %vm1088, %v1073, %v736
      %v1091 = vsel %vm1088, %v1074, %v738
      %v1092 = vsel %vm1088, %v1075, %v740
      %v1093 = vsel %vm1088, %v1076, %v742
      %v1094 = vsel %vm1088, %v1077, %v744
      %v1095 = vsel %vm1088, %v1078, %v746
      %v1096 = vsel %vm1088, %v1079, %v748
      %v1097 = vsel %vm1088, %v1080, %v750
      %v1098 = vsel %vm1088, %v1081, %v752
      %v1099 = vsel %vm1088, %v1082, %v754
      %v1100 = vsel %vm1088, %v1083, %v756
      %v1101 = vsel %vm1088, %v1084, %v758
      %v1102 = vsel %vm1088, %v1085, %v760
      %v1103 = vsel %vm1088, %v1086, %v762
      %v1104 = vsel %vm1088, %v1087, %v764
      %vm1105 = vcmask 162816
      %v1106 = vsel %vm1105, %v1089, %v798
      %v1107 = vsel %vm1105, %v1090, %v800
      %v1108 = vsel %vm1105, %v1091, %v802
      %v1109 = vsel %vm1105, %v1092, %v804
      %v1110 = vsel %vm1105, %v1093, %v806
      %v1111 = vsel %vm1105, %v1094, %v808
      %v1112 = vsel %vm1105, %v1095, %v810
      %v1113 = vsel %vm1105, %v1096, %v812
      %v1114 = vsel %vm1105, %v1097, %v814
      %v1115 = vsel %vm1105, %v1098, %v816
      %v1116 = vsel %vm1105, %v1099, %v818
      %v1117 = vsel %vm1105, %v1100, %v820
      %v1118 = vsel %vm1105, %v1101, %v822
      %v1119 = vsel %vm1105, %v1102, %v824
      %v1120 = vsel %vm1105, %v1103, %v826
      %v1121 = vsel %vm1105, %v1104, %v828
      %vm1122 = vcmask 195584
      %v1123 = vsel %vm1122, %v1106, %v862
      %v1124 = vsel %vm1122, %v1107, %v864
      %v1125 = vsel %vm1122, %v1108, %v866
      %v1126 = vsel %vm1122, %v1109, %v868
      %v1127 = vsel %vm1122, %v1110, %v870
      %v1128 = vsel %vm1122, %v1111, %v872
      %v1129 = vsel %vm1122, %v1112, %v874
      %v1130 = vsel %vm1122, %v1113, %v876
      %v1131 = vsel %vm1122, %v1114, %v878
      %v1132 = vsel %vm1122, %v1115, %v880
      %v1133 = vsel %vm1122, %v1116, %v882
      %v1134 = vsel %vm1122, %v1117, %v884
      %v1135 = vsel %vm1122, %v1118, %v886
      %v1136 = vsel %vm1122, %v1119, %v888
      %v1137 = vsel %vm1122, %v1120, %v890
      %v1138 = vsel %vm1122, %v1121, %v892
      %vm1139 = vcmask 228352
      %v1140 = vsel %vm1139, %v1123, %v926
      %v1141 = vsel %vm1139, %v1124, %v928
      %v1142 = vsel %vm1139, %v1125, %v930
      %v1143 = vsel %vm1139, %v1126, %v932
      %v1144 = vsel %vm1139, %v1127, %v934
      %v1145 = vsel %vm1139, %v1128, %v936
      %v1146 = vsel %vm1139, %v1129, %v938
      %v1147 = vsel %vm1139, %v1130, %v940
      %v1148 = vsel %vm1139, %v1131, %v942
      %v1149 = vsel %vm1139, %v1132, %v944
      %v1150 = vsel %vm1139, %v1133, %v946
      %v1151 = vsel %vm1139, %v1134, %v948
      %v1152 = vsel %vm1139, %v1135, %v950
      %v1153 = vsel %vm1139, %v1136, %v952
      %v1154 = vsel %vm1139, %v1137, %v954
      %v1155 = vsel %vm1139, %v1138, %v956
      %vm1156 = vcmask 261120
      %v1157 = vsel %vm1156, %v1140, %v990
      %v1158 = vsel %vm1156, %v1141, %v992
      %v1159 = vsel %vm1156, %v1142, %v994
      %v1160 = vsel %vm1156, %v1143, %v996
      %v1161 = vsel %vm1156, %v1144, %v998
      %v1162 = vsel %vm1156, %v1145, %v1000
      %v1163 = vsel %vm1156, %v1146, %v1002
      %v1164 = vsel %vm1156, %v1147, %v1004
      %v1165 = vsel %vm1156, %v1148, %v1006
      %v1166 = vsel %vm1156, %v1149, %v1008
      %v1167 = vsel %vm1156, %v1150, %v1010
      %v1168 = vsel %vm1156, %v1151, %v1012
      %v1169 = vsel %vm1156, %v1152, %v1014
      %v1170 = vsel %vm1156, %v1153, %v1016
      %v1171 = vsel %vm1156, %v1154, %v1018
      %v1172 = vsel %vm1156, %v1155, %v1020
      %vm1173 = vcmask 293888
      %v1174 = vsel %vm1173, %v1157, 0.0
      %v1175 = vsel %vm1173, %v1158, 0.0
      %v1176 = vsel %vm1173, %v1159, 0.0
      %v1177 = vsel %vm1173, %v1160, 0.0
      %v1178 = vsel %vm1173, %v1161, 0.0
      %v1179 = vsel %vm1173, %v1162, 0.0
      %v1180 = vsel %vm1173, %v1163, 0.0
      %v1181 = vsel %vm1173, %v1164, 0.0
      %v1182 = vsel %vm1173, %v1165, 0.0
      %v1183 = vsel %vm1173, %v1166, 0.0
      %v1184 = vsel %vm1173, %v1167, 0.0
      %v1185 = vsel %vm1173, %v1168, 0.0
      %v1186 = vsel %vm1173, %v1169, 0.0
      %v1187 = vsel %vm1173, %v1170, 0.0
      %v1188 = vsel %vm1173, %v1171, 0.0
      %v1189 = vsel %vm1173, %v1172, 0.0
      %v1190 = vpack.c.bf16 %v1175, %v1174
      %v1191 = vpack.c.bf16 %v1177, %v1176
      %v1192 = vpack.c.bf16 %v1179, %v1178
      %v1193 = vpack.c.bf16 %v1181, %v1180
      %v1194 = vpack.c.bf16 %v1183, %v1182
      %v1195 = vpack.c.bf16 %v1185, %v1184
      %v1196 = vpack.c.bf16 %v1187, %v1186
      %v1197 = vpack.c.bf16 %v1189, %v1188
      %v1198 = vld [vmem:[%s3] sm:$0xf]
      %v1199 = vld [vmem:[%s3 + $0x4] sm:$0xf]
      %v1200 = vld [vmem:[%s3 + $0x8] sm:$0xf]
      %v1201 = vld [vmem:[%s3 + $0xc] sm:$0xf]
      %v1202 = vld [vmem:[%s3 + $0x10] sm:$0xf]
      %v1203 = vld [vmem:[%s3 + $0x14] sm:$0xf]
      %v1204 = vld [vmem:[%s3 + $0x18] sm:$0xf]
      %v1205 = vld [vmem:[%s3 + $0x1c] sm:$0xf]
      %v1206 = vld [vmem:[%s3 + $0x20] sm:$0xf]
      %v1207 = vld [vmem:[%s3 + $0x24] sm:$0xf]
      %v1208 = vld [vmem:[%s3 + $0x28] sm:$0xf]
      %v1209 = vld [vmem:[%s3 + $0x2c] sm:$0xf]
      %v1210 = vld [vmem:[%s3 + $0x30] sm:$0xf]
      %v1211 = vld [vmem:[%s3 + $0x34] sm:$0xf]
      %v1212 = vld [vmem:[%s3 + $0x38] sm:$0xf]
      %v1213 = vld [vmem:[%s3 + $0x3c] sm:$0xf]
      %v1230 = vunpack.c.l.b16 %v1198
      %v1231 = vunpack.c.l.b16 %v1199
      %v1232 = vunpack.c.l.b16 %v1200
      %v1233 = vunpack.c.l.b16 %v1201
      %v1234 = vunpack.c.l.b16 %v1202
      %v1235 = vunpack.c.l.b16 %v1203
      %v1236 = vunpack.c.l.b16 %v1204
      %v1237 = vunpack.c.l.b16 %v1205
      %v1238 = vunpack.c.l.b16 %v1206
      %v1239 = vunpack.c.l.b16 %v1207
      %v1240 = vunpack.c.l.b16 %v1208
      %v1241 = vunpack.c.l.b16 %v1209
      %v1242 = vunpack.c.l.b16 %v1210
      %v1243 = vunpack.c.l.b16 %v1211
      %v1244 = vunpack.c.l.b16 %v1212
      %v1245 = vunpack.c.l.b16 %v1213
      %v1246 = vpack.c.b16 %v1231, %v1230
      %v1247 = vpack.c.b16 %v1233, %v1232
      %v1248 = vpack.c.b16 %v1235, %v1234
      %v1249 = vpack.c.b16 %v1237, %v1236
      %v1250 = vpack.c.b16 %v1239, %v1238
      %v1251 = vpack.c.b16 %v1241, %v1240
      %v1252 = vpack.c.b16 %v1243, %v1242
      %v1253 = vpack.c.b16 %v1245, %v1244
      %1262 = vmatpush.bf16.msra.mxu0 %v1253
      %1263 = vmatpush.bf16.msra.mxu0 %v1252
      %1264 = vmatpush.bf16.msra.mxu0 %v1251
      %1265 = vmatpush.bf16.msra.mxu0 %v1250
      %1266 = vmatpush.bf16.msra.mxu0 %v1249
      %1267 = vmatpush.bf16.msra.mxu0 %v1248
      %1268 = vmatpush.bf16.msra.mxu0 %v1247
      %1269 = vmatpush.bf16.msra.mxu0 %v1246
      %1270 = vmatmul.bf16.gmra.mxu0 %v1190
      %v1271 = vpop.f32.mrf.mxu0
      %v1272 = vadd.f32 0.0, %v1271
      %v1273 = vpop.f32.mrf.mxu0
      %v1274 = vadd.f32 0.0, %v1273
      %1275 = vmatmul.bf16.gmra.mxu0 %v1191
      %v1276 = vpop.f32.mrf.mxu0
      %v1277 = vadd.f32 0.0, %v1276
      %v1278 = vpop.f32.mrf.mxu0
      %v1279 = vadd.f32 0.0, %v1278
      %1280 = vmatmul.bf16.gmra.mxu0 %v1192
      %v1281 = vpop.f32.mrf.mxu0
      %v1282 = vadd.f32 0.0, %v1281
      %v1283 = vpop.f32.mrf.mxu0
      %v1284 = vadd.f32 0.0, %v1283
      %1285 = vmatmul.bf16.gmra.mxu0 %v1193
      %v1286 = vpop.f32.mrf.mxu0
      %v1287 = vadd.f32 0.0, %v1286
      %v1288 = vpop.f32.mrf.mxu0
      %v1289 = vadd.f32 0.0, %v1288
      %1290 = vmatmul.bf16.gmra.mxu0 %v1194
      %v1291 = vpop.f32.mrf.mxu0
      %v1292 = vadd.f32 0.0, %v1291
      %v1293 = vpop.f32.mrf.mxu0
      %v1294 = vadd.f32 0.0, %v1293
      %1295 = vmatmul.bf16.gmra.mxu0 %v1195
      %v1296 = vpop.f32.mrf.mxu0
      %v1297 = vadd.f32 0.0, %v1296
      %v1298 = vpop.f32.mrf.mxu0
      %v1299 = vadd.f32 0.0, %v1298
      %1300 = vmatmul.bf16.gmra.mxu0 %v1196
      %v1301 = vpop.f32.mrf.mxu0
      %v1302 = vadd.f32 0.0, %v1301
      %v1303 = vpop.f32.mrf.mxu0
      %v1304 = vadd.f32 0.0, %v1303
      %1305 = vmatmul.bf16.gmra.mxu0 %v1197
      %v1306 = vpop.f32.mrf.mxu0
      %v1307 = vadd.f32 0.0, %v1306
      %v1308 = vpop.f32.mrf.mxu0
      %v1309 = vadd.f32 0.0, %v1308
      %1310 = vdwg.mxu0
      %v1311 = vsel %vm1054, %v1272, 0.0
      %v1312 = vsel %vm1054, %v1274, 0.0
      %v1313 = vadd.f32 %v1311, %v1312
      %v1314 = vsel %vm1054, %v1277, 0.0
      %v1315 = vadd.f32 %v1313, %v1314
      %v1316 = vsel %vm1054, %v1279, 0.0
      %v1317 = vadd.f32 %v1315, %v1316
      %v1318 = vsel %vm1054, %v1282, 0.0
      %v1319 = vadd.f32 %v1317, %v1318
      %v1320 = vsel %vm1054, %v1284, 0.0
      %v1321 = vadd.f32 %v1319, %v1320
      %v1322 = vsel %vm1054, %v1287, 0.0
      %v1323 = vadd.f32 %v1321, %v1322
      %v1324 = vsel %vm1054, %v1289, 0.0
      %v1325 = vadd.f32 %v1323, %v1324
      %v1326 = vsel %vm1054, %v1292, 0.0
      %v1327 = vadd.f32 %v1325, %v1326
      %v1328 = vsel %vm1054, %v1294, 0.0
      %v1329 = vadd.f32 %v1327, %v1328
      %v1330 = vsel %vm1054, %v1297, 0.0
      %v1331 = vadd.f32 %v1329, %v1330
      %v1332 = vsel %vm1054, %v1299, 0.0
      %v1333 = vadd.f32 %v1331, %v1332
      %v1334 = vsel %vm1054, %v1302, 0.0
      %v1335 = vadd.f32 %v1333, %v1334
      %v1336 = vsel %vm1054, %v1304, 0.0
      %v1337 = vadd.f32 %v1335, %v1336
      %v1338 = vsel %vm1054, %v1307, 0.0
      %v1339 = vadd.f32 %v1337, %v1338
      %v1340 = vsel %vm1054, %v1309, 0.0
      %v1341 = vadd.f32 %v1339, %v1340
      %v1342 = vrot.slane %v1341, 4
      %v1343 = vadd.f32 %v1341, %v1342
      %v1344 = vrot.slane %v1343, 2
      %v1345 = vadd.f32 %v1343, %v1344
      %v1346 = vrot.slane %v1345, 1
      %v1347 = vadd.f32 %v1345, %v1346
      %v1348 = vmul.f32 %v1272, %v1272
      %v1349 = vmul.f32 %v1274, %v1274
      %v1350 = vmul.f32 %v1277, %v1277
      %v1351 = vmul.f32 %v1279, %v1279
      %v1352 = vmul.f32 %v1282, %v1282
      %v1353 = vmul.f32 %v1284, %v1284
      %v1354 = vmul.f32 %v1287, %v1287
      %v1355 = vmul.f32 %v1289, %v1289
      %v1356 = vmul.f32 %v1292, %v1292
      %v1357 = vmul.f32 %v1294, %v1294
      %v1358 = vmul.f32 %v1297, %v1297
      %v1359 = vmul.f32 %v1299, %v1299
      %v1360 = vmul.f32 %v1302, %v1302
      %v1361 = vmul.f32 %v1304, %v1304
      %v1362 = vmul.f32 %v1307, %v1307
      %v1363 = vmul.f32 %v1309, %v1309
      %v1364 = vsel %vm1054, %v1348, 0.0
      %v1365 = vsel %vm1054, %v1349, 0.0
      %v1366 = vadd.f32 %v1364, %v1365
      %v1367 = vsel %vm1054, %v1350, 0.0
      %v1368 = vadd.f32 %v1366, %v1367
      %v1369 = vsel %vm1054, %v1351, 0.0
      %v1370 = vadd.f32 %v1368, %v1369
      %v1371 = vsel %vm1054, %v1352, 0.0
      %v1372 = vadd.f32 %v1370, %v1371
      %v1373 = vsel %vm1054, %v1353, 0.0
      %v1374 = vadd.f32 %v1372, %v1373
      %v1375 = vsel %vm1054, %v1354, 0.0
      %v1376 = vadd.f32 %v1374, %v1375
      %v1377 = vsel %vm1054, %v1355, 0.0
      %v1378 = vadd.f32 %v1376, %v1377
      %v1379 = vsel %vm1054, %v1356, 0.0
      %v1380 = vadd.f32 %v1378, %v1379
      %v1381 = vsel %vm1054, %v1357, 0.0
      %v1382 = vadd.f32 %v1380, %v1381
      %v1383 = vsel %vm1054, %v1358, 0.0
      %v1384 = vadd.f32 %v1382, %v1383
      %v1385 = vsel %vm1054, %v1359, 0.0
      %v1386 = vadd.f32 %v1384, %v1385
      %v1387 = vsel %vm1054, %v1360, 0.0
      %v1388 = vadd.f32 %v1386, %v1387
      %v1389 = vsel %vm1054, %v1361, 0.0
      %v1390 = vadd.f32 %v1388, %v1389
      %v1391 = vsel %vm1054, %v1362, 0.0
      %v1392 = vadd.f32 %v1390, %v1391
      %v1393 = vsel %vm1054, %v1363, 0.0
      %v1394 = vadd.f32 %v1392, %v1393
      %v1395 = vrot.slane %v1394, 4
      %v1396 = vadd.f32 %v1394, %v1395
      %v1397 = vrot.slane %v1396, 2
      %v1398 = vadd.f32 %v1396, %v1397
      %v1399 = vrot.slane %v1398, 1
      %v1400 = vadd.f32 %v1398, %v1399
      %vm1401 = vcmask 1040384
      %v1402 = vsel %vm1401, %v1347, %v1400
      // Predicated region
      $region41: #{double_conv.3} parent=35 // pred_check
        %p1403 = pneg %p261
      $region42: #{double_conv.3} parent=35 // pred_check_branch
        %1405 = sbr.rel (%p1403) target = $region44
      $region43: #{double_conv.3} parent=35 // pred_region
        %vm1406 = vcmask 58368
        %1407 = vst.msk [vmem:[%s260] sm:$0x3] %vm1406, 0.0
      $region44: #{double_conv.3} parent=35 // pred_fallthru
        _
      %v1408 = vld [vmem:[%s260] sm:$0x3]
      %v1409 = vadd.f32 %v1408, %v1402
      %vm1410 = vcmask 58368
      %1411 = vst.msk [vmem:[%s260] sm:$0x3] %vm1410, %v1409
      %v1412 = vpack.c.bf16 %v1272, %v1272
      %v1413 = vpack.c.bf16 %v1274, %v1274
      %v1414 = vpack.c.bf16 %v1277, %v1277
      %v1415 = vpack.c.bf16 %v1279, %v1279
      %v1416 = vpack.c.bf16 %v1282, %v1282
      %v1417 = vpack.c.bf16 %v1284, %v1284
      %v1418 = vpack.c.bf16 %v1287, %v1287
      %v1419 = vpack.c.bf16 %v1289, %v1289
      %v1420 = vpack.c.bf16 %v1292, %v1292
      %v1421 = vpack.c.bf16 %v1294, %v1294
      %v1422 = vpack.c.bf16 %v1297, %v1297
      %v1423 = vpack.c.bf16 %v1299, %v1299
      %v1424 = vpack.c.bf16 %v1302, %v1302
      %v1425 = vpack.c.bf16 %v1304, %v1304
      %v1426 = vpack.c.bf16 %v1307, %v1307
      %v1427 = vpack.c.bf16 %v1309, %v1309
      %vm1428 = vcmask 60416
      %1429 = vst.msk [vmem:[%s255] sm:$0xf] %vm1428, %v1412
      %1430 = vst.msk [vmem:[%s255 + $0x4] sm:$0xf] %vm1428, %v1413
      %1431 = vst.msk [vmem:[%s255 + $0x8] sm:$0xf] %vm1428, %v1414
      %1432 = vst.msk [vmem:[%s255 + $0xc] sm:$0xf] %vm1428, %v1415
      %1433 = vst.msk [vmem:[%s255 + $0x10] sm:$0xf] %vm1428, %v1416
      %1434 = vst.msk [vmem:[%s255 + $0x14] sm:$0xf] %vm1428, %v1417
      %1435 = vst.msk [vmem:[%s255 + $0x18] sm:$0xf] %vm1428, %v1418
      %1436 = vst.msk [vmem:[%s255 + $0x1c] sm:$0xf] %vm1428, %v1419
      %1437 = vst.msk [vmem:[%s255 + $0x20] sm:$0xf] %vm1428, %v1420
      %1438 = vst.msk [vmem:[%s255 + $0x24] sm:$0xf] %vm1428, %v1421
      %1439 = vst.msk [vmem:[%s255 + $0x28] sm:$0xf] %vm1428, %v1422
      %1440 = vst.msk [vmem:[%s255 + $0x2c] sm:$0xf] %vm1428, %v1423
      %1441 = vst.msk [vmem:[%s255 + $0x30] sm:$0xf] %vm1428, %v1424
      %1442 = vst.msk [vmem:[%s255 + $0x34] sm:$0xf] %vm1428, %v1425
      %1443 = vst.msk [vmem:[%s255 + $0x38] sm:$0xf] %vm1428, %v1426
      %1444 = vst.msk [vmem:[%s255 + $0x3c] sm:$0xf] %vm1428, %v1427
      %s1445 = smul.u32 8, %s22
      %p1446 = scmp.lt.s32.totalorder %s21, 1
      %s1447 = scalar_select %p1446, %s21, 1
      %p1448 = scmp.lt.s32.totalorder %s1445, 15
      %s1449 = scalar_select %p1448, %s1445, 15
      %s1450 = smul.addr %s1449, 2
      %s1451 = smul.addr %s1447, 32
      %s1452 = sadd.s32 %s1450, %s1451
      %s1453 = smul.addr %s1452, 4
      %s1454 = scalar_lea.vmem %s4, %s1453
      %p1455 = scmp.lt.s32.totalorder %s21, 1
      %s1456 = scalar_select %p1455, %s21, 1
      %s1457 = smul.addr %s1456, 2
      %s1458 = scalar_lea.vmem %s5, %s1457
      // Predicated region
      $region45: #{double_conv.3} parent=35 // pred_check
        %p1459 = pneg %p138
      $region46: #{double_conv.3} parent=35 // pred_check_branch
        %1461 = sbr.rel (%p1459) target = $region48
      $region47: #{double_conv.3} parent=35 // pred_region
        %s1462 = smul.u32 8, %s22
      $region48: #{double_conv.3} parent=35 // pred_fallthru
        _
      // Predicated region
      $region49: #{double_conv.3} parent=35 // pred_check
        %p1463 = pneg %p164
      $region50: #{double_conv.3} parent=35 // pred_check_branch
        %1465 = sbr.rel (%p1463) target = $region52
      $region51: #{double_conv.3} parent=35 // pred_region
        _
      $region52: #{double_conv.3} parent=35 // pred_fallthru
        _
    $region36: #{double_conv.3} parent=5 // pred_fallthru
      _
    %p1466 = scmp.le.s32.totalorder 2, %s12
    // Predicated region
    $region53: #{double_conv.3} parent=5 // pred_check
      %p1467 = pneg %p1466
    $region54: #{double_conv.3} parent=5 // pred_check_branch
      %1469 = sbr.rel (%p1467) target = $region56
    $region55: #{double_conv.3} parent=5 // pred_region
      %s1470 = ssub.s32 %s12, 2
      // Predicated region
      $region57: #{double_conv.3} parent=55 // pred_check
        %p1471 = pneg %p144
      $region58: #{double_conv.3} parent=55 // pred_check_branch
        %1473 = sbr.rel (%p1471) target = $region60
      $region59: #{double_conv.3} parent=55 // pred_region
        %s1474 = smul.u32 8, %s24
        %p1475 = scmp.lt.s32.totalorder %s23, 1
        %s1476 = scalar_select %p1475, %s23, 1
        %p1477 = scmp.lt.s32.totalorder %s1474, 15
        %s1478 = scalar_select %p1477, %s1474, 15
        %s1479 = smul.addr %s1478, 2
        %s1480 = smul.addr %s1476, 32
        %s1481 = sadd.s32 %s1479, %s1480
        %s1482 = smul.addr %s1481, 4
        %s1483 = scalar_lea.vmem %s4, %s1482
      $region60: #{double_conv.3} parent=55 // pred_fallthru
        _
      // Predicated region
      $region61: #{double_conv.3} parent=55 // pred_check
        %p1484 = pneg %p170
      $region62: #{double_conv.3} parent=55 // pred_check_branch
        %1486 = sbr.rel (%p1484) target = $region64
      $region63: #{double_conv.3} parent=55 // pred_region
        %p1487 = scmp.lt.s32.totalorder %s23, 1
        %s1488 = scalar_select %p1487, %s23, 1
        %s1489 = smul.addr %s1488, 2
        %s1490 = scalar_lea.vmem %s5, %s1489
      $region64: #{double_conv.3} parent=55 // pred_fallthru
        _
    $region56: #{double_conv.3} parent=5 // pred_fallthru
      _
  $region6: #{double_conv.3} parent=0 // loop_footer
    %s16 = sadd.s32 1, %s12
  $region7: #{double_conv.3} parent=0 // loop_footer_branch
    %11 = sbr.rel target = $region3
  $region8: #{double_conv.3} parent=0 // loop_exit
    _

// kernel: double_conv.4
$region0: #{double_conv.4}
  #allocation0 [shape = 'u32[]', space=smem, size = 0x4, offset = 0x4, fixed_abs, tag = 'smem constant byte address 0x4 - core index']
  #allocation1 [shape = 'u32[72,128]{1,0:T(1,128)}', space=vmem, size = 0x9000, scoped, tag = 'internal scratch']
  #allocation2 [shape = 'f32[18,18,8]{2,1,0:T(8,128)}', space=vmem, size = 0x36000, scoped, tag = 'scratch operand']
  %s0 = inlined_call_operand.vmem [shape: bf16[2,16,16,8], index: 0, kind: input, shape index: {}]
  %s1 = inlined_call_operand.vmem [shape: f32[1,8], index: 1, kind: input, shape index: {}]
  %s2 = inlined_call_operand.vmem [shape: f32[1,8], index: 2, kind: input, shape index: {}]
  %s3 = inlined_call_operand.vmem [shape: bf16[128,128], index: 3, kind: input, shape index: {}]
  %s4 = inlined_call_operand.vmem [shape: f32[2,16,16,8], index: 4, kind: output, shape index: {0}]
  %s5 = inlined_call_operand.vmem [shape: f32[2,2,8], index: 5, kind: output, shape index: {1}]
  %6 = xla_tuple %s4, %s5
  %s7 = sld [smem:[#allocation0]]
  $region65: #{double_conv.4} parent=0
    _
  %s9 = ssub.s32 1, %s7
  %s10 = scalar_select 0, %s9, %s7
  loop: start=0, step=1, limit=6
  $region2: #{double_conv.4} parent=0 // loop_pre_header
    _
  $region3: #{double_conv.4} parent=0 // loop_header
    %s12 = sphi 0, %s16
    %p13 = scmp.ge.s32.totalorder %s12, 6
    %s19 = sphi 0, %s31
    %s20 = sphi 0, %s27
    %s21 = sphi 0, %s19
    %s22 = sphi 0, %s20
    %s23 = sphi 0, %s21
    %s24 = sphi 0, %s22
    %s34 = sphi 0, %s36
    %s37 = sphi 0, %s34
    %s38 = sphi 0, %s37
    %s54 = sphi 0, %s38
    %s58 = sphi 0, %s58
    %s60 = sphi 0, %s58
    %s61 = sphi 0, %s60
    %s75 = sphi 0, %s61
    %s79 = sphi 0, %s79
    %s81 = sphi 0, %s79
    %s82 = sphi 0, %s81
    %s96 = sphi 0, %s82
    %s100 = sphi 0, %s100
    %s102 = sphi 0, %s100
    %s103 = sphi 0, %s102
    %s117 = sphi 0, %s103
    %s125 = sphi 0, %s127
    %s128 = sphi 0, %s125
    %s129 = sphi 0, %s128
    %s145 = sphi 0, %s129
    %s151 = sphi 0, %s153
    %s154 = sphi 0, %s151
    %s155 = sphi 0, %s154
    %s171 = sphi 0, %s155
  $region4: #{double_conv.4} parent=0 // loop_header_branch
    %15 = sbr.rel (%p13) target = $region8
  $region5: #{double_conv.4} parent=0 // loop_body
    %s17 = ssub.s32 %s12, 1
    %s18 = ssub.s32 %s12, 2
    %s25 = sadd.s32 1, %s20
    %p26 = scmp.ge.s32.totalorder %s25, 2
    %s27 = scalar_select %p26, 0, %s25
    %s28 = sadd.s32 1, %s19
    %s29 = scalar_select %p26, %s28, %s19
    %p30 = scmp.ge.s32.totalorder %s29, 2
    %s31 = scalar_select %p30, 0, %s29
    %s32 = ssub.s32 %s19, %s31
    %p33 = scmp.eq.s32.totalorder %s32, 0
    %s35 = sadd.s32 %s34, 1
    %s36 = scalar_select %p33, %s34, %s35
    %p39 = pneg %p33
    %p40 = scmp.eq.s32.totalorder %s12, 3
    %p41 = por %p39, %p40
    %p42 = scmp.ne.s32.totalorder %s34, %s37
    %p43 = scmp.eq.s32.totalorder %s12, 0
    %p44 = por %p42, %p43
    %p45 = scmp.ne.s32.totalorder %s34, %s37
    %p46 = scmp.eq.s32.totalorder %s17, 3
    %p47 = por %p45, %p46
    %p48 = scmp.ne.s32.totalorder %s37, %s38
    %p49 = scmp.eq.s32.totalorder %s17, 0
    %p50 = por %p48, %p49
    %p51 = scmp.ne.s32.totalorder %s37, %s38
    %p52 = scmp.eq.s32.totalorder %s18, 3
    %p53 = por %p51, %p52
    %p55 = scmp.ne.s32.totalorder %s38, %s54
    %p56 = scmp.eq.s32.totalorder %s18, 0
    %p57 = por %p55, %p56
    %s59 = sadd.s32 %s58, 1
    %p62 = scmp.eq.s32.totalorder %s12, 3
    %p63 = scmp.ne.s32.totalorder %s58, %s60
    %p64 = scmp.eq.s32.totalorder %s12, 0
    %p65 = por %p63, %p64
    %p66 = scmp.ne.s32.totalorder %s58, %s60
    %p67 = scmp.eq.s32.totalorder %s17, 3
    %p68 = por %p66, %p67
    %p69 = scmp.ne.s32.totalorder %s60, %s61
    %p70 = scmp.eq.s32.totalorder %s17, 0
    %p71 = por %p69, %p70
    %p72 = scmp.ne.s32.totalorder %s60, %s61
    %p73 = scmp.eq.s32.totalorder %s18, 3
    %p74 = por %p72, %p73
    %p76 = scmp.ne.s32.totalorder %s61, %s75
    %p77 = scmp.eq.s32.totalorder %s18, 0
    %p78 = por %p76, %p77
    %s80 = sadd.s32 %s79, 1
    %p83 = scmp.eq.s32.totalorder %s12, 3
    %p84 = scmp.ne.s32.totalorder %s79, %s81
    %p85 = scmp.eq.s32.totalorder %s12, 0
    %p86 = por %p84, %p85
    %p87 = scmp.ne.s32.totalorder %s79, %s81
    %p88 = scmp.eq.s32.totalorder %s17, 3
    %p89 = por %p87, %p88
    %p90 = scmp.ne.s32.totalorder %s81, %s82
    %p91 = scmp.eq.s32.totalorder %s17, 0
    %p92 = por %p90, %p91
    %p93 = scmp.ne.s32.totalorder %s81, %s82
    %p94 = scmp.eq.s32.totalorder %s18, 3
    %p95 = por %p93, %p94
    %p97 = scmp.ne.s32.totalorder %s82, %s96
    %p98 = scmp.eq.s32.totalorder %s18, 0
    %p99 = por %p97, %p98
    %s101 = sadd.s32 %s100, 1
    %p104 = scmp.eq.s32.totalorder %s12, 3
    %p105 = scmp.ne.s32.totalorder %s100, %s102
    %p106 = scmp.eq.s32.totalorder %s12, 0
    %p107 = por %p105, %p106
    %p108 = scmp.ne.s32.totalorder %s100, %s102
    %p109 = scmp.eq.s32.totalorder %s17, 3
    %p110 = por %p108, %p109
    %p111 = scmp.ne.s32.totalorder %s102, %s103
    %p112 = scmp.eq.s32.totalorder %s17, 0
    %p113 = por %p111, %p112
    %p114 = scmp.ne.s32.totalorder %s102, %s103
    %p115 = scmp.eq.s32.totalorder %s18, 3
    %p116 = por %p114, %p115
    %p118 = scmp.ne.s32.totalorder %s103, %s117
    %p119 = scmp.eq.s32.totalorder %s18, 0
    %p120 = por %p118, %p119
    %s121 = ssub.s32 %s19, %s31
    %s122 = ssub.s32 %s20, %s27
    %s123 = sor.u32 %s121, %s122
    %p124 = scmp.eq.s32.totalorder %s123, 0
    %s126 = sadd.s32 %s125, 1
    %s127 = scalar_select %p124, %s125, %s126
    %p130 = pneg %p124
    %p131 = scmp.eq.s32.totalorder %s12, 3
    %p132 = por %p130, %p131
    %p133 = scmp.ne.s32.totalorder %s125, %s128
    %p134 = scmp.eq.s32.totalorder %s12, 0
    %p135 = por %p133, %p134
    %p136 = scmp.ne.s32.totalorder %s125, %s128
    %p137 = scmp.eq.s32.totalorder %s17, 3
    %p138 = por %p136, %p137
    %p139 = scmp.ne.s32.totalorder %s128, %s129
    %p140 = scmp.eq.s32.totalorder %s17, 0
    %p141 = por %p139, %p140
    %p142 = scmp.ne.s32.totalorder %s128, %s129
    %p143 = scmp.eq.s32.totalorder %s18, 3
    %p144 = por %p142, %p143
    %p146 = scmp.ne.s32.totalorder %s129, %s145
    %p147 = scmp.eq.s32.totalorder %s18, 0
    %p148 = por %p146, %p147
    %s149 = ssub.s32 %s19, %s31
    %p150 = scmp.eq.s32.totalorder %s149, 0
    %s152 = sadd.s32 %s151, 1
    %s153 = scalar_select %p150, %s151, %s152
    %p156 = pneg %p150
    %p157 = scmp.eq.s32.totalorder %s12, 3
    %p158 = por %p156, %p157
    %p159 = scmp.ne.s32.totalorder %s151, %s154
    %p160 = scmp.eq.s32.totalorder %s12, 0
    %p161 = por %p159, %p160
    %p162 = scmp.ne.s32.totalorder %s151, %s154
    %p163 = scmp.eq.s32.totalorder %s17, 3
    %p164 = por %p162, %p163
    %p165 = scmp.ne.s32.totalorder %s154, %s155
    %p166 = scmp.eq.s32.totalorder %s17, 0
    %p167 = por %p165, %p166
    %p168 = scmp.ne.s32.totalorder %s154, %s155
    %p169 = scmp.eq.s32.totalorder %s18, 3
    %p170 = por %p168, %p169
    %p172 = scmp.ne.s32.totalorder %s155, %s171
    %p173 = scmp.eq.s32.totalorder %s18, 0
    %p174 = por %p172, %p173
    %p175 = scmp.le.s32.totalorder 1, %s12
    %p176 = scmp.lt.s32.totalorder %s12, 5
    %p177 = pnand %p175, %p176
    %p178 = pneg %p177
    // Predicated region
    $region9: #{double_conv.4} parent=5 // pred_check
      _
    $region10: #{double_conv.4} parent=5 // pred_check_branch
      %180 = sbr.rel (%p177) target = $region12
    $region11: #{double_conv.4} parent=5 // pred_region
      %s181 = ssub.s32 %s12, 1
      // Predicated region
      $region13: #{double_conv.4} parent=11 // pred_check
        %p182 = pneg %p71
      $region14: #{double_conv.4} parent=11 // pred_check_branch
        %184 = sbr.rel (%p182) target = $region16
      $region15: #{double_conv.4} parent=11 // pred_region
        _
      $region16: #{double_conv.4} parent=11 // pred_fallthru
        _
      // Predicated region
      $region17: #{double_conv.4} parent=11 // pred_check
        %p185 = pneg %p92
      $region18: #{double_conv.4} parent=11 // pred_check_branch
        %187 = sbr.rel (%p185) target = $region20
      $region19: #{double_conv.4} parent=11 // pred_region
        _
      $region20: #{double_conv.4} parent=11 // pred_fallthru
        _
      // Predicated region
      $region21: #{double_conv.4} parent=11 // pred_check
        %p188 = pneg %p113
      $region22: #{double_conv.4} parent=11 // pred_check_branch
        %190 = sbr.rel (%p188) target = $region24
      $region23: #{double_conv.4} parent=11 // pred_region
        _
      $region24: #{double_conv.4} parent=11 // pred_fallthru
        _
    $region12: #{double_conv.4} parent=5 // pred_fallthru
      _
    %p191 = scmp.lt.s32.totalorder %s12, 4
    // Predicated region
    $region25: #{double_conv.4} parent=5 // pred_check
      %p192 = pneg %p191
    $region26: #{double_conv.4} parent=5 // pred_check_branch
      %194 = sbr.rel (%p192) target = $region28
    $region27: #{double_conv.4} parent=5 // pred_region
      // Predicated region
      $region29: #{double_conv.4} parent=27 // pred_check
        %p195 = pneg %p44
      $region30: #{double_conv.4} parent=27 // pred_check_branch
        %197 = sbr.rel (%p195) target = $region32
      $region31: #{double_conv.4} parent=27 // pred_region
        %p198 = scmp.lt.s32.totalorder %s19, 1
        %s199 = scalar_select %p198, %s19, 1
        %s200 = smul.addr %s199, 32
        %s201 = smul.addr %s200, 4
        %s202 = scalar_lea.vmem %s0, %s201
      $region32: #{double_conv.4} parent=27 // pred_fallthru
        _
    $region28: #{double_conv.4} parent=5 // pred_fallthru
      _
    %p203 = scmp.le.s32.totalorder 1, %s12
    %p204 = scmp.lt.s32.totalorder %s12, 5
    %p205 = pnand %p203, %p204
    %p206 = pneg %p205
    // Predicated region
    $region33: #{double_conv.4} parent=5 // pred_check
      _
    $region34: #{double_conv.4} parent=5 // pred_check_branch
      %208 = sbr.rel (%p205) target = $region36
    $region35: #{double_conv.4} parent=5 // pred_region
      %s209 = ssub.s32 %s12, 1
      %p210 = scmp.lt.s32.totalorder %s21, 1
      %s211 = scalar_select %p210, %s21, 1
      %s212 = smul.addr %s211, 32
      %s213 = smul.addr %s212, 4
      %s214 = scalar_lea.vmem %s0, %s213
      %p215 = pneg %p50
      %p216 = pneg %p47
      %p217 = pneg %p71
      %p218 = pneg %p68
      %p219 = pneg %p92
      %p220 = pneg %p89
      %p221 = pneg %p113
      %p222 = pneg %p110
      %p223 = pneg %p141
      %p224 = pneg %p138
      %s225 = smul.u32 8, %s22
      %p226 = scmp.lt.s32.totalorder %s21, 1
      %s227 = scalar_select %p226, %s21, 1
      %p228 = scmp.lt.s32.totalorder %s225, 15
      %s229 = scalar_select %p228, %s225, 15
      %s230 = smul.addr %s229, 2
      %s231 = smul.addr %s227, 32
      %s232 = sadd.s32 %s230, %s231
      %s233 = smul.addr %s232, 8
      %s234 = scalar_lea.vmem %s4, %s233
      %p235 = pneg %p167
      %p236 = pneg %p164
      %p237 = scmp.lt.s32.totalorder %s21, 1
      %s238 = scalar_select %p237, %s21, 1
      %s239 = smul.addr %s238, 2
      %s240 = scalar_lea.vmem %s5, %s239
      %p241 = scmp.lt.s32.totalorder %s21, 1
      %s242 = scalar_select %p241, %s21, 1
      %s243 = smul.addr %s242, 32
      %s244 = smul.addr %s243, 4
      %s245 = scalar_lea.vmem %s0, %s244
      %s246 = smul.u32 8, %s22
      %p247 = scmp.lt.s32.totalorder %s21, 1
      %s248 = scalar_select %p247, %s21, 1
      %p249 = scmp.lt.s32.totalorder %s246, 15
      %s250 = scalar_select %p249, %s246, 15
      %s251 = smul.addr %s250, 2
      %s252 = smul.addr %s248, 32
      %s253 = sadd.s32 %s251, %s252
      %s254 = smul.addr %s253, 8
      %s255 = scalar_lea.vmem %s4, %s254
      %s256 = smul.u32 8, %s22
      %p257 = scmp.lt.s32.totalorder %s21, 1
      %s258 = scalar_select %p257, %s21, 1
      %s259 = smul.addr %s258, 2
      %s260 = scalar_lea.vmem %s5, %s259
      %p261 = scmp.eq.s32.totalorder %s22, 0
      // Predicated region
      $region37: #{double_conv.4} parent=35 // pred_check
        %p262 = pneg %p261
      $region38: #{double_conv.4} parent=35 // pred_check_branch
        %264 = sbr.rel (%p262) target = $region40
      $region39: #{double_conv.4} parent=35 // pred_region
        %v265 = vld [vmem:[%s245] sm:$0xf]
        %v266 = vld [vmem:[%s245 + $0x4] sm:$0xf]
        %v267 = vld [vmem:[%s245 + $0x8] sm:$0xf]
        %v268 = vld [vmem:[%s245 + $0xc] sm:$0xf]
        %v269 = vld [vmem:[%s245 + $0x10] sm:$0xf]
        %v270 = vld [vmem:[%s245 + $0x14] sm:$0xf]
        %v271 = vld [vmem:[%s245 + $0x18] sm:$0xf]
        %v272 = vld [vmem:[%s245 + $0x1c] sm:$0xf]
        %v273 = vld [vmem:[%s245 + $0x20] sm:$0xf]
        %v274 = vld [vmem:[%s245 + $0x24] sm:$0xf]
        %v275 = vld [vmem:[%s245 + $0x28] sm:$0xf]
        %v276 = vld [vmem:[%s245 + $0x2c] sm:$0xf]
        %v277 = vld [vmem:[%s245 + $0x30] sm:$0xf]
        %v278 = vld [vmem:[%s245 + $0x34] sm:$0xf]
        %v279 = vld [vmem:[%s245 + $0x38] sm:$0xf]
        %v280 = vld [vmem:[%s245 + $0x3c] sm:$0xf]
        %v281 = vld [vmem:[%s245 + $0x40] sm:$0xf]
        %v282 = vld [vmem:[%s245 + $0x44] sm:$0xf]
        %v283 = vld [vmem:[%s245 + $0x48] sm:$0xf]
        %v284 = vld [vmem:[%s245 + $0x4c] sm:$0xf]
        %v285 = vld [vmem:[%s245 + $0x50] sm:$0xf]
        %v286 = vld [vmem:[%s245 + $0x54] sm:$0xf]
        %v287 = vld [vmem:[%s245 + $0x58] sm:$0xf]
        %v288 = vld [vmem:[%s245 + $0x5c] sm:$0xf]
        %v289 = vld [vmem:[%s245 + $0x60] sm:$0xf]
        %v290 = vld [vmem:[%s245 + $0x64] sm:$0xf]
        %v291 = vld [vmem:[%s245 + $0x68] sm:$0xf]
        %v292 = vld [vmem:[%s245 + $0x6c] sm:$0xf]
        %v293 = vld [vmem:[%s245 + $0x70] sm:$0xf]
        %v294 = vld [vmem:[%s245 + $0x74] sm:$0xf]
        %v295 = vld [vmem:[%s245 + $0x78] sm:$0xf]
        %v296 = vld [vmem:[%s245 + $0x7c] sm:$0xf]
        %v297 = vunpack.c.l.bf16 %v265
        %v298 = vunpack.c.l.bf16 %v266
        %v299 = vunpack.c.l.bf16 %v267
        %v300 = vunpack.c.l.bf16 %v268
        %v301 = vunpack.c.l.bf16 %v269
        %v302 = vunpack.c.l.bf16 %v270
        %v303 = vunpack.c.l.bf16 %v271
        %v304 = vunpack.c.l.bf16 %v272
        %v305 = vunpack.c.l.bf16 %v273
        %v306 = vunpack.c.l.bf16 %v274
        %v307 = vunpack.c.l.bf16 %v275
        %v308 = vunpack.c.l.bf16 %v276
        %v309 = vunpack.c.l.bf16 %v277
        %v310 = vunpack.c.l.bf16 %v278
        %v311 = vunpack.c.l.bf16 %v279
        %v312 = vunpack.c.l.bf16 %v280
        %v313 = vunpack.c.l.bf16 %v281
        %v314 = vunpack.c.l.bf16 %v282
        %v315 = vunpack.c.l.bf16 %v283
        %v316 = vunpack.c.l.bf16 %v284
        %v317 = vunpack.c.l.bf16 %v285
        %v318 = vunpack.c.l.bf16 %v286
        %v319 = vunpack.c.l.bf16 %v287
        %v320 = vunpack.c.l.bf16 %v288
        %v321 = vunpack.c.l.bf16 %v289
        %v322 = vunpack.c.l.bf16 %v290
        %v323 = vunpack.c.l.bf16 %v291
        %v324 = vunpack.c.l.bf16 %v292
        %v325 = vunpack.c.l.bf16 %v293
        %v326 = vunpack.c.l.bf16 %v294
        %v327 = vunpack.c.l.bf16 %v295
        %v328 = vunpack.c.l.bf16 %v296
        %v329 = vld [vmem:[%s1] sm:$0x1]
        %v330 = vld [vmem:[%s2] sm:$0x1]
        %v332 = vperm.slane %v329, 0
        %v334 = vmul.f32 %v297, %v332
        %v335 = vmul.f32 %v298, %v332
        %v336 = vmul.f32 %v299, %v332
        %v337 = vmul.f32 %v300, %v332
        %v338 = vmul.f32 %v301, %v332
        %v339 = vmul.f32 %v302, %v332
        %v340 = vmul.f32 %v303, %v332
        %v341 = vmul.f32 %v304, %v332
        %v342 = vmul.f32 %v305, %v332
        %v343 = vmul.f32 %v306, %v332
        %v344 = vmul.f32 %v307, %v332
        %v345 = vmul.f32 %v308, %v332
        %v346 = vmul.f32 %v309, %v332
        %v347 = vmul.f32 %v310, %v332
        %v348 = vmul.f32 %v311, %v332
        %v349 = vmul.f32 %v312, %v332
        %v350 = vmul.f32 %v313, %v332
        %v351 = vmul.f32 %v314, %v332
        %v352 = vmul.f32 %v315, %v332
        %v353 = vmul.f32 %v316, %v332
        %v354 = vmul.f32 %v317, %v332
        %v355 = vmul.f32 %v318, %v332
        %v356 = vmul.f32 %v319, %v332
        %v357 = vmul.f32 %v320, %v332
        %v358 = vmul.f32 %v321, %v332
        %v359 = vmul.f32 %v322, %v332
        %v360 = vmul.f32 %v323, %v332
        %v361 = vmul.f32 %v324, %v332
        %v362 = vmul.f32 %v325, %v332
        %v363 = vmul.f32 %v326, %v332
        %v364 = vmul.f32 %v327, %v332
        %v365 = vmul.f32 %v328, %v332
        %v367 = vperm.slane %v330, 0
        %v369 = vadd.f32 %v334, %v367
        %v370 = vadd.f32 %v335, %v367
        %v371 = vadd.f32 %v336, %v367
        %v372 = vadd.f32 %v337, %v367
        %v373 = vadd.f32 %v338, %v367
        %v374 = vadd.f32 %v339, %v367
        %v375 = vadd.f32 %v340, %v367
        %v376 = vadd.f32 %v341, %v367
        %v377 = vadd.f32 %v342, %v367
        %v378 = vadd.f32 %v343, %v367
        %v379 = vadd.f32 %v344, %v367
        %v380 = vadd.f32 %v345, %v367
        %v381 = vadd.f32 %v346, %v367
        %v382 = vadd.f32 %v347, %v367
        %v383 = vadd.f32 %v348, %v367
        %v384 = vadd.f32 %v349, %v367
        %v385 = vadd.f32 %v350, %v367
        %v386 = vadd.f32 %v351, %v367
        %v387 = vadd.f32 %v352, %v367
        %v388 = vadd.f32 %v353, %v367
        %v389 = vadd.f32 %v354, %v367
        %v390 = vadd.f32 %v355, %v367
        %v391 = vadd.f32 %v356, %v367
        %v392 = vadd.f32 %v357, %v367
        %v393 = vadd.f32 %v358, %v367
        %v394 = vadd.f32 %v359, %v367
        %v395 = vadd.f32 %v360, %v367
        %v396 = vadd.f32 %v361, %v367
        %v397 = vadd.f32 %v362, %v367
        %v398 = vadd.f32 %v363, %v367
        %v399 = vadd.f32 %v364, %v367
        %v400 = vadd.f32 %v365, %v367
        %v401 = vmax.f32 %v369, 0.0
        %v402 = vmax.f32 %v370, 0.0
        %v403 = vmax.f32 %v371, 0.0
        %v404 = vmax.f32 %v372, 0.0
        %v405 = vmax.f32 %v373, 0.0
        %v406 = vmax.f32 %v374, 0.0
        %v407 = vmax.f32 %v375, 0.0
        %v408 = vmax.f32 %v376, 0.0
        %v409 = vmax.f32 %v377, 0.0
        %v410 = vmax.f32 %v378, 0.0
        %v411 = vmax.f32 %v379, 0.0
        %v412 = vmax.f32 %v380, 0.0
        %v413 = vmax.f32 %v381, 0.0
        %v414 = vmax.f32 %v382, 0.0
        %v415 = vmax.f32 %v383, 0.0
        %v416 = vmax.f32 %v384, 0.0
        %v417 = vmax.f32 %v385, 0.0
        %v418 = vmax.f32 %v386, 0.0
        %v419 = vmax.f32 %v387, 0.0
        %v420 = vmax.f32 %v388, 0.0
        %v421 = vmax.f32 %v389, 0.0
        %v422 = vmax.f32 %v390, 0.0
        %v423 = vmax.f32 %v391, 0.0
        %v424 = vmax.f32 %v392, 0.0
        %v425 = vmax.f32 %v393, 0.0
        %v426 = vmax.f32 %v394, 0.0
        %v427 = vmax.f32 %v395, 0.0
        %v428 = vmax.f32 %v396, 0.0
        %v429 = vmax.f32 %v397, 0.0
        %v430 = vmax.f32 %v398, 0.0
        %v431 = vmax.f32 %v399, 0.0
        %v432 = vmax.f32 %v400, 0.0
        %vm433 = vcmask 64512
        %434 = vst.msk [vmem:[#allocation2] sm:$0xff] %vm433, 0.0
        %435 = vst.msk [vmem:[#allocation2 + $0x8] sm:$0xff] %vm433, 0.0
        %vm436 = vcmask 58368
        %437 = vst.msk [vmem:[#allocation2 + $0x10] sm:$0x3] %vm436, 0.0
        %s438 = scalar_lea.vmem [#allocation2], 408
        %439 = vst.msk [vmem:[%s438] sm:$0xff] %vm433, 0.0
        %440 = vst.msk [vmem:[%s438 + $0x8] sm:$0xff] %vm433, 0.0
        %441 = vst.msk [vmem:[%s438 + $0x10] sm:$0x3] %vm436, 0.0
        %s442 = scalar_lea.vmem [#allocation2], 24
        %vm443 = vcmask 57344
        %444 = vst.msk [vmem:[%s442] sm:$0x1] %vm443, 0.0
        %445 = vst.msk [vmem:[%s442 + $0x18] sm:$0x1] %vm443, 0.0
        %446 = vst.msk [vmem:[%s442 + $0x30] sm:$0x1] %vm443, 0.0
        %447 = vst.msk [vmem:[%s442 + $0x48] sm:$0x1] %vm443, 0.0
        %448 = vst.msk [vmem:[%s442 + $0x60] sm:$0x1] %vm443, 0.0
        %449 = vst.msk [vmem:[%s442 + $0x78] sm:$0x1] %vm443, 0.0
        %450 = vst.msk [vmem:[%s442 + $0x90] sm:$0x1] %vm443, 0.0
        %451 = vst.msk [vmem:[%s442 + $0xa8] sm:$0x1] %vm443, 0.0
        %452 = vst.msk [vmem:[%s442 + $0xc0] sm:$0x1] %vm443, 0.0
        %453 = vst.msk [vmem:[%s442 + $0xd8] sm:$0x1] %vm443, 0.0
        %454 = vst.msk [vmem:[%s442 + $0xf0] sm:$0x1] %vm443, 0.0
        %455 = vst.msk [vmem:[%s442 + $0x108] sm:$0x1] %vm443, 0.0
        %456 = vst.msk [vmem:[%s442 + $0x120] sm:$0x1] %vm443, 0.0
        %457 = vst.msk [vmem:[%s442 + $0x138] sm:$0x1] %vm443, 0.0
        %458 = vst.msk [vmem:[%s442 + $0x150] sm:$0x1] %vm443, 0.0
        %459 = vst.msk [vmem:[%s442 + $0x168] sm:$0x1] %vm443, 0.0
        %460 = vst.msk [vmem:[%s442 + $0x11] sm:$0x1] %vm443, 0.0
        %461 = vst.msk [vmem:[%s442 + $0x29] sm:$0x1] %vm443, 0.0
        %462 = vst.msk [vmem:[%s442 + $0x41] sm:$0x1] %vm443, 0.0
        %463 = vst.msk [vmem:[%s442 + $0x59] sm:$0x1] %vm443, 0.0
        %464 = vst.msk [vmem:[%s442 + $0x71] sm:$0x1] %vm443, 0.0
        %465 = vst.msk [vmem:[%s442 + $0x89] sm:$0x1] %vm443, 0.0
        %466 = vst.msk [vmem:[%s442 + $0xa1] sm:$0x1] %vm443, 0.0
        %467 = vst.msk [vmem:[%s442 + $0xb9] sm:$0x1] %vm443, 0.0
        %468 = vst.msk [vmem:[%s442 + $0xd1] sm:$0x1] %vm443, 0.0
        %469 = vst.msk [vmem:[%s442 + $0xe9] sm:$0x1] %vm443, 0.0
        %470 = vst.msk [vmem:[%s442 + $0x101] sm:$0x1] %vm443, 0.0
        %471 = vst.msk [vmem:[%s442 + $0x119] sm:$0x1] %vm443, 0.0
        %472 = vst.msk [vmem:[%s442 + $0x131] sm:$0x1] %vm443, 0.0
        %473 = vst.msk [vmem:[%s442 + $0x149] sm:$0x1] %vm443, 0.0
        %474 = vst.msk [vmem:[%s442 + $0x161] sm:$0x1] %vm443, 0.0
        %475 = vst.msk [vmem:[%s442 + $0x179] sm:$0x1] %vm443, 0.0
        %476 = vst.msk [vmem:[%s442 + $0x1] sm:$0xff] %vm433, %v401
        %477 = vst.msk [vmem:[%s442 + $0x9] sm:$0xff] %vm433, %v402
        %478 = vst.msk [vmem:[%s442 + $0x19] sm:$0xff] %vm433, %v403
        %479 = vst.msk [vmem:[%s442 + $0x21] sm:$0xff] %vm433, %v404
        %480 = vst.msk [vmem:[%s442 + $0x31] sm:$0xff] %vm433, %v405
        %481 = vst.msk [vmem:[%s442 + $0x39] sm:$0xff] %vm433, %v406
        %482 = vst.msk [vmem:[%s442 + $0x49] sm:$0xff] %vm433, %v407
        %483 = vst.msk [vmem:[%s442 + $0x51] sm:$0xff] %vm433, %v408
        %484 = vst.msk [vmem:[%s442 + $0x61] sm:$0xff] %vm433, %v409
        %485 = vst.msk [vmem:[%s442 + $0x69] sm:$0xff] %vm433, %v410
        %486 = vst.msk [vmem:[%s442 + $0x79] sm:$0xff] %vm433, %v411
        %487 = vst.msk [vmem:[%s442 + $0x81] sm:$0xff] %vm433, %v412
        %488 = vst.msk [vmem:[%s442 + $0x91] sm:$0xff] %vm433, %v413
        %489 = vst.msk [vmem:[%s442 + $0x99] sm:$0xff] %vm433, %v414
        %490 = vst.msk [vmem:[%s442 + $0xa9] sm:$0xff] %vm433, %v415
        %491 = vst.msk [vmem:[%s442 + $0xb1] sm:$0xff] %vm433, %v416
        %492 = vst.msk [vmem:[%s442 + $0xc1] sm:$0xff] %vm433, %v417
        %493 = vst.msk [vmem:[%s442 + $0xc9] sm:$0xff] %vm433, %v418
        %494 = vst.msk [vmem:[%s442 + $0xd9] sm:$0xff] %vm433, %v419
        %495 = vst.msk [vmem:[%s442 + $0xe1] sm:$0xff] %vm433, %v420
        %496 = vst.msk [vmem:[%s442 + $0xf1] sm:$0xff] %vm433, %v421
        %497 = vst.msk [vmem:[%s442 + $0xf9] sm:$0xff] %vm433, %v422
        %498 = vst.msk [vmem:[%s442 + $0x109] sm:$0xff] %vm433, %v423
        %499 = vst.msk [vmem:[%s442 + $0x111] sm:$0xff] %vm433, %v424
        %500 = vst.msk [vmem:[%s442 + $0x121] sm:$0xff] %vm433, %v425
        %501 = vst.msk [vmem:[%s442 + $0x129] sm:$0xff] %vm433, %v426
        %502 = vst.msk [vmem:[%s442 + $0x139] sm:$0xff] %vm433, %v427
        %503 = vst.msk [vmem:[%s442 + $0x141] sm:$0xff] %vm433, %v428
        %504 = vst.msk [vmem:[%s442 + $0x151] sm:$0xff] %vm433, %v429
        %505 = vst.msk [vmem:[%s442 + $0x159] sm:$0xff] %vm433, %v430
        %506 = vst.msk [vmem:[%s442 + $0x169] sm:$0xff] %vm433, %v431
        %507 = vst.msk [vmem:[%s442 + $0x171] sm:$0xff] %vm433, %v432
      $region40: #{double_conv.4} parent=35 // pred_fallthru
        _
      %s508 = smul.u32 %s22, 8
      %s509 = smul.u32 %s508, 24
      %s510 = scalar_lea.vmem [#allocation2], %s509
      %v511 = vld [vmem:[%s510] sm:$0xff]
      %v512 = vld [vmem:[%s510 + $0x8] sm:$0xff]
      %v513 = vld [vmem:[%s510 + $0x18] sm:$0xff]
      %v514 = vld [vmem:[%s510 + $0x20] sm:$0xff]
      %v515 = vld [vmem:[%s510 + $0x30] sm:$0xff]
      %v516 = vld [vmem:[%s510 + $0x38] sm:$0xff]
      %v517 = vld [vmem:[%s510 + $0x48] sm:$0xff]
      %v518 = vld [vmem:[%s510 + $0x50] sm:$0xff]
      %v519 = vld [vmem:[%s510 + $0x60] sm:$0xff]
      %v520 = vld [vmem:[%s510 + $0x68] sm:$0xff]
      %v521 = vld [vmem:[%s510 + $0x78] sm:$0xff]
      %v522 = vld [vmem:[%s510 + $0x80] sm:$0xff]
      %v523 = vld [vmem:[%s510 + $0x90] sm:$0xff]
      %v524 = vld [vmem:[%s510 + $0x98] sm:$0xff]
      %v525 = vld [vmem:[%s510 + $0xa8] sm:$0xff]
      %v526 = vld [vmem:[%s510 + $0xb0] sm:$0xff]
      %v527 = vld [vmem:[%s510 + $0x1] sm:$0xff]
      %v528 = vld [vmem:[%s510 + $0x9] sm:$0xff]
      %v529 = vld [vmem:[%s510 + $0x19] sm:$0xff]
      %v530 = vld [vmem:[%s510 + $0x21] sm:$0xff]
      %v531 = vld [vmem:[%s510 + $0x31] sm:$0xff]
      %v532 = vld [vmem:[%s510 + $0x39] sm:$0xff]
      %v533 = vld [vmem:[%s510 + $0x49] sm:$0xff]
      %v534 = vld [vmem:[%s510 + $0x51] sm:$0xff]
      %v535 = vld [vmem:[%s510 + $0x61] sm:$0xff]
      %v536 = vld [vmem:[%s510 + $0x69] sm:$0xff]
      %v537 = vld [vmem:[%s510 + $0x79] sm:$0xff]
      %v538 = vld [vmem:[%s510 + $0x81] sm:$0xff]
      %v539 = vld [vmem:[%s510 + $0x91] sm:$0xff]
      %v540 = vld [vmem:[%s510 + $0x99] sm:$0xff]
      %v541 = vld [vmem:[%s510 + $0xa9] sm:$0xff]
      %v542 = vld [vmem:[%s510 + $0xb1] sm:$0xff]
      %v543 = vld [vmem:[%s510 + $0x2] sm:$0xff]
      %v544 = vld [vmem:[%s510 + $0xa] sm:$0xff]
      %v545 = vld [vmem:[%s510 + $0x1a] sm:$0xff]
      %v546 = vld [vmem:[%s510 + $0x22] sm:$0xff]
      %v547 = vld [vmem:[%s510 + $0x32] sm:$0xff]
      %v548 = vld [vmem:[%s510 + $0x3a] sm:$0xff]
      %v549 = vld [vmem:[%s510 + $0x4a] sm:$0xff]
      %v550 = vld [vmem:[%s510 + $0x52] sm:$0xff]
      %v551 = vld [vmem:[%s510 + $0x62] sm:$0xff]
      %v552 = vld [vmem:[%s510 + $0x6a] sm:$0xff]
      %v553 = vld [vmem:[%s510 + $0x7a] sm:$0xff]
      %v554 = vld [vmem:[%s510 + $0x82] sm:$0xff]
      %v555 = vld [vmem:[%s510 + $0x92] sm:$0xff]
      %v556 = vld [vmem:[%s510 + $0x9a] sm:$0xff]
      %v557 = vld [vmem:[%s510 + $0xaa] sm:$0xff]
      %v558 = vld [vmem:[%s510 + $0xb2] sm:$0xff]
      %s559 = sadd.s32 %s508, 1
      %s560 = smul.u32 %s559, 24
      %s561 = scalar_lea.vmem [#allocation2], %s560
      %v562 = vld [vmem:[%s561] sm:$0xff]
      %v563 = vld [vmem:[%s561 + $0x8] sm:$0xff]
      %v564 = vld [vmem:[%s561 + $0x18] sm:$0xff]
      %v565 = vld [vmem:[%s561 + $0x20] sm:$0xff]
      %v566 = vld [vmem:[%s561 + $0x30] sm:$0xff]
      %v567 = vld [vmem:[%s561 + $0x38] sm:$0xff]
      %v568 = vld [vmem:[%s561 + $0x48] sm:$0xff]
      %v569 = vld [vmem:[%s561 + $0x50] sm:$0xff]
      %v570 = vld [vmem:[%s561 + $0x60] sm:$0xff]
      %v571 = vld [vmem:[%s561 + $0x68] sm:$0xff]
      %v572 = vld [vmem:[%s561 + $0x78] sm:$0xff]
      %v573 = vld [vmem:[%s561 + $0x80] sm:$0xff]
      %v574 = vld [vmem:[%s561 + $0x90] sm:$0xff]
      %v575 = vld [vmem:[%s561 + $0x98] sm:$0xff]
      %v576 = vld [vmem:[%s561 + $0xa8] sm:$0xff]
      %v577 = vld [vmem:[%s561 + $0xb0] sm:$0xff]
      %v578 = vld [vmem:[%s561 + $0x1] sm:$0xff]
      %v579 = vld [vmem:[%s561 + $0x9] sm:$0xff]
      %v580 = vld [vmem:[%s561 + $0x19] sm:$0xff]
      %v581 = vld [vmem:[%s561 + $0x21] sm:$0xff]
      %v582 = vld [vmem:[%s561 + $0x31] sm:$0xff]
      %v583 = vld [vmem:[%s561 + $0x39] sm:$0xff]
      %v584 = vld [vmem:[%s561 + $0x49] sm:$0xff]
      %v585 = vld [vmem:[%s561 + $0x51] sm:$0xff]
      %v586 = vld [vmem:[%s561 + $0x61] sm:$0xff]
      %v587 = vld [vmem:[%s561 + $0x69] sm:$0xff]
      %v588 = vld [vmem:[%s561 + $0x79] sm:$0xff]
      %v589 = vld [vmem:[%s561 + $0x81] sm:$0xff]
      %v590 = vld [vmem:[%s561 + $0x91] sm:$0xff]
      %v591 = vld [vmem:[%s561 + $0x99] sm:$0xff]
      %v592 = vld [vmem:[%s561 + $0xa9] sm:$0xff]
      %v593 = vld [vmem:[%s561 + $0xb1] sm:$0xff]
      %v594 = vld [vmem:[%s561 + $0x2] sm:$0xff]
      %v595 = vld [vmem:[%s561 + $0xa] sm:$0xff]
      %v596 = vld [vmem:[%s561 + $0x1a] sm:$0xff]
      %v597 = vld [vmem:[%s561 + $0x22] sm:$0xff]
      %v598 = vld [vmem:[%s561 + $0x32] sm:$0xff]
      %v599 = vld [vmem:[%s561 + $0x3a] sm:$0xff]
      %v600 = vld [vmem:[%s561 + $0x4a] sm:$0xff]
      %v601 = vld [vmem:[%s561 + $0x52] sm:$0xff]
      %v602 = vld [vmem:[%s561 + $0x62] sm:$0xff]
      %v603 = vld [vmem:[%s561 + $0x6a] sm:$0xff]
      %v604 = vld [vmem:[%s561 + $0x7a] sm:$0xff]
      %v605 = vld [vmem:[%s561 + $0x82] sm:$0xff]
      %v606 = vld [vmem:[%s561 + $0x92] sm:$0xff]
      %v607 = vld [vmem:[%s561 + $0x9a] sm:$0xff]
      %v608 = vld [vmem:[%s561 + $0xaa] sm:$0xff]
      %v609 = vld [vmem:[%s561 + $0xb2] sm:$0xff]
      %s610 = sadd.s32 %s508, 2
      %s611 = smul.u32 %s610, 24
      %s612 = scalar_lea.vmem [#allocation2], %s611
      %v613 = vld [vmem:[%s612] sm:$0xff]
      %v614 = vld [vmem:[%s612 + $0x8] sm:$0xff]
      %v615 = vld [vmem:[%s612 + $0x18] sm:$0xff]
      %v616 = vld [vmem:[%s612 + $0x20] sm:$0xff]
      %v617 = vld [vmem:[%s612 + $0x30] sm:$0xff]
      %v618 = vld [vmem:[%s612 + $0x38] sm:$0xff]
      %v619 = vld [vmem:[%s612 + $0x48] sm:$0xff]
      %v620 = vld [vmem:[%s612 + $0x50] sm:$0xff]
      %v621 = vld [vmem:[%s612 + $0x60] sm:$0xff]
      %v622 = vld [vmem:[%s612 + $0x68] sm:$0xff]
      %v623 = vld [vmem:[%s612 + $0x78] sm:$0xff]
      %v624 = vld [vmem:[%s612 + $0x80] sm:$0xff]
      %v625 = vld [vmem:[%s612 + $0x90] sm:$0xff]
      %v626 = vld [vmem:[%s612 + $0x98] sm:$0xff]
      %v627 = vld [vmem:[%s612 + $0xa8] sm:$0xff]
      %v628 = vld [vmem:[%s612 + $0xb0] sm:$0xff]
      %v629 = vld [vmem:[%s612 + $0x1] sm:$0xff]
      %v630 = vld [vmem:[%s612 + $0x9] sm:$0xff]
      %v631 = vld [vmem:[%s612 + $0x19] sm:$0xff]
      %v632 = vld [vmem:[%s612 + $0x21] sm:$0xff]
      %v633 = vld [vmem:[%s612 + $0x31] sm:$0xff]
      %v634 = vld [vmem:[%s612 + $0x39] sm:$0xff]
      %v635 = vld [vmem:[%s612 + $0x49] sm:$0xff]
      %v636 = vld [vmem:[%s612 + $0x51] sm:$0xff]
      %v637 = vld [vmem:[%s612 + $0x61] sm:$0xff]
      %v638 = vld [vmem:[%s612 + $0x69] sm:$0xff]
      %v639 = vld [vmem:[%s612 + $0x79] sm:$0xff]
      %v640 = vld [vmem:[%s612 + $0x81] sm:$0xff]
      %v641 = vld [vmem:[%s612 + $0x91] sm:$0xff]
      %v642 = vld [vmem:[%s612 + $0x99] sm:$0xff]
      %v643 = vld [vmem:[%s612 + $0xa9] sm:$0xff]
      %v644 = vld [vmem:[%s612 + $0xb1] sm:$0xff]
      %v645 = vld [vmem:[%s612 + $0x2] sm:$0xff]
      %v646 = vld [vmem:[%s612 + $0xa] sm:$0xff]
      %v647 = vld [vmem:[%s612 + $0x1a] sm:$0xff]
      %v648 = vld [vmem:[%s612 + $0x22] sm:$0xff]
      %v649 = vld [vmem:[%s612 + $0x32] sm:$0xff]
      %v650 = vld [vmem:[%s612 + $0x3a] sm:$0xff]
      %v651 = vld [vmem:[%s612 + $0x4a] sm:$0xff]
      %v652 = vld [vmem:[%s612 + $0x52] sm:$0xff]
      %v653 = vld [vmem:[%s612 + $0x62] sm:$0xff]
      %v654 = vld [vmem:[%s612 + $0x6a] sm:$0xff]
      %v655 = vld [vmem:[%s612 + $0x7a] sm:$0xff]
      %v656 = vld [vmem:[%s612 + $0x82] sm:$0xff]
      %v657 = vld [vmem:[%s612 + $0x92] sm:$0xff]
      %v658 = vld [vmem:[%s612 + $0x9a] sm:$0xff]
      %v659 = vld [vmem:[%s612 + $0xaa] sm:$0xff]
      %v660 = vld [vmem:[%s612 + $0xb2] sm:$0xff]
      %677 = vrot.lane.b32.xlu0 %v527, 8
      %v678 = vpop.permute.xlu0 %677
      %679 = vrot.lane.b32.xlu0 %v528, 8
      %v680 = vpop.permute.xlu0 %679
      %681 = vrot.lane.b32.xlu0 %v529, 8
      %v682 = vpop.permute.xlu0 %681
      %683 = vrot.lane.b32.xlu0 %v530, 8
      %v684 = vpop.permute.xlu0 %683
      %685 = vrot.lane.b32.xlu0 %v531, 8
      %v686 = vpop.permute.xlu0 %685
      %687 = vrot.lane.b32.xlu0 %v532, 8
      %v688 = vpop.permute.xlu0 %687
      %689 = vrot.lane.b32.xlu0 %v533, 8
      %v690 = vpop.permute.xlu0 %689
      %691 = vrot.lane.b32.xlu0 %v534, 8
      %v692 = vpop.permute.xlu0 %691
      %693 = vrot.lane.b32.xlu0 %v535, 8
      %v694 = vpop.permute.xlu0 %693
      %695 = vrot.lane.b32.xlu0 %v536, 8
      %v696 = vpop.permute.xlu0 %695
      %697 = vrot.lane.b32.xlu0 %v537, 8
      %v698 = vpop.permute.xlu0 %697
      %699 = vrot.lane.b32.xlu0 %v538, 8
      %v700 = vpop.permute.xlu0 %699
      %701 = vrot.lane.b32.xlu0 %v539, 8
      %v702 = vpop.permute.xlu0 %701
      %703 = vrot.lane.b32.xlu0 %v540, 8
      %v704 = vpop.permute.xlu0 %703
      %705 = vrot.lane.b32.xlu0 %v541, 8
      %v706 = vpop.permute.xlu0 %705
      %707 = vrot.lane.b32.xlu0 %v542, 8
      %v708 = vpop.permute.xlu0 %707
      %741 = vrot.lane.b32.xlu0 %v543, 16
      %v742 = vpop.permute.xlu0 %741
      %743 = vrot.lane.b32.xlu0 %v544, 16
      %v744 = vpop.permute.xlu0 %743
      %745 = vrot.lane.b32.xlu0 %v545, 16
      %v746 = vpop.permute.xlu0 %745
      %747 = vrot.lane.b32.xlu0 %v546, 16
      %v748 = vpop.permute.xlu0 %747
      %749 = vrot.lane.b32.xlu0 %v547, 16
      %v750 = vpop.permute.xlu0 %749
      %751 = vrot.lane.b32.xlu0 %v548, 16
      %v752 = vpop.permute.xlu0 %751
      %753 = vrot.lane.b32.xlu0 %v549, 16
      %v754 = vpop.permute.xlu0 %753
      %755 = vrot.lane.b32.xlu0 %v550, 16
      %v756 = vpop.permute.xlu0 %755
      %757 = vrot.lane.b32.xlu0 %v551, 16
      %v758 = vpop.permute.xlu0 %757
      %759 = vrot.lane.b32.xlu0 %v552, 16
      %v760 = vpop.permute.xlu0 %759
      %761 = vrot.lane.b32.xlu0 %v553, 16
      %v762 = vpop.permute.xlu0 %761
      %763 = vrot.lane.b32.xlu0 %v554, 16
      %v764 = vpop.permute.xlu0 %763
      %765 = vrot.lane.b32.xlu0 %v555, 16
      %v766 = vpop.permute.xlu0 %765
      %767 = vrot.lane.b32.xlu0 %v556, 16
      %v768 = vpop.permute.xlu0 %767
      %769 = vrot.lane.b32.xlu0 %v557, 16
      %v770 = vpop.permute.xlu0 %769
      %771 = vrot.lane.b32.xlu0 %v558, 16
      %v772 = vpop.permute.xlu0 %771
      %805 = vrot.lane.b32.xlu0 %v562, 24
      %v806 = vpop.permute.xlu0 %805
      %807 = vrot.lane.b32.xlu0 %v563, 24
      %v808 = vpop.permute.xlu0 %807
      %809 = vrot.lane.b32.xlu0 %v564, 24
      %v810 = vpop.permute.xlu0 %809
      %811 = vrot.lane.b32.xlu0 %v565, 24
      %v812 = vpop.permute.xlu0 %811
      %813 = vrot.lane.b32.xlu0 %v566, 24
      %v814 = vpop.permute.xlu0 %813
      %815 = vrot.lane.b32.xlu0 %v567, 24
      %v816 = vpop.permute.xlu0 %815
      %817 = vrot.lane.b32.xlu0 %v568, 24
      %v818 = vpop.permute.xlu0 %817
      %819 = vrot.lane.b32.xlu0 %v569, 24
      %v820 = vpop.permute.xlu0 %819
      %821 = vrot.lane.b32.xlu0 %v570, 24
      %v822 = vpop.permute.xlu0 %821
      %823 = vrot.lane.b32.xlu0 %v571, 24
      %v824 = vpop.permute.xlu0 %823
      %825 = vrot.lane.b32.xlu0 %v572, 24
      %v826 = vpop.permute.xlu0 %825
      %827 = vrot.lane.b32.xlu0 %v573, 24
      %v828 = vpop.permute.xlu0 %827
      %829 = vrot.lane.b32.xlu0 %v574, 24
      %v830 = vpop.permute.xlu0 %829
      %831 = vrot.lane.b32.xlu0 %v575, 24
      %v832 = vpop.permute.xlu0 %831
      %833 = vrot.lane.b32.xlu0 %v576, 24
      %v834 = vpop.permute.xlu0 %833
      %835 = vrot.lane.b32.xlu0 %v577, 24
      %v836 = vpop.permute.xlu0 %835
      %869 = vrot.lane.b32.xlu0 %v578, 32
      %v870 = vpop.permute.xlu0 %869
      %871 = vrot.lane.b32.xlu0 %v579, 32
      %v872 = vpop.permute.xlu0 %871
      %873 = vrot.lane.b32.xlu0 %v580, 32
      %v874 = vpop.permute.xlu0 %873
      %875 = vrot.lane.b32.xlu0 %v581, 32
      %v876 = vpop.permute.xlu0 %875
      %877 = vrot.lane.b32.xlu0 %v582, 32
      %v878 = vpop.permute.xlu0 %877
      %879 = vrot.lane.b32.xlu0 %v583, 32
      %v880 = vpop.permute.xlu0 %879
      %881 = vrot.lane.b32.xlu0 %v584, 32
      %v882 = vpop.permute.xlu0 %881
      %883 = vrot.lane.b32.xlu0 %v585, 32
      %v884 = vpop.permute.xlu0 %883
      %885 = vrot.lane.b32.xlu0 %v586, 32
      %v886 = vpop.permute.xlu0 %885
      %887 = vrot.lane.b32.xlu0 %v587, 32
      %v888 = vpop.permute.xlu0 %887
      %889 = vrot.lane.b32.xlu0 %v588, 32
      %v890 = vpop.permute.xlu0 %889
      %891 = vrot.lane.b32.xlu0 %v589, 32
      %v892 = vpop.permute.xlu0 %891
      %893 = vrot.lane.b32.xlu0 %v590, 32
      %v894 = vpop.permute.xlu0 %893
      %895 = vrot.lane.b32.xlu0 %v591, 32
      %v896 = vpop.permute.xlu0 %895
      %897 = vrot.lane.b32.xlu0 %v592, 32
      %v898 = vpop.permute.xlu0 %897
      %899 = vrot.lane.b32.xlu0 %v593, 32
      %v900 = vpop.permute.xlu0 %899
      %933 = vrot.lane.b32.xlu0 %v594, 40
      %v934 = vpop.permute.xlu0 %933
      %935 = vrot.lane.b32.xlu0 %v595, 40
      %v936 = vpop.permute.xlu0 %935
      %937 = vrot.lane.b32.xlu0 %v596, 40
      %v938 = vpop.permute.xlu0 %937
      %939 = vrot.lane.b32.xlu0 %v597, 40
      %v940 = vpop.permute.xlu0 %939
      %941 = vrot.lane.b32.xlu0 %v598, 40
      %v942 = vpop.permute.xlu0 %941
      %943 = vrot.lane.b32.xlu0 %v599, 40
      %v944 = vpop.permute.xlu0 %943
      %945 = vrot.lane.b32.xlu0 %v600, 40
      %v946 = vpop.permute.xlu0 %945
      %947 = vrot.lane.b32.xlu0 %v601, 40
      %v948 = vpop.permute.xlu0 %947
      %949 = vrot.lane.b32.xlu0 %v602, 40
      %v950 = vpop.permute.xlu0 %949
      %951 = vrot.lane.b32.xlu0 %v603, 40
      %v952 = vpop.permute.xlu0 %951
      %953 = vrot.lane.b32.xlu0 %v604, 40
      %v954 = vpop.permute.xlu0 %953
      %955 = vrot.lane.b32.xlu0 %v605, 40
      %v956 = vpop.permute.xlu0 %955
      %957 = vrot.lane.b32.xlu0 %v606, 40
      %v958 = vpop.permute.xlu0 %957
      %959 = vrot.lane.b32.xlu0 %v607, 40
      %v960 = vpop.permute.xlu0 %959
      %961 = vrot.lane.b32.xlu0 %v608, 40
      %v962 = vpop.permute.xlu0 %961
      %963 = vrot.lane.b32.xlu0 %v609, 40
      %v964 = vpop.permute.xlu0 %963
      %997 = vrot.lane.b32.xlu0 %v613, 48
      %v998 = vpop.permute.xlu0 %997
      %999 = vrot.lane.b32.xlu0 %v614, 48
      %v1000 = vpop.permute.xlu0 %999
      %1001 = vrot.lane.b32.xlu0 %v615, 48
      %v1002 = vpop.permute.xlu0 %1001
      %1003 = vrot.lane.b32.xlu0 %v616, 48
      %v1004 = vpop.permute.xlu0 %1003
      %1005 = vrot.lane.b32.xlu0 %v617, 48
      %v1006 = vpop.permute.xlu0 %1005
      %1007 = vrot.lane.b32.xlu0 %v618, 48
      %v1008 = vpop.permute.xlu0 %1007
      %1009 = vrot.lane.b32.xlu0 %v619, 48
      %v1010 = vpop.permute.xlu0 %1009
      %1011 = vrot.lane.b32.xlu0 %v620, 48
      %v1012 = vpop.permute.xlu0 %1011
      %1013 = vrot.lane.b32.xlu0 %v621, 48
      %v1014 = vpop.permute.xlu0 %1013
      %1015 = vrot.lane.b32.xlu0 %v622, 48
      %v1016 = vpop.permute.xlu0 %1015
      %1017 = vrot.lane.b32.xlu0 %v623, 48
      %v1018 = vpop.permute.xlu0 %1017
      %1019 = vrot.lane.b32.xlu0 %v624, 48
      %v1020 = vpop.permute.xlu0 %1019
      %1021 = vrot.lane.b32.xlu0 %v625, 48
      %v1022 = vpop.permute.xlu0 %1021
      %1023 = vrot.lane.b32.xlu0 %v626, 48
      %v1024 = vpop.permute.xlu0 %1023
      %1025 = vrot.lane.b32.xlu0 %v627, 48
      %v1026 = vpop.permute.xlu0 %1025
      %1027 = vrot.lane.b32.xlu0 %v628, 48
      %v1028 = vpop.permute.xlu0 %1027
      %1061 = vrot.lane.b32.xlu0 %v629, 56
      %v1062 = vpop.permute.xlu0 %1061
      %1063 = vrot.lane.b32.xlu0 %v630, 56
      %v1064 = vpop.permute.xlu0 %1063
      %1065 = vrot.lane.b32.xlu0 %v631, 56
      %v1066 = vpop.permute.xlu0 %1065
      %1067 = vrot.lane.b32.xlu0 %v632, 56
      %v1068 = vpop.permute.xlu0 %1067
      %1069 = vrot.lane.b32.xlu0 %v633, 56
      %v1070 = vpop.permute.xlu0 %1069
      %1071 = vrot.lane.b32.xlu0 %v634, 56
      %v1072 = vpop.permute.xlu0 %1071
      %1073 = vrot.lane.b32.xlu0 %v635, 56
      %v1074 = vpop.permute.xlu0 %1073
      %1075 = vrot.lane.b32.xlu0 %v636, 56
      %v1076 = vpop.permute.xlu0 %1075
      %1077 = vrot.lane.b32.xlu0 %v637, 56
      %v1078 = vpop.permute.xlu0 %1077
      %1079 = vrot.lane.b32.xlu0 %v638, 56
      %v1080 = vpop.permute.xlu0 %1079
      %1081 = vrot.lane.b32.xlu0 %v639, 56
      %v1082 = vpop.permute.xlu0 %1081
      %1083 = vrot.lane.b32.xlu0 %v640, 56
      %v1084 = vpop.permute.xlu0 %1083
      %1085 = vrot.lane.b32.xlu0 %v641, 56
      %v1086 = vpop.permute.xlu0 %1085
      %1087 = vrot.lane.b32.xlu0 %v642, 56
      %v1088 = vpop.permute.xlu0 %1087
      %1089 = vrot.lane.b32.xlu0 %v643, 56
      %v1090 = vpop.permute.xlu0 %1089
      %1091 = vrot.lane.b32.xlu0 %v644, 56
      %v1092 = vpop.permute.xlu0 %1091
      %1125 = vrot.lane.b32.xlu0 %v645, 64
      %v1126 = vpop.permute.xlu0 %1125
      %1127 = vrot.lane.b32.xlu0 %v646, 64
      %v1128 = vpop.permute.xlu0 %1127
      %1129 = vrot.lane.b32.xlu0 %v647, 64
      %v1130 = vpop.permute.xlu0 %1129
      %1131 = vrot.lane.b32.xlu0 %v648, 64
      %v1132 = vpop.permute.xlu0 %1131
      %1133 = vrot.lane.b32.xlu0 %v649, 64
      %v1134 = vpop.permute.xlu0 %1133
      %1135 = vrot.lane.b32.xlu0 %v650, 64
      %v1136 = vpop.permute.xlu0 %1135
      %1137 = vrot.lane.b32.xlu0 %v651, 64
      %v1138 = vpop.permute.xlu0 %1137
      %1139 = vrot.lane.b32.xlu0 %v652, 64
      %v1140 = vpop.permute.xlu0 %1139
      %1141 = vrot.lane.b32.xlu0 %v653, 64
      %v1142 = vpop.permute.xlu0 %1141
      %1143 = vrot.lane.b32.xlu0 %v654, 64
      %v1144 = vpop.permute.xlu0 %1143
      %1145 = vrot.lane.b32.xlu0 %v655, 64
      %v1146 = vpop.permute.xlu0 %1145
      %1147 = vrot.lane.b32.xlu0 %v656, 64
      %v1148 = vpop.permute.xlu0 %1147
      %1149 = vrot.lane.b32.xlu0 %v657, 64
      %v1150 = vpop.permute.xlu0 %1149
      %1151 = vrot.lane.b32.xlu0 %v658, 64
      %v1152 = vpop.permute.xlu0 %1151
      %1153 = vrot.lane.b32.xlu0 %v659, 64
      %v1154 = vpop.permute.xlu0 %1153
      %1155 = vrot.lane.b32.xlu0 %v660, 64
      %v1156 = vpop.permute.xlu0 %1155
      %vm1173 = vcmask 64512
      %v1174 = vsel %vm1173, %v511, %v678
      %v1175 = vsel %vm1173, %v512, %v680
      %v1176 = vsel %vm1173, %v513, %v682
      %v1177 = vsel %vm1173, %v514, %v684
      %v1178 = vsel %vm1173, %v515, %v686
      %v1179 = vsel %vm1173, %v516, %v688
      %v1180 = vsel %vm1173, %v517, %v690
      %v1181 = vsel %vm1173, %v518, %v692
      %v1182 = vsel %vm1173, %v519, %v694
      %v1183 = vsel %vm1173, %v520, %v696
      %v1184 = vsel %vm1173, %v521, %v698
      %v1185 = vsel %vm1173, %v522, %v700
      %v1186 = vsel %vm1173, %v523, %v702
      %v1187 = vsel %vm1173, %v524, %v704
      %v1188 = vsel %vm1173, %v525, %v706
      %v1189 = vsel %vm1173, %v526, %v708
      %vm1190 = vcmask 130048
      %v1191 = vsel %vm1190, %v1174, %v742
      %v1192 = vsel %vm1190, %v1175, %v744
      %v1193 = vsel %vm1190, %v1176, %v746
      %v1194 = vsel %vm1190, %v1177, %v748
      %v1195 = vsel %vm1190, %v1178, %v750
      %v1196 = vsel %vm1190, %v1179, %v752
      %v1197 = vsel %vm1190, %v1180, %v754
      %v1198 = vsel %vm1190, %v1181, %v756
      %v1199 = vsel %vm1190, %v1182, %v758
      %v1200 = vsel %vm1190, %v1183, %v760
      %v1201 = vsel %vm1190, %v1184, %v762
      %v1202 = vsel %vm1190, %v1185, %v764
      %v1203 = vsel %vm1190, %v1186, %v766
      %v1204 = vsel %vm1190, %v1187, %v768
      %v1205 = vsel %vm1190, %v1188, %v770
      %v1206 = vsel %vm1190, %v1189, %v772
      %vm1207 = vcmask 195584
      %v1208 = vsel %vm1207, %v1191, %v806
      %v1209 = vsel %vm1207, %v1192, %v808
      %v1210 = vsel %vm1207, %v1193, %v810
      %v1211 = vsel %vm1207, %v1194, %v812
      %v1212 = vsel %vm1207, %v1195, %v814
      %v1213 = vsel %vm1207, %v1196, %v816
      %v1214 = vsel %vm1207, %v1197, %v818
      %v1215 = vsel %vm1207, %v1198, %v820
      %v1216 = vsel %vm1207, %v1199, %v822
      %v1217 = vsel %vm1207, %v1200, %v824
      %v1218 = vsel %vm1207, %v1201, %v826
      %v1219 = vsel %vm1207, %v1202, %v828
      %v1220 = vsel %vm1207, %v1203, %v830
      %v1221 = vsel %vm1207, %v1204, %v832
      %v1222 = vsel %vm1207, %v1205, %v834
      %v1223 = vsel %vm1207, %v1206, %v836
      %vm1224 = vcmask 261120
      %v1225 = vsel %vm1224, %v1208, %v870
      %v1226 = vsel %vm1224, %v1209, %v872
      %v1227 = vsel %vm1224, %v1210, %v874
      %v1228 = vsel %vm1224, %v1211, %v876
      %v1229 = vsel %vm1224, %v1212, %v878
      %v1230 = vsel %vm1224, %v1213, %v880
      %v1231 = vsel %vm1224, %v1214, %v882
      %v1232 = vsel %vm1224, %v1215, %v884
      %v1233 = vsel %vm1224, %v1216, %v886
      %v1234 = vsel %vm1224, %v1217, %v888
      %v1235 = vsel %vm1224, %v1218, %v890
      %v1236 = vsel %vm1224, %v1219, %v892
      %v1237 = vsel %vm1224, %v1220, %v894
      %v1238 = vsel %vm1224, %v1221, %v896
      %v1239 = vsel %vm1224, %v1222, %v898
      %v1240 = vsel %vm1224, %v1223, %v900
      %vm1241 = vcmask 326656
      %v1242 = vsel %vm1241, %v1225, %v934
      %v1243 = vsel %vm1241, %v1226, %v936
      %v1244 = vsel %vm1241, %v1227, %v938
      %v1245 = vsel %vm1241, %v1228, %v940
      %v1246 = vsel %vm1241, %v1229, %v942
      %v1247 = vsel %vm1241, %v1230, %v944
      %v1248 = vsel %vm1241, %v1231, %v946
      %v1249 = vsel %vm1241, %v1232, %v948
      %v1250 = vsel %vm1241, %v1233, %v950
      %v1251 = vsel %vm1241, %v1234, %v952
      %v1252 = vsel %vm1241, %v1235, %v954
      %v1253 = vsel %vm1241, %v1236, %v956
      %v1254 = vsel %vm1241, %v1237, %v958
      %v1255 = vsel %vm1241, %v1238, %v960
      %v1256 = vsel %vm1241, %v1239, %v962
      %v1257 = vsel %vm1241, %v1240, %v964
      %vm1258 = vcmask 392192
      %v1259 = vsel %vm1258, %v1242, %v998
      %v1260 = vsel %vm1258, %v1243, %v1000
      %v1261 = vsel %vm1258, %v1244, %v1002
      %v1262 = vsel %vm1258, %v1245, %v1004
      %v1263 = vsel %vm1258, %v1246, %v1006
      %v1264 = vsel %vm1258, %v1247, %v1008
      %v1265 = vsel %vm1258, %v1248, %v1010
      %v1266 = vsel %vm1258, %v1249, %v1012
      %v1267 = vsel %vm1258, %v1250, %v1014
      %v1268 = vsel %vm1258, %v1251, %v1016
      %v1269 = vsel %vm1258, %v1252, %v1018
      %v1270 = vsel %vm1258, %v1253, %v1020
      %v1271 = vsel %vm1258, %v1254, %v1022
      %v1272 = vsel %vm1258, %v1255, %v1024
      %v1273 = vsel %vm1258, %v1256, %v1026
      %v1274 = vsel %vm1258, %v1257, %v1028
      %vm1275 = vcmask 457728
      %v1276 = vsel %vm1275, %v1259, %v1062
      %v1277 = vsel %vm1275, %v1260, %v1064
      %v1278 = vsel %vm1275, %v1261, %v1066
      %v1279 = vsel %vm1275, %v1262, %v1068
      %v1280 = vsel %vm1275, %v1263, %v1070
      %v1281 = vsel %vm1275, %v1264, %v1072
      %v1282 = vsel %vm1275, %v1265, %v1074
      %v1283 = vsel %vm1275, %v1266, %v1076
      %v1284 = vsel %vm1275, %v1267, %v1078
      %v1285 = vsel %vm1275, %v1268, %v1080
      %v1286 = vsel %vm1275, %v1269, %v1082
      %v1287 = vsel %vm1275, %v1270, %v1084
      %v1288 = vsel %vm1275, %v1271, %v1086
      %v1289 = vsel %vm1275, %v1272, %v1088
      %v1290 = vsel %vm1275, %v1273, %v1090
      %v1291 = vsel %vm1275, %v1274, %v1092
      %vm1292 = vcmask 523264
      %v1293 = vsel %vm1292, %v1276, %v1126
      %v1294 = vsel %vm1292, %v1277, %v1128
      %v1295 = vsel %vm1292, %v1278, %v1130
      %v1296 = vsel %vm1292, %v1279, %v1132
      %v1297 = vsel %vm1292, %v1280, %v1134
      %v1298 = vsel %vm1292, %v1281, %v1136
      %v1299 = vsel %vm1292, %v1282, %v1138
      %v1300 = vsel %vm1292, %v1283, %v1140
      %v1301 = vsel %vm1292, %v1284, %v1142
      %v1302 = vsel %vm1292, %v1285, %v1144
      %v1303 = vsel %vm1292, %v1286, %v1146
      %v1304 = vsel %vm1292, %v1287, %v1148
      %v1305 = vsel %vm1292, %v1288, %v1150
      %v1306 = vsel %vm1292, %v1289, %v1152
      %v1307 = vsel %vm1292, %v1290, %v1154
      %v1308 = vsel %vm1292, %v1291, %v1156
      %vm1309 = vcmask 588800
      %v1310 = vsel %vm1309, %v1293, 0.0
      %v1311 = vsel %vm1309, %v1294, 0.0
      %v1312 = vsel %vm1309, %v1295, 0.0
      %v1313 = vsel %vm1309, %v1296, 0.0
      %v1314 = vsel %vm1309, %v1297, 0.0
      %v1315 = vsel %vm1309, %v1298, 0.0
      %v1316 = vsel %vm1309, %v1299, 0.0
      %v1317 = vsel %vm1309, %v1300, 0.0
      %v1318 = vsel %vm1309, %v1301, 0.0
      %v1319 = vsel %vm1309, %v1302, 0.0
      %v1320 = vsel %vm1309, %v1303, 0.0
      %v1321 = vsel %vm1309, %v1304, 0.0
      %v1322 = vsel %vm1309, %v1305, 0.0
      %v1323 = vsel %vm1309, %v1306, 0.0
      %v1324 = vsel %vm1309, %v1307, 0.0
      %v1325 = vsel %vm1309, %v1308, 0.0
      %v1326 = vpack.c.bf16 %v1311, %v1310
      %v1327 = vpack.c.bf16 %v1313, %v1312
      %v1328 = vpack.c.bf16 %v1315, %v1314
      %v1329 = vpack.c.bf16 %v1317, %v1316
      %v1330 = vpack.c.bf16 %v1319, %v1318
      %v1331 = vpack.c.bf16 %v1321, %v1320
      %v1332 = vpack.c.bf16 %v1323, %v1322
      %v1333 = vpack.c.bf16 %v1325, %v1324
      %v1334 = vld [vmem:[%s3] sm:$0xf]
      %v1335 = vld [vmem:[%s3 + $0x4] sm:$0xf]
      %v1336 = vld [vmem:[%s3 + $0x8] sm:$0xf]
      %v1337 = vld [vmem:[%s3 + $0xc] sm:$0xf]
      %v1338 = vld [vmem:[%s3 + $0x10] sm:$0xf]
      %v1339 = vld [vmem:[%s3 + $0x14] sm:$0xf]
      %v1340 = vld [vmem:[%s3 + $0x18] sm:$0xf]
      %v1341 = vld [vmem:[%s3 + $0x1c] sm:$0xf]
      %v1342 = vld [vmem:[%s3 + $0x20] sm:$0xf]
      %v1343 = vld [vmem:[%s3 + $0x24] sm:$0xf]
      %v1344 = vld [vmem:[%s3 + $0x28] sm:$0xf]
      %v1345 = vld [vmem:[%s3 + $0x2c] sm:$0xf]
      %v1346 = vld [vmem:[%s3 + $0x30] sm:$0xf]
      %v1347 = vld [vmem:[%s3 + $0x34] sm:$0xf]
      %v1348 = vld [vmem:[%s3 + $0x38] sm:$0xf]
      %v1349 = vld [vmem:[%s3 + $0x3c] sm:$0xf]
      %v1366 = vunpack.c.l.b16 %v1334
      %v1367 = vunpack.c.l.b16 %v1335
      %v1368 = vunpack.c.l.b16 %v1336
      %v1369 = vunpack.c.l.b16 %v1337
      %v1370 = vunpack.c.l.b16 %v1338
      %v1371 = vunpack.c.l.b16 %v1339
      %v1372 = vunpack.c.l.b16 %v1340
      %v1373 = vunpack.c.l.b16 %v1341
      %v1374 = vunpack.c.l.b16 %v1342
      %v1375 = vunpack.c.l.b16 %v1343
      %v1376 = vunpack.c.l.b16 %v1344
      %v1377 = vunpack.c.l.b16 %v1345
      %v1378 = vunpack.c.l.b16 %v1346
      %v1379 = vunpack.c.l.b16 %v1347
      %v1380 = vunpack.c.l.b16 %v1348
      %v1381 = vunpack.c.l.b16 %v1349
      %v1382 = vpack.c.b16 %v1367, %v1366
      %v1383 = vpack.c.b16 %v1369, %v1368
      %v1384 = vpack.c.b16 %v1371, %v1370
      %v1385 = vpack.c.b16 %v1373, %v1372
      %v1386 = vpack.c.b16 %v1375, %v1374
      %v1387 = vpack.c.b16 %v1377, %v1376
      %v1388 = vpack.c.b16 %v1379, %v1378
      %v1389 = vpack.c.b16 %v1381, %v1380
      %1398 = vmatpush.bf16.msra.mxu0 %v1389
      %1399 = vmatpush.bf16.msra.mxu0 %v1388
      %1400 = vmatpush.bf16.msra.mxu0 %v1387
      %1401 = vmatpush.bf16.msra.mxu0 %v1386
      %1402 = vmatpush.bf16.msra.mxu0 %v1385
      %1403 = vmatpush.bf16.msra.mxu0 %v1384
      %1404 = vmatpush.bf16.msra.mxu0 %v1383
      %1405 = vmatpush.bf16.msra.mxu0 %v1382
      %1406 = vmatmul.bf16.gmra.mxu0 %v1326
      %v1407 = vpop.f32.mrf.mxu0
      %v1408 = vadd.f32 0.0, %v1407
      %v1409 = vpop.f32.mrf.mxu0
      %v1410 = vadd.f32 0.0, %v1409
      %1411 = vmatmul.bf16.gmra.mxu0 %v1327
      %v1412 = vpop.f32.mrf.mxu0
      %v1413 = vadd.f32 0.0, %v1412
      %v1414 = vpop.f32.mrf.mxu0
      %v1415 = vadd.f32 0.0, %v1414
      %1416 = vmatmul.bf16.gmra.mxu0 %v1328
      %v1417 = vpop.f32.mrf.mxu0
      %v1418 = vadd.f32 0.0, %v1417
      %v1419 = vpop.f32.mrf.mxu0
      %v1420 = vadd.f32 0.0, %v1419
      %1421 = vmatmul.bf16.gmra.mxu0 %v1329
      %v1422 = vpop.f32.mrf.mxu0
      %v1423 = vadd.f32 0.0, %v1422
      %v1424 = vpop.f32.mrf.mxu0
      %v1425 = vadd.f32 0.0, %v1424
      %1426 = vmatmul.bf16.gmra.mxu0 %v1330
      %v1427 = vpop.f32.mrf.mxu0
      %v1428 = vadd.f32 0.0, %v1427
      %v1429 = vpop.f32.mrf.mxu0
      %v1430 = vadd.f32 0.0, %v1429
      %1431 = vmatmul.bf16.gmra.mxu0 %v1331
      %v1432 = vpop.f32.mrf.mxu0
      %v1433 = vadd.f32 0.0, %v1432
      %v1434 = vpop.f32.mrf.mxu0
      %v1435 = vadd.f32 0.0, %v1434
      %1436 = vmatmul.bf16.gmra.mxu0 %v1332
      %v1437 = vpop.f32.mrf.mxu0
      %v1438 = vadd.f32 0.0, %v1437
      %v1439 = vpop.f32.mrf.mxu0
      %v1440 = vadd.f32 0.0, %v1439
      %1441 = vmatmul.bf16.gmra.mxu0 %v1333
      %v1442 = vpop.f32.mrf.mxu0
      %v1443 = vadd.f32 0.0, %v1442
      %v1444 = vpop.f32.mrf.mxu0
      %v1445 = vadd.f32 0.0, %v1444
      %1446 = vdwg.mxu0
      %v1447 = vsel %vm1173, %v1408, 0.0
      %v1448 = vsel %vm1173, %v1410, 0.0
      %v1449 = vadd.f32 %v1447, %v1448
      %v1450 = vsel %vm1173, %v1413, 0.0
      %v1451 = vadd.f32 %v1449, %v1450
      %v1452 = vsel %vm1173, %v1415, 0.0
      %v1453 = vadd.f32 %v1451, %v1452
      %v1454 = vsel %vm1173, %v1418, 0.0
      %v1455 = vadd.f32 %v1453, %v1454
      %v1456 = vsel %vm1173, %v1420, 0.0
      %v1457 = vadd.f32 %v1455, %v1456
      %v1458 = vsel %vm1173, %v1423, 0.0
      %v1459 = vadd.f32 %v1457, %v1458
      %v1460 = vsel %vm1173, %v1425, 0.0
      %v1461 = vadd.f32 %v1459, %v1460
      %v1462 = vsel %vm1173, %v1428, 0.0
      %v1463 = vadd.f32 %v1461, %v1462
      %v1464 = vsel %vm1173, %v1430, 0.0
      %v1465 = vadd.f32 %v1463, %v1464
      %v1466 = vsel %vm1173, %v1433, 0.0
      %v1467 = vadd.f32 %v1465, %v1466
      %v1468 = vsel %vm1173, %v1435, 0.0
      %v1469 = vadd.f32 %v1467, %v1468
      %v1470 = vsel %vm1173, %v1438, 0.0
      %v1471 = vadd.f32 %v1469, %v1470
      %v1472 = vsel %vm1173, %v1440, 0.0
      %v1473 = vadd.f32 %v1471, %v1472
      %v1474 = vsel %vm1173, %v1443, 0.0
      %v1475 = vadd.f32 %v1473, %v1474
      %v1476 = vsel %vm1173, %v1445, 0.0
      %v1477 = vadd.f32 %v1475, %v1476
      %v1478 = vrot.slane %v1477, 4
      %v1479 = vadd.f32 %v1477, %v1478
      %v1480 = vrot.slane %v1479, 2
      %v1481 = vadd.f32 %v1479, %v1480
      %v1482 = vrot.slane %v1481, 1
      %v1483 = vadd.f32 %v1481, %v1482
      %v1484 = vmul.f32 %v1408, %v1408
      %v1485 = vmul.f32 %v1410, %v1410
      %v1486 = vmul.f32 %v1413, %v1413
      %v1487 = vmul.f32 %v1415, %v1415
      %v1488 = vmul.f32 %v1418, %v1418
      %v1489 = vmul.f32 %v1420, %v1420
      %v1490 = vmul.f32 %v1423, %v1423
      %v1491 = vmul.f32 %v1425, %v1425
      %v1492 = vmul.f32 %v1428, %v1428
      %v1493 = vmul.f32 %v1430, %v1430
      %v1494 = vmul.f32 %v1433, %v1433
      %v1495 = vmul.f32 %v1435, %v1435
      %v1496 = vmul.f32 %v1438, %v1438
      %v1497 = vmul.f32 %v1440, %v1440
      %v1498 = vmul.f32 %v1443, %v1443
      %v1499 = vmul.f32 %v1445, %v1445
      %v1500 = vsel %vm1173, %v1484, 0.0
      %v1501 = vsel %vm1173, %v1485, 0.0
      %v1502 = vadd.f32 %v1500, %v1501
      %v1503 = vsel %vm1173, %v1486, 0.0
      %v1504 = vadd.f32 %v1502, %v1503
      %v1505 = vsel %vm1173, %v1487, 0.0
      %v1506 = vadd.f32 %v1504, %v1505
      %v1507 = vsel %vm1173, %v1488, 0.0
      %v1508 = vadd.f32 %v1506, %v1507
      %v1509 = vsel %vm1173, %v1489, 0.0
      %v1510 = vadd.f32 %v1508, %v1509
      %v1511 = vsel %vm1173, %v1490, 0.0
      %v1512 = vadd.f32 %v1510, %v1511
      %v1513 = vsel %vm1173, %v1491, 0.0
      %v1514 = vadd.f32 %v1512, %v1513
      %v1515 = vsel %vm1173, %v1492, 0.0
      %v1516 = vadd.f32 %v1514, %v1515
      %v1517 = vsel %vm1173, %v1493, 0.0
      %v1518 = vadd.f32 %v1516, %v1517
      %v1519 = vsel %vm1173, %v1494, 0.0
      %v1520 = vadd.f32 %v1518, %v1519
      %v1521 = vsel %vm1173, %v1495, 0.0
      %v1522 = vadd.f32 %v1520, %v1521
      %v1523 = vsel %vm1173, %v1496, 0.0
      %v1524 = vadd.f32 %v1522, %v1523
      %v1525 = vsel %vm1173, %v1497, 0.0
      %v1526 = vadd.f32 %v1524, %v1525
      %v1527 = vsel %vm1173, %v1498, 0.0
      %v1528 = vadd.f32 %v1526, %v1527
      %v1529 = vsel %vm1173, %v1499, 0.0
      %v1530 = vadd.f32 %v1528, %v1529
      %v1531 = vrot.slane %v1530, 4
      %v1532 = vadd.f32 %v1530, %v1531
      %v1533 = vrot.slane %v1532, 2
      %v1534 = vadd.f32 %v1532, %v1533
      %v1535 = vrot.slane %v1534, 1
      %v1536 = vadd.f32 %v1534, %v1535
      %vm1537 = vcmask 1040384
      %v1538 = vsel %vm1537, %v1483, %v1536
      // Predicated region
      $region41: #{double_conv.4} parent=35 // pred_check
        %p1539 = pneg %p261
      $region42: #{double_conv.4} parent=35 // pred_check_branch
        %1541 = sbr.rel (%p1539) target = $region44
      $region43: #{double_conv.4} parent=35 // pred_region
        %vm1542 = vcmask 58368
        %1543 = vst.msk [vmem:[%s260] sm:$0x3] %vm1542, 0.0
      $region44: #{double_conv.4} parent=35 // pred_fallthru
        _
      %v1544 = vld [vmem:[%s260] sm:$0x3]
      %v1545 = vadd.f32 %v1544, %v1538
      %vm1546 = vcmask 58368
      %1547 = vst.msk [vmem:[%s260] sm:$0x3] %vm1546, %v1545
      %1548 = vst.msk [vmem:[%s255] sm:$0xff] %vm1173, %v1408
      %1549 = vst.msk [vmem:[%s255 + $0x8] sm:$0xff] %vm1173, %v1410
      %1550 = vst.msk [vmem:[%s255 + $0x10] sm:$0xff] %vm1173, %v1413
      %1551 = vst.msk [vmem:[%s255 + $0x18] sm:$0xff] %vm1173, %v1415
      %1552 = vst.msk [vmem:[%s255 + $0x20] sm:$0xff] %vm1173, %v1418
      %1553 = vst.msk [vmem:[%s255 + $0x28] sm:$0xff] %vm1173, %v1420
      %1554 = vst.msk [vmem:[%s255 + $0x30] sm:$0xff] %vm1173, %v1423
      %1555 = vst.msk [vmem:[%s255 + $0x38] sm:$0xff] %vm1173, %v1425
      %1556 = vst.msk [vmem:[%s255 + $0x40] sm:$0xff] %vm1173, %v1428
      %1557 = vst.msk [vmem:[%s255 + $0x48] sm:$0xff] %vm1173, %v1430
      %1558 = vst.msk [vmem:[%s255 + $0x50] sm:$0xff] %vm1173, %v1433
      %1559 = vst.msk [vmem:[%s255 + $0x58] sm:$0xff] %vm1173, %v1435
      %1560 = vst.msk [vmem:[%s255 + $0x60] sm:$0xff] %vm1173, %v1438
      %1561 = vst.msk [vmem:[%s255 + $0x68] sm:$0xff] %vm1173, %v1440
      %1562 = vst.msk [vmem:[%s255 + $0x70] sm:$0xff] %vm1173, %v1443
      %1563 = vst.msk [vmem:[%s255 + $0x78] sm:$0xff] %vm1173, %v1445
      %s1564 = smul.u32 8, %s22
      %p1565 = scmp.lt.s32.totalorder %s21, 1
      %s1566 = scalar_select %p1565, %s21, 1
      %p1567 = scmp.lt.s32.totalorder %s1564, 15
      %s1568 = scalar_select %p1567, %s1564, 15
      %s1569 = smul.addr %s1568, 2
      %s1570 = smul.addr %s1566, 32
      %s1571 = sadd.s32 %s1569, %s1570
      %s1572 = smul.addr %s1571, 8
      %s1573 = scalar_lea.vmem %s4, %s1572
      %p1574 = scmp.lt.s32.totalorder %s21, 1
      %s1575 = scalar_select %p1574, %s21, 1
      %s1576 = smul.addr %s1575, 2
      %s1577 = scalar_lea.vmem %s5, %s1576
      // Predicated region
      $region45: #{double_conv.4} parent=35 // pred_check
        %p1578 = pneg %p138
      $region46: #{double_conv.4} parent=35 // pred_check_branch
        %1580 = sbr.rel (%p1578) target = $region48
      $region47: #{double_conv.4} parent=35 // pred_region
        %s1581 = smul.u32 8, %s22
      $region48: #{double_conv.4} parent=35 // pred_fallthru
        _
      // Predicated region
      $region49: #{double_conv.4} parent=35 // pred_check
        %p1582 = pneg %p164
      $region50: #{double_conv.4} parent=35 // pred_check_branch
        %1584 = sbr.rel (%p1582) target = $region52
      $region51: #{double_conv.4} parent=35 // pred_region
        _
      $region52: #{double_conv.4} parent=35 // pred_fallthru
        _
    $region36: #{double_conv.4} parent=5 // pred_fallthru
      _
    %p1585 = scmp.le.s32.totalorder 2, %s12
    // Predicated region
    $region53: #{double_conv.4} parent=5 // pred_check
      %p1586 = pneg %p1585
    $region54: #{double_conv.4} parent=5 // pred_check_branch
      %1588 = sbr.rel (%p1586) target = $region56
    $region55: #{double_conv.4} parent=5 // pred_region
      %s1589 = ssub.s32 %s12, 2
      // Predicated region
      $region57: #{double_conv.4} parent=55 // pred_check
        %p1590 = pneg %p144
      $region58: #{double_conv.4} parent=55 // pred_check_branch
        %1592 = sbr.rel (%p1590) target = $region60
      $region59: #{double_conv.4} parent=55 // pred_region
        %s1593 = smul.u32 8, %s24
        %p1594 = scmp.lt.s32.totalorder %s23, 1
        %s1595 = scalar_select %p1594, %s23, 1
        %p1596 = scmp.lt.s32.totalorder %s1593, 15
        %s1597 = scalar_select %p1596, %s1593, 15
        %s1598 = smul.addr %s1597, 2
        %s1599 = smul.addr %s1595, 32
        %s1600 = sadd.s32 %s1598, %s1599
        %s1601 = smul.addr %s1600, 8
        %s1602 = scalar_lea.vmem %s4, %s1601
      $region60: #{double_conv.4} parent=55 // pred_fallthru
        _
      // Predicated region
      $region61: #{double_conv.4} parent=55 // pred_check
        %p1603 = pneg %p170
      $region62: #{double_conv.4} parent=55 // pred_check_branch
        %1605 = sbr.rel (%p1603) target = $region64
      $region63: #{double_conv.4} parent=55 // pred_region
        %p1606 = scmp.lt.s32.totalorder %s23, 1
        %s1607 = scalar_select %p1606, %s23, 1
        %s1608 = smul.addr %s1607, 2
        %s1609 = scalar_lea.vmem %s5, %s1608
      $region64: #{double_conv.4} parent=55 // pred_fallthru
        _
    $region56: #{double_conv.4} parent=5 // pred_fallthru
      _
  $region6: #{double_conv.4} parent=0 // loop_footer
    %s16 = sadd.s32 1, %s12
  $region7: #{double_conv.4} parent=0 // loop_footer_branch
    %11 = sbr.rel target = $region3
  $region8: #{double_conv.4} parent=0 // loop_exit
    _

</llo_original>
